<compile_context>
chip_gen: v7x
topology: tpu7x:2x2x1
jax: 0.10.0
libtpu: 0.0.40
codegen_flags: <defaults>
</compile_context>

<pallas_src>
import jax
import jax.numpy as jnp
from jax.experimental import pallas as pl
from jax.experimental.pallas import tpu as pltpu

D_MODEL = 32
NUM_LAYERS = 4
SEQ = 8                           # rows per sequence
BATCH = 64                        # number of independent sequences
SEQS_PER_TILE = 16                # 16 sequences * 8 rows = 128 MXU rows per chunk
TILE_ROWS = SEQS_PER_TILE * SEQ   # 128 (score-block size; kept at 128 per review)
CHUNKS_PER_STEP = 2               # 2 chunks of 128 rows per grid step -> grid=(2,)
BLOCK_ROWS = TILE_ROWS * CHUNKS_PER_STEP   # 256 rows of x / out per grid step

EXT_W = 128                       # padded, lane-dense fused projection width
ONES_COL = D_MODEL                # column 32: constant-one column (via bias)
S_COL0 = D_MODEL + 1              # columns 33..36: per-layer score columns
EPS = 1e-5                        # torch.nn.LayerNorm default


def atternntion_kernel(x_ref, w_ref, b_ref, mask_ref, gamma_ref, beta_ref, o_ref):
    D = D_MODEL
    w = w_ref[...]                # (D, EXT_W)  = [Wv | 0 | Wk@q_0..q_3 | pad]
    b = b_ref[...]                # (1, EXT_W)  = [bv | 1 | bk·q_0..q_3 | pad]
    mask = mask_ref[...]          # (TILE_ROWS, TILE_ROWS) 0/1 f32 block-diag causal
    gamma = gamma_ref[...]        # (1, D)
    beta = beta_ref[...]          # (1, D)

    for c in range(CHUNKS_PER_STEP):           # static unroll: 2 chunks of 128 rows
        rows = pl.ds(c * TILE_ROWS, TILE_ROWS)
        x = x_ref[rows, :]                                              # (128, D)
        # Fused projection: kv[:, :D] = V, kv[:, D] = 1, kv[:, D+1+l] = s for layer l.
        kv = jnp.dot(x, w, preferred_element_type=jnp.float32) + b      # (128, EXT_W)

        h = x
        for l in range(NUM_LAYERS):            # fixed small layer count -> unrolled
            s = kv[:, S_COL0 + l:S_COL0 + l + 1]                        # (128, 1)
            # Tile-wide max is constant per sequence -> cancels exactly in num/den.
            # (Only risk is underflow if the per-tile score spread exceeds ~80.)
            m = jnp.max(s)
            e = jnp.exp(s - m)                                          # (128, 1)
            ev = e * kv[:, :D + 1]                                      # (128, 33) = [e*V | e]
            nd = jnp.dot(mask, ev, preferred_element_type=jnp.float32)  # (128, 33)
            h = nd[:, :D] / nd[:, D:D + 1]                              # w_i / u_i
            if l < NUM_LAYERS - 1:             # last-layer K/V/s are unused -> skip
                kv = jnp.dot(h, w, preferred_element_type=jnp.float32) + b

        # LayerNorm over the feature dim.
        mean = jnp.mean(h, axis=-1, keepdims=True)
        var = jnp.mean((h - mean) ** 2, axis=-1, keepdims=True)
        h_norm = (h - mean) * jax.lax.rsqrt(var + EPS)
        o_ref[rows, :] = h_norm * gamma + beta


def atternntion_forward(x, wk_t, bk, wv_t, bv, q, gamma, beta):
    """x: (B, S, D); applies the module independently to each sequence."""
    B, S, D = x.shape
    assert S == SEQ and D == D_MODEL
    rows = B * S
    assert rows % BLOCK_ROWS == 0, "batch*seq must be a multiple of BLOCK_ROWS"

    # --- one-time wrapper-side fusion (free) -------------------------------
    # s = K @ q_l = X @ (Wk^T q_l) + bk·q_l : fold the score projection into
    # the K/V matmul.  Use HIGHEST precision for these tiny folds so the
    # packed weights carry no extra rounding.
    hp = jax.lax.Precision.HIGHEST
    s_w = jnp.dot(wk_t, q.T, precision=hp)          # (D, NUM_LAYERS)
    s_b = jnp.dot(bk, q.T, precision=hp)            # (1, NUM_LAYERS)

    w_ext = jnp.zeros((D, EXT_W), jnp.float32)
    w_ext = w_ext.at[:, :D].set(wv_t)                               # V columns
    w_ext = w_ext.at[:, S_COL0:S_COL0 + NUM_LAYERS].set(s_w)        # score columns
    b_ext = jnp.zeros((1, EXT_W), jnp.float32)
    b_ext = b_ext.at[:, :D].set(bv)
    b_ext = b_ext.at[:, ONES_COL].set(1.0)                          # ones column
    b_ext = b_ext.at[:, S_COL0:S_COL0 + NUM_LAYERS].set(s_b)

    # Constant block-diagonal causal mask (j <= i AND same sequence) as 0/1 f32,
    # built once on the host and kept resident in VMEM (constant index_map).
    r = jnp.arange(TILE_ROWS)
    mask = ((r[None, :] <= r[:, None]) &
            ((r[:, None] // SEQ) == (r[None, :] // SEQ))).astype(jnp.float32)

    x2 = x.reshape(rows, D)                          # contiguous -> free reshape
    grid = (rows // BLOCK_ROWS,)                     # = (2,) at the demo shapes

    out = pl.pallas_call(
        atternntion_kernel,
        out_shape=jax.ShapeDtypeStruct((rows, D), jnp.float32),
        grid=grid,
        in_specs=[
            pl.BlockSpec((BLOCK_ROWS, D), lambda i: (i, 0)),          # x rows
            pl.BlockSpec((D, EXT_W), lambda i: (0, 0)),               # fused W (resident)
            pl.BlockSpec((1, EXT_W), lambda i: (0, 0)),               # fused bias
            pl.BlockSpec((TILE_ROWS, TILE_ROWS), lambda i: (0, 0)),   # causal mask
            pl.BlockSpec((1, D), lambda i: (0, 0)),                   # LN gamma
            pl.BlockSpec((1, D), lambda i: (0, 0)),                   # LN beta
        ],
        out_specs=pl.BlockSpec((BLOCK_ROWS, D), lambda i: (i, 0)),
        compiler_params=pltpu.CompilerParams(
            dimension_semantics=("parallel",)),      # shards the 2 steps on v7x TCs
    )(x2, w_ext, b_ext, mask, gamma, beta)

    return out.reshape(B, S, D)


def _atternntion_ref_single(x, wk_t, bk, wv_t, bv, q, gamma, beta):
    """Pure-JAX reference for one sequence, mirroring the PyTorch forward (mode=0)."""
    S, D = x.shape
    k = x @ wk_t + bk
    v = x @ wv_t + bv
    h = x
    idx = jnp.arange(S)
    causal = idx[None, :] <= idx[:, None]
    for l in range(NUM_LAYERS):
        s = k @ q[l]                                     # (S,)
        scores = jnp.where(causal, s[None, :], -jnp.inf)
        m = jnp.max(scores, axis=-1, keepdims=True)
        p = jnp.exp(scores - m)
        u = jnp.sum(p, axis=-1, keepdims=True)
        h = (p @ v) / u
        k = h @ wk_t + bk
        v = h @ wv_t + bv
    mean = jnp.mean(h, axis=-1, keepdims=True)
    var = jnp.mean((h - mean) ** 2, axis=-1, keepdims=True)
    return (h - mean) / jnp.sqrt(var + EPS) * gamma + beta


def atternntion_ref(x, wk_t, bk, wv_t, bv, q, gamma, beta):
    return jax.vmap(
        lambda xi: _atternntion_ref_single(xi, wk_t, bk, wv_t, bv, q, gamma, beta))(x)


if __name__ == "__main__":
    key = jax.random.PRNGKey(0)
    keys = jax.random.split(key, 6)
    D, S, B = D_MODEL, SEQ, BATCH

    x = jax.random.normal(keys[0], (B, S, D), jnp.float32)
    # deterministic synthetic parameters (shapes from the module's __init__)
    wk_t = jax.random.normal(keys[1], (D, D), jnp.float32) / jnp.sqrt(D)   # W_k (pre-transposed)
    bk = jax.random.normal(keys[2], (1, D), jnp.float32) * 0.01
    wv_t = jax.random.normal(keys[3], (D, D), jnp.float32) / jnp.sqrt(D)   # W_v (pre-transposed)
    bv = jax.random.normal(keys[4], (1, D), jnp.float32) * 0.01
    q = jax.random.normal(keys[5], (NUM_LAYERS, D), jnp.float32)           # one q per Aaren layer
    gamma = jnp.ones((1, D), jnp.float32)   # LayerNorm weight (torch default init)
    beta = jnp.zeros((1, D), jnp.float32)   # LayerNorm bias   (torch default init)

    out = atternntion_forward(x, wk_t, bk, wv_t, bv, q, gamma, beta)
    jax.block_until_ready(out)

    ref = atternntion_ref(x, wk_t, bk, wv_t, bv, q, gamma, beta)
    assert out.shape == (B, S, D)
    assert jnp.allclose(out, ref, rtol=1e-4, atol=1e-4), "mismatch vs reference"

    # TODO(synk): mode=1 branch (returns zeros(d_model, d_model)) and the torch
    # training .fit() loop are not kernel work and are intentionally omitted.
    print("KERNEL_OK")
</pallas_src>

<mosaic_0001>
module attributes {stable_mosaic.version = 11 : i64} {
  func.func @atternntion_kernel(%arg0: i32, %arg1: memref<256x32xf32, #tpu.memory_space<vmem>>, %arg2: memref<32x128xf32, #tpu.memory_space<vmem>>, %arg3: memref<1x128xf32, #tpu.memory_space<vmem>>, %arg4: memref<128x128xf32, #tpu.memory_space<vmem>>, %arg5: memref<1x32xf32, #tpu.memory_space<vmem>>, %arg6: memref<1x32xf32, #tpu.memory_space<vmem>>, %arg7: memref<256x32xf32, #tpu.memory_space<vmem>>) attributes {dimension_semantics = [#tpu.dimension_semantics<parallel>], iteration_bounds = array<i64: 2>, scalar_prefetch = 0 : i64, scratch_operands = 0 : i64, tpu.core_type = #tpu.core_type<tc>, window_params = [{transform_indices = @transform_0, window_bounds = array<i64: 256, 32>}, {pipeline_mode = #tpu.pipeline_mode<synchronous>, transform_indices = @transform_1, window_bounds = array<i64: 32, 128>}, {pipeline_mode = #tpu.pipeline_mode<synchronous>, transform_indices = @transform_2, window_bounds = array<i64: 1, 128>}, {pipeline_mode = #tpu.pipeline_mode<synchronous>, transform_indices = @transform_3, window_bounds = array<i64: 128, 128>}, {pipeline_mode = #tpu.pipeline_mode<synchronous>, transform_indices = @transform_4, window_bounds = array<i64: 1, 32>}, {pipeline_mode = #tpu.pipeline_mode<synchronous>, transform_indices = @transform_5, window_bounds = array<i64: 1, 32>}, {transform_indices = @transform_6, window_bounds = array<i64: 256, 32>}]} {
    %c0 = arith.constant 0 : index
    %c0_0 = arith.constant 0 : index
    %0 = vector.load %arg2[%c0, %c0_0] : memref<32x128xf32, #tpu.memory_space<vmem>>, vector<32x128xf32>
    %c0_1 = arith.constant 0 : index
    %c0_2 = arith.constant 0 : index
    %1 = vector.load %arg3[%c0_1, %c0_2] : memref<1x128xf32, #tpu.memory_space<vmem>>, vector<1x128xf32>
    %c0_3 = arith.constant 0 : index
    %c0_4 = arith.constant 0 : index
    %2 = vector.load %arg4[%c0_3, %c0_4] : memref<128x128xf32, #tpu.memory_space<vmem>>, vector<128x128xf32>
    %c0_5 = arith.constant 0 : index
    %c0_6 = arith.constant 0 : index
    %3 = vector.load %arg5[%c0_5, %c0_6] : memref<1x32xf32, #tpu.memory_space<vmem>>, vector<1x32xf32>
    %c0_7 = arith.constant 0 : index
    %c0_8 = arith.constant 0 : index
    %4 = vector.load %arg6[%c0_7, %c0_8] : memref<1x32xf32, #tpu.memory_space<vmem>>, vector<1x32xf32>
    %c0_9 = arith.constant 0 : index
    %c0_10 = arith.constant 0 : index
    %5 = vector.load %arg1[%c0_9, %c0_10] : memref<256x32xf32, #tpu.memory_space<vmem>>, vector<128x32xf32>
    %cst = arith.constant dense<0.000000e+00> : vector<128x128xf32>
    %6 = tpu.matmul %5, %0, %cst {dimension_numbers = #tpu.dot_dimension_numbers<[1], [0], [0], [1], [0, 0, 1, 1], [], []>} : vector<128x32xf32>, vector<32x128xf32>, vector<128x128xf32> -> vector<128x128xf32>
    %7 = vector.broadcast %1 : vector<1x128xf32> to vector<128x128xf32>
    %8 = arith.addf %6, %7 : vector<128x128xf32>
    %9 = vector.extract_strided_slice %8 {offsets = [0, 33], sizes = [128, 1], strides = [1, 1]} : vector<128x128xf32> to vector<128x1xf32>
    %10 = vector.shape_cast %9 : vector<128x1xf32> to vector<1x128x1xf32>
    %cst_11 = arith.constant dense<0xFF800000> : vector<1xf32>
    %11 = vector.multi_reduction <maximumf>, %10, %cst_11 [1, 2] : vector<1x128x1xf32> to vector<1xf32>
    %12 = vector.shape_cast %11 : vector<1xf32> to vector<1x1x1xf32>
    %13 = vector.extract %12[0, 0, 0] : f32 from vector<1x1x1xf32>
    %14 = vector.broadcast %13 : f32 to vector<128x1xf32>
    %15 = arith.subf %9, %14 : vector<128x1xf32>
    %16 = math.exp %15 : vector<128x1xf32>
    %17 = vector.extract_strided_slice %8 {offsets = [0, 0], sizes = [128, 33], strides = [1, 1]} : vector<128x128xf32> to vector<128x33xf32>
    %18 = vector.broadcast %16 : vector<128x1xf32> to vector<128x33xf32>
    %19 = arith.mulf %18, %17 : vector<128x33xf32>
    %cst_12 = arith.constant dense<0.000000e+00> : vector<128x33xf32>
    %20 = tpu.matmul %2, %19, %cst_12 {dimension_numbers = #tpu.dot_dimension_numbers<[1], [0], [0], [1], [0, 0, 1, 1], [], []>} : vector<128x128xf32>, vector<128x33xf32>, vector<128x33xf32> -> vector<128x33xf32>
    %21 = vector.extract_strided_slice %20 {offsets = [0, 0], sizes = [128, 32], strides = [1, 1]} : vector<128x33xf32> to vector<128x32xf32>
    %22 = vector.extract_strided_slice %20 {offsets = [0, 32], sizes = [128, 1], strides = [1, 1]} : vector<128x33xf32> to vector<128x1xf32>
    %23 = vector.broadcast %22 : vector<128x1xf32> to vector<128x32xf32>
    %24 = arith.divf %21, %23 : vector<128x32xf32>
    %cst_13 = arith.constant dense<0.000000e+00> : vector<128x128xf32>
    %25 = tpu.matmul %24, %0, %cst_13 {dimension_numbers = #tpu.dot_dimension_numbers<[1], [0], [0], [1], [0, 0, 1, 1], [], []>} : vector<128x32xf32>, vector<32x128xf32>, vector<128x128xf32> -> vector<128x128xf32>
    %26 = vector.broadcast %1 : vector<1x128xf32> to vector<128x128xf32>
    %27 = arith.addf %25, %26 : vector<128x128xf32>
    %28 = vector.extract_strided_slice %27 {offsets = [0, 34], sizes = [128, 1], strides = [1, 1]} : vector<128x128xf32> to vector<128x1xf32>
    %29 = vector.shape_cast %28 : vector<128x1xf32> to vector<1x128x1xf32>
    %cst_14 = arith.constant dense<0xFF800000> : vector<1xf32>
    %30 = vector.multi_reduction <maximumf>, %29, %cst_14 [1, 2] : vector<1x128x1xf32> to vector<1xf32>
    %31 = vector.shape_cast %30 : vector<1xf32> to vector<1x1x1xf32>
    %32 = vector.extract %31[0, 0, 0] : f32 from vector<1x1x1xf32>
    %33 = vector.broadcast %32 : f32 to vector<128x1xf32>
    %34 = arith.subf %28, %33 : vector<128x1xf32>
    %35 = math.exp %34 : vector<128x1xf32>
    %36 = vector.extract_strided_slice %27 {offsets = [0, 0], sizes = [128, 33], strides = [1, 1]} : vector<128x128xf32> to vector<128x33xf32>
    %37 = vector.broadcast %35 : vector<128x1xf32> to vector<128x33xf32>
    %38 = arith.mulf %37, %36 : vector<128x33xf32>
    %cst_15 = arith.constant dense<0.000000e+00> : vector<128x33xf32>
    %39 = tpu.matmul %2, %38, %cst_15 {dimension_numbers = #tpu.dot_dimension_numbers<[1], [0], [0], [1], [0, 0, 1, 1], [], []>} : vector<128x128xf32>, vector<128x33xf32>, vector<128x33xf32> -> vector<128x33xf32>
    %40 = vector.extract_strided_slice %39 {offsets = [0, 0], sizes = [128, 32], strides = [1, 1]} : vector<128x33xf32> to vector<128x32xf32>
    %41 = vector.extract_strided_slice %39 {offsets = [0, 32], sizes = [128, 1], strides = [1, 1]} : vector<128x33xf32> to vector<128x1xf32>
    %42 = vector.broadcast %41 : vector<128x1xf32> to vector<128x32xf32>
    %43 = arith.divf %40, %42 : vector<128x32xf32>
    %cst_16 = arith.constant dense<0.000000e+00> : vector<128x128xf32>
    %44 = tpu.matmul %43, %0, %cst_16 {dimension_numbers = #tpu.dot_dimension_numbers<[1], [0], [0], [1], [0, 0, 1, 1], [], []>} : vector<128x32xf32>, vector<32x128xf32>, vector<128x128xf32> -> vector<128x128xf32>
    %45 = vector.broadcast %1 : vector<1x128xf32> to vector<128x128xf32>
    %46 = arith.addf %44, %45 : vector<128x128xf32>
    %47 = vector.extract_strided_slice %46 {offsets = [0, 35], sizes = [128, 1], strides = [1, 1]} : vector<128x128xf32> to vector<128x1xf32>
    %48 = vector.shape_cast %47 : vector<128x1xf32> to vector<1x128x1xf32>
    %cst_17 = arith.constant dense<0xFF800000> : vector<1xf32>
    %49 = vector.multi_reduction <maximumf>, %48, %cst_17 [1, 2] : vector<1x128x1xf32> to vector<1xf32>
    %50 = vector.shape_cast %49 : vector<1xf32> to vector<1x1x1xf32>
    %51 = vector.extract %50[0, 0, 0] : f32 from vector<1x1x1xf32>
    %52 = vector.broadcast %51 : f32 to vector<128x1xf32>
    %53 = arith.subf %47, %52 : vector<128x1xf32>
    %54 = math.exp %53 : vector<128x1xf32>
    %55 = vector.extract_strided_slice %46 {offsets = [0, 0], sizes = [128, 33], strides = [1, 1]} : vector<128x128xf32> to vector<128x33xf32>
    %56 = vector.broadcast %54 : vector<128x1xf32> to vector<128x33xf32>
    %57 = arith.mulf %56, %55 : vector<128x33xf32>
    %cst_18 = arith.constant dense<0.000000e+00> : vector<128x33xf32>
    %58 = tpu.matmul %2, %57, %cst_18 {dimension_numbers = #tpu.dot_dimension_numbers<[1], [0], [0], [1], [0, 0, 1, 1], [], []>} : vector<128x128xf32>, vector<128x33xf32>, vector<128x33xf32> -> vector<128x33xf32>
    %59 = vector.extract_strided_slice %58 {offsets = [0, 0], sizes = [128, 32], strides = [1, 1]} : vector<128x33xf32> to vector<128x32xf32>
    %60 = vector.extract_strided_slice %58 {offsets = [0, 32], sizes = [128, 1], strides = [1, 1]} : vector<128x33xf32> to vector<128x1xf32>
    %61 = vector.broadcast %60 : vector<128x1xf32> to vector<128x32xf32>
    %62 = arith.divf %59, %61 : vector<128x32xf32>
    %cst_19 = arith.constant dense<0.000000e+00> : vector<128x128xf32>
    %63 = tpu.matmul %62, %0, %cst_19 {dimension_numbers = #tpu.dot_dimension_numbers<[1], [0], [0], [1], [0, 0, 1, 1], [], []>} : vector<128x32xf32>, vector<32x128xf32>, vector<128x128xf32> -> vector<128x128xf32>
    %64 = vector.broadcast %1 : vector<1x128xf32> to vector<128x128xf32>
    %65 = arith.addf %63, %64 : vector<128x128xf32>
    %66 = vector.extract_strided_slice %65 {offsets = [0, 36], sizes = [128, 1], strides = [1, 1]} : vector<128x128xf32> to vector<128x1xf32>
    %67 = vector.shape_cast %66 : vector<128x1xf32> to vector<1x128x1xf32>
    %cst_20 = arith.constant dense<0xFF800000> : vector<1xf32>
    %68 = vector.multi_reduction <maximumf>, %67, %cst_20 [1, 2] : vector<1x128x1xf32> to vector<1xf32>
    %69 = vector.shape_cast %68 : vector<1xf32> to vector<1x1x1xf32>
    %70 = vector.extract %69[0, 0, 0] : f32 from vector<1x1x1xf32>
    %71 = vector.broadcast %70 : f32 to vector<128x1xf32>
    %72 = arith.subf %66, %71 : vector<128x1xf32>
    %73 = math.exp %72 : vector<128x1xf32>
    %74 = vector.extract_strided_slice %65 {offsets = [0, 0], sizes = [128, 33], strides = [1, 1]} : vector<128x128xf32> to vector<128x33xf32>
    %75 = vector.broadcast %73 : vector<128x1xf32> to vector<128x33xf32>
    %76 = arith.mulf %75, %74 : vector<128x33xf32>
    %cst_21 = arith.constant dense<0.000000e+00> : vector<128x33xf32>
    %77 = tpu.matmul %2, %76, %cst_21 {dimension_numbers = #tpu.dot_dimension_numbers<[1], [0], [0], [1], [0, 0, 1, 1], [], []>} : vector<128x128xf32>, vector<128x33xf32>, vector<128x33xf32> -> vector<128x33xf32>
    %78 = vector.extract_strided_slice %77 {offsets = [0, 0], sizes = [128, 32], strides = [1, 1]} : vector<128x33xf32> to vector<128x32xf32>
    %79 = vector.extract_strided_slice %77 {offsets = [0, 32], sizes = [128, 1], strides = [1, 1]} : vector<128x33xf32> to vector<128x1xf32>
    %80 = vector.broadcast %79 : vector<128x1xf32> to vector<128x32xf32>
    %81 = arith.divf %78, %80 : vector<128x32xf32>
    %cst_22 = arith.constant dense<0.000000e+00> : vector<128xf32>
    %82 = vector.multi_reduction <add>, %81, %cst_22 [1] : vector<128x32xf32> to vector<128xf32>
    %83 = vector.shape_cast %82 : vector<128xf32> to vector<128x1xf32>
    %cst_23 = arith.constant 3.200000e+01 : f32
    %84 = vector.broadcast %cst_23 : f32 to vector<128x1xf32>
    %85 = arith.divf %83, %84 : vector<128x1xf32>
    %86 = vector.broadcast %85 : vector<128x1xf32> to vector<128x32xf32>
    %87 = arith.subf %81, %86 : vector<128x32xf32>
    %88 = arith.mulf %87, %87 : vector<128x32xf32>
    %cst_24 = arith.constant dense<0.000000e+00> : vector<128xf32>
    %89 = vector.multi_reduction <add>, %88, %cst_24 [1] : vector<128x32xf32> to vector<128xf32>
    %90 = vector.shape_cast %89 : vector<128xf32> to vector<128x1xf32>
    %cst_25 = arith.constant 3.200000e+01 : f32
    %91 = vector.broadcast %cst_25 : f32 to vector<128x1xf32>
    %92 = arith.divf %90, %91 : vector<128x1xf32>
    %93 = vector.broadcast %85 : vector<128x1xf32> to vector<128x32xf32>
    %94 = arith.subf %81, %93 : vector<128x32xf32>
    %cst_26 = arith.constant 9.99999974E-6 : f32
    %95 = vector.broadcast %cst_26 : f32 to vector<128x1xf32>
    %96 = arith.addf %92, %95 : vector<128x1xf32>
    %97 = math.rsqrt %96 : vector<128x1xf32>
    %98 = vector.broadcast %97 : vector<128x1xf32> to vector<128x32xf32>
    %99 = arith.mulf %94, %98 : vector<128x32xf32>
    %100 = vector.broadcast %3 : vector<1x32xf32> to vector<128x32xf32>
    %101 = arith.mulf %99, %100 : vector<128x32xf32>
    %102 = vector.broadcast %4 : vector<1x32xf32> to vector<128x32xf32>
    %103 = arith.addf %101, %102 : vector<128x32xf32>
    %c0_27 = arith.constant 0 : index
    %c0_28 = arith.constant 0 : index
    %104 = vector.load %arg7[%c0_27, %c0_28] : memref<256x32xf32, #tpu.memory_space<vmem>>, vector<128x32xf32>
    tpu.vector_store %arg7[%c0_27, %c0_28], %103 {strides = array<i32>} : memref<256x32xf32, #tpu.memory_space<vmem>>, vector<128x32xf32>,
    %c128 = arith.constant 128 : index
    %c0_29 = arith.constant 0 : index
    %105 = vector.load %arg1[%c128, %c0_29] : memref<256x32xf32, #tpu.memory_space<vmem>>, vector<128x32xf32>
    %cst_30 = arith.constant dense<0.000000e+00> : vector<128x128xf32>
    %106 = tpu.matmul %105, %0, %cst_30 {dimension_numbers = #tpu.dot_dimension_numbers<[1], [0], [0], [1], [0, 0, 1, 1], [], []>} : vector<128x32xf32>, vector<32x128xf32>, vector<128x128xf32> -> vector<128x128xf32>
    %107 = vector.broadcast %1 : vector<1x128xf32> to vector<128x128xf32>
    %108 = arith.addf %106, %107 : vector<128x128xf32>
    %109 = vector.extract_strided_slice %108 {offsets = [0, 33], sizes = [128, 1], strides = [1, 1]} : vector<128x128xf32> to vector<128x1xf32>
    %110 = vector.shape_cast %109 : vector<128x1xf32> to vector<1x128x1xf32>
    %cst_31 = arith.constant dense<0xFF800000> : vector<1xf32>
    %111 = vector.multi_reduction <maximumf>, %110, %cst_31 [1, 2] : vector<1x128x1xf32> to vector<1xf32>
    %112 = vector.shape_cast %111 : vector<1xf32> to vector<1x1x1xf32>
    %113 = vector.extract %112[0, 0, 0] : f32 from vector<1x1x1xf32>
    %114 = vector.broadcast %113 : f32 to vector<128x1xf32>
    %115 = arith.subf %109, %114 : vector<128x1xf32>
    %116 = math.exp %115 : vector<128x1xf32>
    %117 = vector.extract_strided_slice %108 {offsets = [0, 0], sizes = [128, 33], strides = [1, 1]} : vector<128x128xf32> to vector<128x33xf32>
    %118 = vector.broadcast %116 : vector<128x1xf32> to vector<128x33xf32>
    %119 = arith.mulf %118, %117 : vector<128x33xf32>
    %cst_32 = arith.constant dense<0.000000e+00> : vector<128x33xf32>
    %120 = tpu.matmul %2, %119, %cst_32 {dimension_numbers = #tpu.dot_dimension_numbers<[1], [0], [0], [1], [0, 0, 1, 1], [], []>} : vector<128x128xf32>, vector<128x33xf32>, vector<128x33xf32> -> vector<128x33xf32>
    %121 = vector.extract_strided_slice %120 {offsets = [0, 0], sizes = [128, 32], strides = [1, 1]} : vector<128x33xf32> to vector<128x32xf32>
    %122 = vector.extract_strided_slice %120 {offsets = [0, 32], sizes = [128, 1], strides = [1, 1]} : vector<128x33xf32> to vector<128x1xf32>
    %123 = vector.broadcast %122 : vector<128x1xf32> to vector<128x32xf32>
    %124 = arith.divf %121, %123 : vector<128x32xf32>
    %cst_33 = arith.constant dense<0.000000e+00> : vector<128x128xf32>
    %125 = tpu.matmul %124, %0, %cst_33 {dimension_numbers = #tpu.dot_dimension_numbers<[1], [0], [0], [1], [0, 0, 1, 1], [], []>} : vector<128x32xf32>, vector<32x128xf32>, vector<128x128xf32> -> vector<128x128xf32>
    %126 = vector.broadcast %1 : vector<1x128xf32> to vector<128x128xf32>
    %127 = arith.addf %125, %126 : vector<128x128xf32>
    %128 = vector.extract_strided_slice %127 {offsets = [0, 34], sizes = [128, 1], strides = [1, 1]} : vector<128x128xf32> to vector<128x1xf32>
    %129 = vector.shape_cast %128 : vector<128x1xf32> to vector<1x128x1xf32>
    %cst_34 = arith.constant dense<0xFF800000> : vector<1xf32>
    %130 = vector.multi_reduction <maximumf>, %129, %cst_34 [1, 2] : vector<1x128x1xf32> to vector<1xf32>
    %131 = vector.shape_cast %130 : vector<1xf32> to vector<1x1x1xf32>
    %132 = vector.extract %131[0, 0, 0] : f32 from vector<1x1x1xf32>
    %133 = vector.broadcast %132 : f32 to vector<128x1xf32>
    %134 = arith.subf %128, %133 : vector<128x1xf32>
    %135 = math.exp %134 : vector<128x1xf32>
    %136 = vector.extract_strided_slice %127 {offsets = [0, 0], sizes = [128, 33], strides = [1, 1]} : vector<128x128xf32> to vector<128x33xf32>
    %137 = vector.broadcast %135 : vector<128x1xf32> to vector<128x33xf32>
    %138 = arith.mulf %137, %136 : vector<128x33xf32>
    %cst_35 = arith.constant dense<0.000000e+00> : vector<128x33xf32>
    %139 = tpu.matmul %2, %138, %cst_35 {dimension_numbers = #tpu.dot_dimension_numbers<[1], [0], [0], [1], [0, 0, 1, 1], [], []>} : vector<128x128xf32>, vector<128x33xf32>, vector<128x33xf32> -> vector<128x33xf32>
    %140 = vector.extract_strided_slice %139 {offsets = [0, 0], sizes = [128, 32], strides = [1, 1]} : vector<128x33xf32> to vector<128x32xf32>
    %141 = vector.extract_strided_slice %139 {offsets = [0, 32], sizes = [128, 1], strides = [1, 1]} : vector<128x33xf32> to vector<128x1xf32>
    %142 = vector.broadcast %141 : vector<128x1xf32> to vector<128x32xf32>
    %143 = arith.divf %140, %142 : vector<128x32xf32>
    %cst_36 = arith.constant dense<0.000000e+00> : vector<128x128xf32>
    %144 = tpu.matmul %143, %0, %cst_36 {dimension_numbers = #tpu.dot_dimension_numbers<[1], [0], [0], [1], [0, 0, 1, 1], [], []>} : vector<128x32xf32>, vector<32x128xf32>, vector<128x128xf32> -> vector<128x128xf32>
    %145 = vector.broadcast %1 : vector<1x128xf32> to vector<128x128xf32>
    %146 = arith.addf %144, %145 : vector<128x128xf32>
    %147 = vector.extract_strided_slice %146 {offsets = [0, 35], sizes = [128, 1], strides = [1, 1]} : vector<128x128xf32> to vector<128x1xf32>
    %148 = vector.shape_cast %147 : vector<128x1xf32> to vector<1x128x1xf32>
    %cst_37 = arith.constant dense<0xFF800000> : vector<1xf32>
    %149 = vector.multi_reduction <maximumf>, %148, %cst_37 [1, 2] : vector<1x128x1xf32> to vector<1xf32>
    %150 = vector.shape_cast %149 : vector<1xf32> to vector<1x1x1xf32>
    %151 = vector.extract %150[0, 0, 0] : f32 from vector<1x1x1xf32>
    %152 = vector.broadcast %151 : f32 to vector<128x1xf32>
    %153 = arith.subf %147, %152 : vector<128x1xf32>
    %154 = math.exp %153 : vector<128x1xf32>
    %155 = vector.extract_strided_slice %146 {offsets = [0, 0], sizes = [128, 33], strides = [1, 1]} : vector<128x128xf32> to vector<128x33xf32>
    %156 = vector.broadcast %154 : vector<128x1xf32> to vector<128x33xf32>
    %157 = arith.mulf %156, %155 : vector<128x33xf32>
    %cst_38 = arith.constant dense<0.000000e+00> : vector<128x33xf32>
    %158 = tpu.matmul %2, %157, %cst_38 {dimension_numbers = #tpu.dot_dimension_numbers<[1], [0], [0], [1], [0, 0, 1, 1], [], []>} : vector<128x128xf32>, vector<128x33xf32>, vector<128x33xf32> -> vector<128x33xf32>
    %159 = vector.extract_strided_slice %158 {offsets = [0, 0], sizes = [128, 32], strides = [1, 1]} : vector<128x33xf32> to vector<128x32xf32>
    %160 = vector.extract_strided_slice %158 {offsets = [0, 32], sizes = [128, 1], strides = [1, 1]} : vector<128x33xf32> to vector<128x1xf32>
    %161 = vector.broadcast %160 : vector<128x1xf32> to vector<128x32xf32>
    %162 = arith.divf %159, %161 : vector<128x32xf32>
    %cst_39 = arith.constant dense<0.000000e+00> : vector<128x128xf32>
    %163 = tpu.matmul %162, %0, %cst_39 {dimension_numbers = #tpu.dot_dimension_numbers<[1], [0], [0], [1], [0, 0, 1, 1], [], []>} : vector<128x32xf32>, vector<32x128xf32>, vector<128x128xf32> -> vector<128x128xf32>
    %164 = vector.broadcast %1 : vector<1x128xf32> to vector<128x128xf32>
    %165 = arith.addf %163, %164 : vector<128x128xf32>
    %166 = vector.extract_strided_slice %165 {offsets = [0, 36], sizes = [128, 1], strides = [1, 1]} : vector<128x128xf32> to vector<128x1xf32>
    %167 = vector.shape_cast %166 : vector<128x1xf32> to vector<1x128x1xf32>
    %cst_40 = arith.constant dense<0xFF800000> : vector<1xf32>
    %168 = vector.multi_reduction <maximumf>, %167, %cst_40 [1, 2] : vector<1x128x1xf32> to vector<1xf32>
    %169 = vector.shape_cast %168 : vector<1xf32> to vector<1x1x1xf32>
    %170 = vector.extract %169[0, 0, 0] : f32 from vector<1x1x1xf32>
    %171 = vector.broadcast %170 : f32 to vector<128x1xf32>
    %172 = arith.subf %166, %171 : vector<128x1xf32>
    %173 = math.exp %172 : vector<128x1xf32>
    %174 = vector.extract_strided_slice %165 {offsets = [0, 0], sizes = [128, 33], strides = [1, 1]} : vector<128x128xf32> to vector<128x33xf32>
    %175 = vector.broadcast %173 : vector<128x1xf32> to vector<128x33xf32>
    %176 = arith.mulf %175, %174 : vector<128x33xf32>
    %cst_41 = arith.constant dense<0.000000e+00> : vector<128x33xf32>
    %177 = tpu.matmul %2, %176, %cst_41 {dimension_numbers = #tpu.dot_dimension_numbers<[1], [0], [0], [1], [0, 0, 1, 1], [], []>} : vector<128x128xf32>, vector<128x33xf32>, vector<128x33xf32> -> vector<128x33xf32>
    %178 = vector.extract_strided_slice %177 {offsets = [0, 0], sizes = [128, 32], strides = [1, 1]} : vector<128x33xf32> to vector<128x32xf32>
    %179 = vector.extract_strided_slice %177 {offsets = [0, 32], sizes = [128, 1], strides = [1, 1]} : vector<128x33xf32> to vector<128x1xf32>
    %180 = vector.broadcast %179 : vector<128x1xf32> to vector<128x32xf32>
    %181 = arith.divf %178, %180 : vector<128x32xf32>
    %cst_42 = arith.constant dense<0.000000e+00> : vector<128xf32>
    %182 = vector.multi_reduction <add>, %181, %cst_42 [1] : vector<128x32xf32> to vector<128xf32>
    %183 = vector.shape_cast %182 : vector<128xf32> to vector<128x1xf32>
    %cst_43 = arith.constant 3.200000e+01 : f32
    %184 = vector.broadcast %cst_43 : f32 to vector<128x1xf32>
    %185 = arith.divf %183, %184 : vector<128x1xf32>
    %186 = vector.broadcast %185 : vector<128x1xf32> to vector<128x32xf32>
    %187 = arith.subf %181, %186 : vector<128x32xf32>
    %188 = arith.mulf %187, %187 : vector<128x32xf32>
    %cst_44 = arith.constant dense<0.000000e+00> : vector<128xf32>
    %189 = vector.multi_reduction <add>, %188, %cst_44 [1] : vector<128x32xf32> to vector<128xf32>
    %190 = vector.shape_cast %189 : vector<128xf32> to vector<128x1xf32>
    %cst_45 = arith.constant 3.200000e+01 : f32
    %191 = vector.broadcast %cst_45 : f32 to vector<128x1xf32>
    %192 = arith.divf %190, %191 : vector<128x1xf32>
    %193 = vector.broadcast %185 : vector<128x1xf32> to vector<128x32xf32>
    %194 = arith.subf %181, %193 : vector<128x32xf32>
    %cst_46 = arith.constant 9.99999974E-6 : f32
    %195 = vector.broadcast %cst_46 : f32 to vector<128x1xf32>
    %196 = arith.addf %192, %195 : vector<128x1xf32>
    %197 = math.rsqrt %196 : vector<128x1xf32>
    %198 = vector.broadcast %197 : vector<128x1xf32> to vector<128x32xf32>
    %199 = arith.mulf %194, %198 : vector<128x32xf32>
    %200 = vector.broadcast %3 : vector<1x32xf32> to vector<128x32xf32>
    %201 = arith.mulf %199, %200 : vector<128x32xf32>
    %202 = vector.broadcast %4 : vector<1x32xf32> to vector<128x32xf32>
    %203 = arith.addf %201, %202 : vector<128x32xf32>
    %c128_47 = arith.constant 128 : index
    %c0_48 = arith.constant 0 : index
    %204 = vector.load %arg7[%c128_47, %c0_48] : memref<256x32xf32, #tpu.memory_space<vmem>>, vector<128x32xf32>
    tpu.vector_store %arg7[%c128_47, %c0_48], %203 {strides = array<i32>} : memref<256x32xf32, #tpu.memory_space<vmem>>, vector<128x32xf32>,
    return
  }
  func.func @transform_0(%arg0: i32) -> (i32, i32) {
    %c0_i32 = arith.constant 0 : i32
    %c0_i32_0 = arith.constant 0 : i32
    return %arg0, %c0_i32 : i32, i32
  }
  func.func @transform_1(%arg0: i32) -> (i32, i32) {
    %c0_i32 = arith.constant 0 : i32
    %c0_i32_0 = arith.constant 0 : i32
    %c0_i32_1 = arith.constant 0 : i32
    return %c0_i32, %c0_i32_0 : i32, i32
  }
  func.func @transform_2(%arg0: i32) -> (i32, i32) {
    %c0_i32 = arith.constant 0 : i32
    %c0_i32_0 = arith.constant 0 : i32
    %c0_i32_1 = arith.constant 0 : i32
    return %c0_i32, %c0_i32_0 : i32, i32
  }
  func.func @transform_3(%arg0: i32) -> (i32, i32) {
    %c0_i32 = arith.constant 0 : i32
    %c0_i32_0 = arith.constant 0 : i32
    %c0_i32_1 = arith.constant 0 : i32
    return %c0_i32, %c0_i32_0 : i32, i32
  }
  func.func @transform_4(%arg0: i32) -> (i32, i32) {
    %c0_i32 = arith.constant 0 : i32
    %c0_i32_0 = arith.constant 0 : i32
    %c0_i32_1 = arith.constant 0 : i32
    return %c0_i32, %c0_i32_0 : i32, i32
  }
  func.func @transform_5(%arg0: i32) -> (i32, i32) {
    %c0_i32 = arith.constant 0 : i32
    %c0_i32_0 = arith.constant 0 : i32
    %c0_i32_1 = arith.constant 0 : i32
    return %c0_i32, %c0_i32_0 : i32, i32
  }
  func.func @transform_6(%arg0: i32) -> (i32, i32) {
    %c0_i32 = arith.constant 0 : i32
    %c0_i32_0 = arith.constant 0 : i32
    return %arg0, %c0_i32 : i32, i32
  }
}

</mosaic_0001>

<llo_original>
// kernel: tpu_custom_call.1
$region0: #{tpu_custom_call.1}
  #allocation0 [shape = 'u32[]', space=smem, size = 0x4, offset = 0x4, fixed_abs, tag = 'smem constant byte address 0x4 - core index']
  #allocation1 [shape = 'u32[144,128]{1,0:T(1,128)}', space=vmem, size = 0x12000, scoped, tag = 'internal scratch']
  %s0 = inlined_call_operand.vmem [shape: f32[512,32], index: 0, kind: input, shape index: {}]
  %s1 = inlined_call_operand.vmem [shape: f32[32,128], index: 1, kind: input, shape index: {}]
  %s2 = inlined_call_operand.vmem [shape: f32[1,128], index: 2, kind: input, shape index: {}]
  %s3 = inlined_call_operand.vmem [shape: f32[128,128], index: 3, kind: input, shape index: {}]
  %s4 = inlined_call_operand.vmem [shape: f32[1,32], index: 4, kind: input, shape index: {}]
  %s5 = inlined_call_operand.vmem [shape: f32[1,32], index: 5, kind: input, shape index: {}]
  %s6 = inlined_call_operand.vmem [shape: f32[512,32], index: 6, kind: output, shape index: {}]
  %s7 = sld [smem:[#allocation0]]
  $region57: #{tpu_custom_call.1} parent=0
    _
  %s9 = ssub.s32 1, %s7
  %s10 = scalar_select 0, %s9, %s7
  loop: start=0, step=1, limit=4
  $region2: #{tpu_custom_call.1} parent=0 // loop_pre_header
    _
  $region3: #{tpu_custom_call.1} parent=0 // loop_header
    %s12 = sphi 0, %s16
    %p13 = scmp.ge.s32.totalorder %s12, 4
    %s22 = sphi 0, %s24
    %s25 = sphi 0, %s22
    %s26 = sphi 0, %s25
    %s42 = sphi 0, %s26
    %s46 = sphi 0, %s46
    %s48 = sphi 0, %s46
    %s49 = sphi 0, %s48
    %s63 = sphi 0, %s49
    %s67 = sphi 0, %s67
    %s69 = sphi 0, %s67
    %s70 = sphi 0, %s69
    %s84 = sphi 0, %s70
    %s88 = sphi 0, %s88
    %s90 = sphi 0, %s88
    %s91 = sphi 0, %s90
    %s105 = sphi 0, %s91
    %s109 = sphi 0, %s109
    %s111 = sphi 0, %s109
    %s112 = sphi 0, %s111
    %s126 = sphi 0, %s112
    %s130 = sphi 0, %s130
    %s132 = sphi 0, %s130
    %s133 = sphi 0, %s132
    %s147 = sphi 0, %s133
    %s153 = sphi 0, %s155
    %s156 = sphi 0, %s153
    %s157 = sphi 0, %s156
    %s173 = sphi 0, %s157
  $region4: #{tpu_custom_call.1} parent=0 // loop_header_branch
    %15 = sbr.rel (%p13) target = $region8
  $region5: #{tpu_custom_call.1} parent=0 // loop_body
    %s17 = ssub.s32 %s12, 1
    %s18 = ssub.s32 %s12, 2
    %s19 = sadd.s32 %s12, 1
    %s20 = ssub.s32 %s12, %s19
    %p21 = scmp.eq.s32.totalorder %s20, 0
    %s23 = sadd.s32 %s22, 1
    %s24 = scalar_select %p21, %s22, %s23
    %p27 = pneg %p21
    %p28 = scmp.eq.s32.totalorder %s12, 1
    %p29 = por %p27, %p28
    %p30 = scmp.ne.s32.totalorder %s22, %s25
    %p31 = scmp.eq.s32.totalorder %s12, 0
    %p32 = por %p30, %p31
    %p33 = scmp.ne.s32.totalorder %s22, %s25
    %p34 = scmp.eq.s32.totalorder %s17, 1
    %p35 = por %p33, %p34
    %p36 = scmp.ne.s32.totalorder %s25, %s26
    %p37 = scmp.eq.s32.totalorder %s17, 0
    %p38 = por %p36, %p37
    %p39 = scmp.ne.s32.totalorder %s25, %s26
    %p40 = scmp.eq.s32.totalorder %s18, 1
    %p41 = por %p39, %p40
    %p43 = scmp.ne.s32.totalorder %s26, %s42
    %p44 = scmp.eq.s32.totalorder %s18, 0
    %p45 = por %p43, %p44
    %s47 = sadd.s32 %s46, 1
    %p50 = scmp.eq.s32.totalorder %s12, 1
    %p51 = scmp.ne.s32.totalorder %s46, %s48
    %p52 = scmp.eq.s32.totalorder %s12, 0
    %p53 = por %p51, %p52
    %p54 = scmp.ne.s32.totalorder %s46, %s48
    %p55 = scmp.eq.s32.totalorder %s17, 1
    %p56 = por %p54, %p55
    %p57 = scmp.ne.s32.totalorder %s48, %s49
    %p58 = scmp.eq.s32.totalorder %s17, 0
    %p59 = por %p57, %p58
    %p60 = scmp.ne.s32.totalorder %s48, %s49
    %p61 = scmp.eq.s32.totalorder %s18, 1
    %p62 = por %p60, %p61
    %p64 = scmp.ne.s32.totalorder %s49, %s63
    %p65 = scmp.eq.s32.totalorder %s18, 0
    %p66 = por %p64, %p65
    %s68 = sadd.s32 %s67, 1
    %p71 = scmp.eq.s32.totalorder %s12, 1
    %p72 = scmp.ne.s32.totalorder %s67, %s69
    %p73 = scmp.eq.s32.totalorder %s12, 0
    %p74 = por %p72, %p73
    %p75 = scmp.ne.s32.totalorder %s67, %s69
    %p76 = scmp.eq.s32.totalorder %s17, 1
    %p77 = por %p75, %p76
    %p78 = scmp.ne.s32.totalorder %s69, %s70
    %p79 = scmp.eq.s32.totalorder %s17, 0
    %p80 = por %p78, %p79
    %p81 = scmp.ne.s32.totalorder %s69, %s70
    %p82 = scmp.eq.s32.totalorder %s18, 1
    %p83 = por %p81, %p82
    %p85 = scmp.ne.s32.totalorder %s70, %s84
    %p86 = scmp.eq.s32.totalorder %s18, 0
    %p87 = por %p85, %p86
    %s89 = sadd.s32 %s88, 1
    %p92 = scmp.eq.s32.totalorder %s12, 1
    %p93 = scmp.ne.s32.totalorder %s88, %s90
    %p94 = scmp.eq.s32.totalorder %s12, 0
    %p95 = por %p93, %p94
    %p96 = scmp.ne.s32.totalorder %s88, %s90
    %p97 = scmp.eq.s32.totalorder %s17, 1
    %p98 = por %p96, %p97
    %p99 = scmp.ne.s32.totalorder %s90, %s91
    %p100 = scmp.eq.s32.totalorder %s17, 0
    %p101 = por %p99, %p100
    %p102 = scmp.ne.s32.totalorder %s90, %s91
    %p103 = scmp.eq.s32.totalorder %s18, 1
    %p104 = por %p102, %p103
    %p106 = scmp.ne.s32.totalorder %s91, %s105
    %p107 = scmp.eq.s32.totalorder %s18, 0
    %p108 = por %p106, %p107
    %s110 = sadd.s32 %s109, 1
    %p113 = scmp.eq.s32.totalorder %s12, 1
    %p114 = scmp.ne.s32.totalorder %s109, %s111
    %p115 = scmp.eq.s32.totalorder %s12, 0
    %p116 = por %p114, %p115
    %p117 = scmp.ne.s32.totalorder %s109, %s111
    %p118 = scmp.eq.s32.totalorder %s17, 1
    %p119 = por %p117, %p118
    %p120 = scmp.ne.s32.totalorder %s111, %s112
    %p121 = scmp.eq.s32.totalorder %s17, 0
    %p122 = por %p120, %p121
    %p123 = scmp.ne.s32.totalorder %s111, %s112
    %p124 = scmp.eq.s32.totalorder %s18, 1
    %p125 = por %p123, %p124
    %p127 = scmp.ne.s32.totalorder %s112, %s126
    %p128 = scmp.eq.s32.totalorder %s18, 0
    %p129 = por %p127, %p128
    %s131 = sadd.s32 %s130, 1
    %p134 = scmp.eq.s32.totalorder %s12, 1
    %p135 = scmp.ne.s32.totalorder %s130, %s132
    %p136 = scmp.eq.s32.totalorder %s12, 0
    %p137 = por %p135, %p136
    %p138 = scmp.ne.s32.totalorder %s130, %s132
    %p139 = scmp.eq.s32.totalorder %s17, 1
    %p140 = por %p138, %p139
    %p141 = scmp.ne.s32.totalorder %s132, %s133
    %p142 = scmp.eq.s32.totalorder %s17, 0
    %p143 = por %p141, %p142
    %p144 = scmp.ne.s32.totalorder %s132, %s133
    %p145 = scmp.eq.s32.totalorder %s18, 1
    %p146 = por %p144, %p145
    %p148 = scmp.ne.s32.totalorder %s133, %s147
    %p149 = scmp.eq.s32.totalorder %s18, 0
    %p150 = por %p148, %p149
    %s151 = ssub.s32 %s12, %s19
    %p152 = scmp.eq.s32.totalorder %s151, 0
    %s154 = sadd.s32 %s153, 1
    %s155 = scalar_select %p152, %s153, %s154
    %p158 = pneg %p152
    %p159 = scmp.eq.s32.totalorder %s12, 1
    %p160 = por %p158, %p159
    %p161 = scmp.ne.s32.totalorder %s153, %s156
    %p162 = scmp.eq.s32.totalorder %s12, 0
    %p163 = por %p161, %p162
    %p164 = scmp.ne.s32.totalorder %s153, %s156
    %p165 = scmp.eq.s32.totalorder %s17, 1
    %p166 = por %p164, %p165
    %p167 = scmp.ne.s32.totalorder %s156, %s157
    %p168 = scmp.eq.s32.totalorder %s17, 0
    %p169 = por %p167, %p168
    %p170 = scmp.ne.s32.totalorder %s156, %s157
    %p171 = scmp.eq.s32.totalorder %s18, 1
    %p172 = por %p170, %p171
    %p174 = scmp.ne.s32.totalorder %s157, %s173
    %p175 = scmp.eq.s32.totalorder %s18, 0
    %p176 = por %p174, %p175
    %p177 = scmp.le.s32.totalorder 1, %s12
    %p178 = scmp.lt.s32.totalorder %s12, 3
    %p179 = pnand %p177, %p178
    %p180 = pneg %p179
    // Predicated region
    $region9: #{tpu_custom_call.1} parent=5 // pred_check
      _
    $region10: #{tpu_custom_call.1} parent=5 // pred_check_branch
      %182 = sbr.rel (%p179) target = $region12
    $region11: #{tpu_custom_call.1} parent=5 // pred_region
      %s183 = ssub.s32 %s12, 1
      // Predicated region
      $region13: #{tpu_custom_call.1} parent=11 // pred_check
        %p184 = pneg %p59
      $region14: #{tpu_custom_call.1} parent=11 // pred_check_branch
        %186 = sbr.rel (%p184) target = $region16
      $region15: #{tpu_custom_call.1} parent=11 // pred_region
        _
      $region16: #{tpu_custom_call.1} parent=11 // pred_fallthru
        _
      // Predicated region
      $region17: #{tpu_custom_call.1} parent=11 // pred_check
        %p187 = pneg %p80
      $region18: #{tpu_custom_call.1} parent=11 // pred_check_branch
        %189 = sbr.rel (%p187) target = $region20
      $region19: #{tpu_custom_call.1} parent=11 // pred_region
        _
      $region20: #{tpu_custom_call.1} parent=11 // pred_fallthru
        _
      // Predicated region
      $region21: #{tpu_custom_call.1} parent=11 // pred_check
        %p190 = pneg %p101
      $region22: #{tpu_custom_call.1} parent=11 // pred_check_branch
        %192 = sbr.rel (%p190) target = $region24
      $region23: #{tpu_custom_call.1} parent=11 // pred_region
        _
      $region24: #{tpu_custom_call.1} parent=11 // pred_fallthru
        _
      // Predicated region
      $region25: #{tpu_custom_call.1} parent=11 // pred_check
        %p193 = pneg %p122
      $region26: #{tpu_custom_call.1} parent=11 // pred_check_branch
        %195 = sbr.rel (%p193) target = $region28
      $region27: #{tpu_custom_call.1} parent=11 // pred_region
        _
      $region28: #{tpu_custom_call.1} parent=11 // pred_fallthru
        _
      // Predicated region
      $region29: #{tpu_custom_call.1} parent=11 // pred_check
        %p196 = pneg %p143
      $region30: #{tpu_custom_call.1} parent=11 // pred_check_branch
        %198 = sbr.rel (%p196) target = $region32
      $region31: #{tpu_custom_call.1} parent=11 // pred_region
        _
      $region32: #{tpu_custom_call.1} parent=11 // pred_fallthru
        _
    $region12: #{tpu_custom_call.1} parent=5 // pred_fallthru
      _
    %p199 = scmp.lt.s32.totalorder %s12, 2
    // Predicated region
    $region33: #{tpu_custom_call.1} parent=5 // pred_check
      %p200 = pneg %p199
    $region34: #{tpu_custom_call.1} parent=5 // pred_check_branch
      %202 = sbr.rel (%p200) target = $region36
    $region35: #{tpu_custom_call.1} parent=5 // pred_region
      // Predicated region
      $region37: #{tpu_custom_call.1} parent=35 // pred_check
        %p203 = pneg %p32
      $region38: #{tpu_custom_call.1} parent=35 // pred_check_branch
        %205 = sbr.rel (%p203) target = $region40
      $region39: #{tpu_custom_call.1} parent=35 // pred_region
        %s206 = smul.u32 32, %s12
        %p207 = scmp.lt.s32.totalorder %s206, 63
        %s208 = scalar_select %p207, %s206, 63
        %s209 = smul.addr %s208, 8
        %s210 = scalar_lea.vmem %s0, %s209
        %s211 = smul.u32 32, %s12
      $region40: #{tpu_custom_call.1} parent=35 // pred_fallthru
        _
    $region36: #{tpu_custom_call.1} parent=5 // pred_fallthru
      _
    %p212 = scmp.le.s32.totalorder 1, %s12
    %p213 = scmp.lt.s32.totalorder %s12, 3
    %p214 = pnand %p212, %p213
    %p215 = pneg %p214
    // Predicated region
    $region41: #{tpu_custom_call.1} parent=5 // pred_check
      _
    $region42: #{tpu_custom_call.1} parent=5 // pred_check_branch
      %217 = sbr.rel (%p214) target = $region44
    $region43: #{tpu_custom_call.1} parent=5 // pred_region
      %s218 = ssub.s32 %s12, 1
      %s219 = smul.u32 32, %s17
      %p220 = scmp.lt.s32.totalorder %s219, 63
      %s221 = scalar_select %p220, %s219, 63
      %s222 = smul.addr %s221, 8
      %s223 = scalar_lea.vmem %s0, %s222
      %p224 = pneg %p38
      %p225 = pneg %p35
      %p226 = pneg %p59
      %p227 = pneg %p56
      %p228 = pneg %p80
      %p229 = pneg %p77
      %p230 = pneg %p101
      %p231 = pneg %p98
      %p232 = pneg %p122
      %p233 = pneg %p119
      %p234 = pneg %p143
      %p235 = pneg %p140
      %p236 = pneg %p169
      %p237 = pneg %p166
      %s238 = smul.u32 32, %s17
      %p239 = scmp.lt.s32.totalorder %s238, 63
      %s240 = scalar_select %p239, %s238, 63
      %s241 = smul.addr %s240, 8
      %s242 = scalar_lea.vmem %s6, %s241
      %s243 = smul.u32 32, %s17
      %p244 = scmp.lt.s32.totalorder %s243, 63
      %s245 = scalar_select %p244, %s243, 63
      %s246 = smul.addr %s245, 8
      %s247 = scalar_lea.vmem %s0, %s246
      %s248 = smul.u32 32, %s17
      %s249 = smul.u32 32, %s17
      %p250 = scmp.lt.s32.totalorder %s249, 63
      %s251 = scalar_select %p250, %s249, 63
      %s252 = smul.addr %s251, 8
      %s253 = scalar_lea.vmem %s6, %s252
      %s254 = smul.u32 32, %s17
      %v255 = vld [vmem:[%s1] sm:$0xff]
      %v256 = vld [vmem:[%s1 + $0x8] sm:$0xff]
      %v257 = vld [vmem:[%s1 + $0x10] sm:$0xff]
      %v258 = vld [vmem:[%s1 + $0x18] sm:$0xff]
      %v259 = vld [vmem:[%s2] sm:$0x1]
      %v260 = vld [vmem:[%s3] sm:$0xff]
      %v261 = vld [vmem:[%s3 + $0x8] sm:$0xff]
      %v262 = vld [vmem:[%s3 + $0x10] sm:$0xff]
      %v263 = vld [vmem:[%s3 + $0x18] sm:$0xff]
      %v264 = vld [vmem:[%s3 + $0x20] sm:$0xff]
      %v265 = vld [vmem:[%s3 + $0x28] sm:$0xff]
      %v266 = vld [vmem:[%s3 + $0x30] sm:$0xff]
      %v267 = vld [vmem:[%s3 + $0x38] sm:$0xff]
      %v268 = vld [vmem:[%s3 + $0x40] sm:$0xff]
      %v269 = vld [vmem:[%s3 + $0x48] sm:$0xff]
      %v270 = vld [vmem:[%s3 + $0x50] sm:$0xff]
      %v271 = vld [vmem:[%s3 + $0x58] sm:$0xff]
      %v272 = vld [vmem:[%s3 + $0x60] sm:$0xff]
      %v273 = vld [vmem:[%s3 + $0x68] sm:$0xff]
      %v274 = vld [vmem:[%s3 + $0x70] sm:$0xff]
      %v275 = vld [vmem:[%s3 + $0x78] sm:$0xff]
      %v276 = vld [vmem:[%s4] sm:$0x1]
      %v277 = vld [vmem:[%s5] sm:$0x1]
      %v278 = vld [vmem:[%s247] sm:$0xff]
      %v279 = vld [vmem:[%s247 + $0x8] sm:$0xff]
      %v280 = vld [vmem:[%s247 + $0x10] sm:$0xff]
      %v281 = vld [vmem:[%s247 + $0x18] sm:$0xff]
      %v282 = vld [vmem:[%s247 + $0x20] sm:$0xff]
      %v283 = vld [vmem:[%s247 + $0x28] sm:$0xff]
      %v284 = vld [vmem:[%s247 + $0x30] sm:$0xff]
      %v285 = vld [vmem:[%s247 + $0x38] sm:$0xff]
      %v286 = vld [vmem:[%s247 + $0x40] sm:$0xff]
      %v287 = vld [vmem:[%s247 + $0x48] sm:$0xff]
      %v288 = vld [vmem:[%s247 + $0x50] sm:$0xff]
      %v289 = vld [vmem:[%s247 + $0x58] sm:$0xff]
      %v290 = vld [vmem:[%s247 + $0x60] sm:$0xff]
      %v291 = vld [vmem:[%s247 + $0x68] sm:$0xff]
      %v292 = vld [vmem:[%s247 + $0x70] sm:$0xff]
      %v293 = vld [vmem:[%s247 + $0x78] sm:$0xff]
      %v295 = vlaneseq
      %v296 = vshrl.u32 %v295, 7
      %v297 = vsub.s32 0, %v296
      %v298 = vrot.slane %v259, %v297
      %vm300 = vcmask 261120
      %v302 = vsel %vm300, %v278, 0
      %v305 = vsel %vm300, %v279, 0
      %v308 = vsel %vm300, %v280, 0
      %v311 = vsel %vm300, %v281, 0
      %v314 = vsel %vm300, %v282, 0
      %v317 = vsel %vm300, %v283, 0
      %v320 = vsel %vm300, %v284, 0
      %v323 = vsel %vm300, %v285, 0
      %v326 = vsel %vm300, %v286, 0
      %v329 = vsel %vm300, %v287, 0
      %v332 = vsel %vm300, %v288, 0
      %v335 = vsel %vm300, %v289, 0
      %v338 = vsel %vm300, %v290, 0
      %v341 = vsel %vm300, %v291, 0
      %v344 = vsel %vm300, %v292, 0
      %v347 = vsel %vm300, %v293, 0
      %349 = vmatprep.subr.mxu0 0.0
      %350 = vmatpush1.msra.mxu0 %v255
      %351 = vmatprep.subr.mxu0 0.0
      %352 = vmatpush1.msra.mxu0 %v256
      %353 = vmatprep.subr.mxu0 0.0
      %354 = vmatpush1.msra.mxu0 %v257
      %355 = vmatprep.subr.mxu0 0.0
      %356 = vmatpush1.msra.mxu0 %v258
      %357 = vmatprep.subr.mxu0 0.0
      %358 = vmatpush1.msra.mxu0 0.0
      %359 = vmatprep.subr.mxu0 0.0
      %360 = vmatpush1.msra.mxu0 0.0
      %361 = vmatprep.subr.mxu0 0.0
      %362 = vmatpush1.msra.mxu0 0.0
      %363 = vmatprep.subr.mxu0 0.0
      %364 = vmatpush1.msra.mxu0 0.0
      %365 = vmatprep.subr.mxu0 0.0
      %366 = vmatpush1.msra.mxu0 0.0
      %367 = vmatprep.subr.mxu0 0.0
      %368 = vmatpush1.msra.mxu0 0.0
      %369 = vmatprep.subr.mxu0 0.0
      %370 = vmatpush1.msra.mxu0 0.0
      %371 = vmatprep.subr.mxu0 0.0
      %372 = vmatpush1.msra.mxu0 0.0
      %373 = vmatprep.subr.mxu0 0.0
      %374 = vmatpush1.msra.mxu0 0.0
      %375 = vmatprep.subr.mxu0 0.0
      %376 = vmatpush1.msra.mxu0 0.0
      %377 = vmatprep.subr.mxu0 0.0
      %378 = vmatpush1.msra.mxu0 0.0
      %379 = vmatprep.subr.mxu0 0.0
      %380 = vmatpush1.msra.mxu0 0.0
      %381 = vmatprep.subr.mxu0 0.0
      %382 = vmatpush1.msra.mxu0 0.0
      %383 = vmatprep.subr.mxu0 0.0
      %384 = vmatpush1.msra.mxu0 0.0
      %385 = vmatprep.subr.mxu0 0.0
      %386 = vmatpush1.msra.mxu0 0.0
      %387 = vmatprep.subr.mxu0 0.0
      %388 = vmatpush1.msra.mxu0 0.0
      %389 = vmatprep.subr.mxu0 0.0
      %390 = vmatpush1.msra.mxu0 0.0
      %391 = vmatprep.subr.mxu0 0.0
      %392 = vmatpush1.msra.mxu0 0.0
      %393 = vmatprep.subr.mxu0 0.0
      %394 = vmatpush1.msra.mxu0 0.0
      %395 = vmatprep.subr.mxu0 0.0
      %396 = vmatpush1.msra.mxu0 0.0
      %397 = vmatprep.subr.mxu0 0.0
      %398 = vmatpush1.msra.mxu0 0.0
      %399 = vmatprep.subr.mxu0 0.0
      %400 = vmatpush1.msra.mxu0 0.0
      %401 = vmatprep.subr.mxu0 0.0
      %402 = vmatpush1.msra.mxu0 0.0
      %403 = vmatprep.subr.mxu0 0.0
      %404 = vmatpush1.msra.mxu0 0.0
      %405 = vmatprep.subr.mxu0 0.0
      %406 = vmatpush1.msra.mxu0 0.0
      %407 = vmatprep.subr.mxu0 0.0
      %408 = vmatpush1.msra.mxu0 0.0
      %409 = vmatprep.subr.mxu0 0.0
      %410 = vmatpush1.msra.mxu0 0.0
      %411 = vmatprep.subr.mxu0 0.0
      %412 = vmatpush1.msra.mxu0 0.0
      %413 = vmatprep.mubr.f32.mxu0 0.0
      %414 = vmatmul.mubr.f32.gmra.mrb[0].mxu0 %v302
      %v415 = vpop.f32.mrb[0].mxu0
      %v416 = vadd.f32 %v298, %v415
      %v417 = vpop.f32.mrb[0].mxu0
      %418 = vmatprep.mubr.f32.mxu0 0.0
      %419 = vmatmul.mubr.f32.gmra.mrb[0].mxu0 %v305
      %v420 = vpop.f32.mrb[0].mxu0
      %v421 = vadd.f32 %v298, %v420
      %v422 = vpop.f32.mrb[0].mxu0
      %423 = vmatprep.mubr.f32.mxu0 0.0
      %424 = vmatmul.mubr.f32.gmra.mrb[0].mxu0 %v308
      %v425 = vpop.f32.mrb[0].mxu0
      %v426 = vadd.f32 %v298, %v425
      %v427 = vpop.f32.mrb[0].mxu0
      %428 = vmatprep.mubr.f32.mxu0 0.0
      %429 = vmatmul.mubr.f32.gmra.mrb[0].mxu0 %v311
      %v430 = vpop.f32.mrb[0].mxu0
      %v431 = vadd.f32 %v298, %v430
      %v432 = vpop.f32.mrb[0].mxu0
      %433 = vmatprep.mubr.f32.mxu0 0.0
      %434 = vmatmul.mubr.f32.gmra.mrb[0].mxu0 %v314
      %v435 = vpop.f32.mrb[0].mxu0
      %v436 = vadd.f32 %v298, %v435
      %v437 = vpop.f32.mrb[0].mxu0
      %438 = vmatprep.mubr.f32.mxu0 0.0
      %439 = vmatmul.mubr.f32.gmra.mrb[0].mxu0 %v317
      %v440 = vpop.f32.mrb[0].mxu0
      %v441 = vadd.f32 %v298, %v440
      %v442 = vpop.f32.mrb[0].mxu0
      %443 = vmatprep.mubr.f32.mxu0 0.0
      %444 = vmatmul.mubr.f32.gmra.mrb[0].mxu0 %v320
      %v445 = vpop.f32.mrb[0].mxu0
      %v446 = vadd.f32 %v298, %v445
      %v447 = vpop.f32.mrb[0].mxu0
      %448 = vmatprep.mubr.f32.mxu0 0.0
      %449 = vmatmul.mubr.f32.gmra.mrb[0].mxu0 %v323
      %v450 = vpop.f32.mrb[0].mxu0
      %v451 = vadd.f32 %v298, %v450
      %v452 = vpop.f32.mrb[0].mxu0
      %453 = vmatprep.mubr.f32.mxu0 0.0
      %454 = vmatmul.mubr.f32.gmra.mrb[0].mxu0 %v326
      %v455 = vpop.f32.mrb[0].mxu0
      %v456 = vadd.f32 %v298, %v455
      %v457 = vpop.f32.mrb[0].mxu0
      %458 = vmatprep.mubr.f32.mxu0 0.0
      %459 = vmatmul.mubr.f32.gmra.mrb[0].mxu0 %v329
      %v460 = vpop.f32.mrb[0].mxu0
      %v461 = vadd.f32 %v298, %v460
      %v462 = vpop.f32.mrb[0].mxu0
      %463 = vmatprep.mubr.f32.mxu0 0.0
      %464 = vmatmul.mubr.f32.gmra.mrb[0].mxu0 %v332
      %v465 = vpop.f32.mrb[0].mxu0
      %v466 = vadd.f32 %v298, %v465
      %v467 = vpop.f32.mrb[0].mxu0
      %468 = vmatprep.mubr.f32.mxu0 0.0
      %469 = vmatmul.mubr.f32.gmra.mrb[0].mxu0 %v335
      %v470 = vpop.f32.mrb[0].mxu0
      %v471 = vadd.f32 %v298, %v470
      %v472 = vpop.f32.mrb[0].mxu0
      %473 = vmatprep.mubr.f32.mxu0 0.0
      %474 = vmatmul.mubr.f32.gmra.mrb[0].mxu0 %v338
      %v475 = vpop.f32.mrb[0].mxu0
      %v476 = vadd.f32 %v298, %v475
      %v477 = vpop.f32.mrb[0].mxu0
      %478 = vmatprep.mubr.f32.mxu0 0.0
      %479 = vmatmul.mubr.f32.gmra.mrb[0].mxu0 %v341
      %v480 = vpop.f32.mrb[0].mxu0
      %v481 = vadd.f32 %v298, %v480
      %v482 = vpop.f32.mrb[0].mxu0
      %483 = vmatprep.mubr.f32.mxu0 0.0
      %484 = vmatmul.mubr.f32.gmra.mrb[0].mxu0 %v344
      %v485 = vpop.f32.mrb[0].mxu0
      %v486 = vadd.f32 %v298, %v485
      %v487 = vpop.f32.mrb[0].mxu0
      %488 = vmatprep.mubr.f32.mxu0 0.0
      %489 = vmatmul.mubr.f32.gmra.mrb[0].mxu0 %v347
      %v490 = vpop.f32.mrb[0].mxu0
      %v491 = vadd.f32 %v298, %v490
      %v492 = vpop.f32.mrb[0].mxu0
      %493 = vdwg.mxu0
      %vm494 = vcmask 277768
      %v495 = vsel %vm494, %v416, -inf
      %v496 = vsel %vm494, %v421, -inf
      %v497 = vsel %vm494, %v426, -inf
      %v498 = vsel %vm494, %v431, -inf
      %v499 = vsel %vm494, %v436, -inf
      %v500 = vmax.f32 %v495, %v499
      %v501 = vsel %vm494, %v441, -inf
      %v502 = vmax.f32 %v496, %v501
      %v503 = vsel %vm494, %v446, -inf
      %v504 = vmax.f32 %v497, %v503
      %v505 = vsel %vm494, %v451, -inf
      %v506 = vmax.f32 %v498, %v505
      %v507 = vsel %vm494, %v456, -inf
      %v508 = vmax.f32 %v500, %v507
      %v509 = vsel %vm494, %v461, -inf
      %v510 = vmax.f32 %v502, %v509
      %v511 = vsel %vm494, %v466, -inf
      %v512 = vmax.f32 %v504, %v511
      %v513 = vsel %vm494, %v471, -inf
      %v514 = vmax.f32 %v506, %v513
      %v515 = vsel %vm494, %v476, -inf
      %v516 = vmax.f32 %v508, %v515
      %v517 = vsel %vm494, %v481, -inf
      %v518 = vmax.f32 %v510, %v517
      %v519 = vsel %vm494, %v486, -inf
      %v520 = vmax.f32 %v512, %v519
      %v521 = vsel %vm494, %v491, -inf
      %v522 = vmax.f32 %v514, %v521
      %v523 = vmax.f32 %v516, %v518
      %v524 = vmax.f32 %v520, %v522
      %v525 = vmax.f32 %v523, %v524
      %526 = vmax.xlane.f32.xlu0 %v525
      %v527 = vpop.xlane.xlu0 %526
      %v528 = vrot.slane %v527, 4
      %v529 = vmax.f32 %v527, %v528
      %v530 = vrot.slane %v529, 2
      %v531 = vmax.f32 %v529, %v530
      %v532 = vrot.slane %v531, 1
      %v533 = vmax.f32 %v531, %v532
      %s534 = vtos %v533
      %v535 = vstv %s534
      %v536 = vsub.f32 %v416, %v535
      %v537 = vsub.f32 %v421, %v535
      %v538 = vsub.f32 %v426, %v535
      %v539 = vsub.f32 %v431, %v535
      %v540 = vsub.f32 %v436, %v535
      %v541 = vsub.f32 %v441, %v535
      %v542 = vsub.f32 %v446, %v535
      %v543 = vsub.f32 %v451, %v535
      %v544 = vsub.f32 %v456, %v535
      %v545 = vsub.f32 %v461, %v535
      %v546 = vsub.f32 %v466, %v535
      %v547 = vsub.f32 %v471, %v535
      %v548 = vsub.f32 %v476, %v535
      %v549 = vsub.f32 %v481, %v535
      %v550 = vsub.f32 %v486, %v535
      %v551 = vsub.f32 %v491, %v535
      %v552 = vmul.f32 %v536, 1.442695
      %v553 = vpow.pop %v552
      %v554 = vmul.f32 %v537, 1.442695
      %v555 = vpow.pop %v554
      %v556 = vmul.f32 %v538, 1.442695
      %v557 = vpow.pop %v556
      %v558 = vmul.f32 %v539, 1.442695
      %v559 = vpow.pop %v558
      %v560 = vmul.f32 %v540, 1.442695
      %v561 = vpow.pop %v560
      %v562 = vmul.f32 %v541, 1.442695
      %v563 = vpow.pop %v562
      %v564 = vmul.f32 %v542, 1.442695
      %v565 = vpow.pop %v564
      %v566 = vmul.f32 %v543, 1.442695
      %v567 = vpow.pop %v566
      %v568 = vmul.f32 %v544, 1.442695
      %v569 = vpow.pop %v568
      %v570 = vmul.f32 %v545, 1.442695
      %v571 = vpow.pop %v570
      %v572 = vmul.f32 %v546, 1.442695
      %v573 = vpow.pop %v572
      %v574 = vmul.f32 %v547, 1.442695
      %v575 = vpow.pop %v574
      %v576 = vmul.f32 %v548, 1.442695
      %v577 = vpow.pop %v576
      %v578 = vmul.f32 %v549, 1.442695
      %v579 = vpow.pop %v578
      %v580 = vmul.f32 %v550, 1.442695
      %v581 = vpow.pop %v580
      %v582 = vmul.f32 %v551, 1.442695
      %v583 = vpow.pop %v582
      %585 = vset.pattern.permute.xlu0 33
      %586 = vperm.xlu0 %585, %v553
      %v587 = vpop.permute.xlu0 %586
      %590 = vset.pattern.permute.xlu0 33
      %591 = vperm.xlu0 %590, %v555
      %v592 = vpop.permute.xlu0 %591
      %595 = vset.pattern.permute.xlu0 33
      %596 = vperm.xlu0 %595, %v557
      %v597 = vpop.permute.xlu0 %596
      %600 = vset.pattern.permute.xlu0 33
      %601 = vperm.xlu0 %600, %v559
      %v602 = vpop.permute.xlu0 %601
      %605 = vset.pattern.permute.xlu0 33
      %606 = vperm.xlu0 %605, %v561
      %v607 = vpop.permute.xlu0 %606
      %610 = vset.pattern.permute.xlu0 33
      %611 = vperm.xlu0 %610, %v563
      %v612 = vpop.permute.xlu0 %611
      %615 = vset.pattern.permute.xlu0 33
      %616 = vperm.xlu0 %615, %v565
      %v617 = vpop.permute.xlu0 %616
      %620 = vset.pattern.permute.xlu0 33
      %621 = vperm.xlu0 %620, %v567
      %v622 = vpop.permute.xlu0 %621
      %625 = vset.pattern.permute.xlu0 33
      %626 = vperm.xlu0 %625, %v569
      %v627 = vpop.permute.xlu0 %626
      %630 = vset.pattern.permute.xlu0 33
      %631 = vperm.xlu0 %630, %v571
      %v632 = vpop.permute.xlu0 %631
      %635 = vset.pattern.permute.xlu0 33
      %636 = vperm.xlu0 %635, %v573
      %v637 = vpop.permute.xlu0 %636
      %640 = vset.pattern.permute.xlu0 33
      %641 = vperm.xlu0 %640, %v575
      %v642 = vpop.permute.xlu0 %641
      %645 = vset.pattern.permute.xlu0 33
      %646 = vperm.xlu0 %645, %v577
      %v647 = vpop.permute.xlu0 %646
      %650 = vset.pattern.permute.xlu0 33
      %651 = vperm.xlu0 %650, %v579
      %v652 = vpop.permute.xlu0 %651
      %655 = vset.pattern.permute.xlu0 33
      %656 = vperm.xlu0 %655, %v581
      %v657 = vpop.permute.xlu0 %656
      %660 = vset.pattern.permute.xlu0 33
      %661 = vperm.xlu0 %660, %v583
      %v662 = vpop.permute.xlu0 %661
      %v664 = vmul.f32 %v587, %v416
      %v665 = vmul.f32 %v592, %v421
      %v666 = vmul.f32 %v597, %v426
      %v667 = vmul.f32 %v602, %v431
      %v668 = vmul.f32 %v607, %v436
      %v669 = vmul.f32 %v612, %v441
      %v670 = vmul.f32 %v617, %v446
      %v671 = vmul.f32 %v622, %v451
      %v672 = vmul.f32 %v627, %v456
      %v673 = vmul.f32 %v632, %v461
      %v674 = vmul.f32 %v637, %v466
      %v675 = vmul.f32 %v642, %v471
      %v676 = vmul.f32 %v647, %v476
      %v677 = vmul.f32 %v652, %v481
      %v678 = vmul.f32 %v657, %v486
      %v679 = vmul.f32 %v662, %v491
      %680 = vmatprep.subr.mxu0 0.0
      %681 = vmatpush1.msra.mxu0 %v664
      %682 = vmatprep.subr.mxu0 0.0
      %683 = vmatpush1.msra.mxu0 %v665
      %684 = vmatprep.subr.mxu0 0.0
      %685 = vmatpush1.msra.mxu0 %v666
      %686 = vmatprep.subr.mxu0 0.0
      %687 = vmatpush1.msra.mxu0 %v667
      %688 = vmatprep.subr.mxu0 0.0
      %689 = vmatpush1.msra.mxu0 %v668
      %690 = vmatprep.subr.mxu0 0.0
      %691 = vmatpush1.msra.mxu0 %v669
      %692 = vmatprep.subr.mxu0 0.0
      %693 = vmatpush1.msra.mxu0 %v670
      %694 = vmatprep.subr.mxu0 0.0
      %695 = vmatpush1.msra.mxu0 %v671
      %696 = vmatprep.subr.mxu0 0.0
      %697 = vmatpush1.msra.mxu0 %v672
      %698 = vmatprep.subr.mxu0 0.0
      %699 = vmatpush1.msra.mxu0 %v673
      %700 = vmatprep.subr.mxu0 0.0
      %701 = vmatpush1.msra.mxu0 %v674
      %702 = vmatprep.subr.mxu0 0.0
      %703 = vmatpush1.msra.mxu0 %v675
      %704 = vmatprep.subr.mxu0 0.0
      %705 = vmatpush1.msra.mxu0 %v676
      %706 = vmatprep.subr.mxu0 0.0
      %707 = vmatpush1.msra.mxu0 %v677
      %708 = vmatprep.subr.mxu0 0.0
      %709 = vmatpush1.msra.mxu0 %v678
      %710 = vmatprep.subr.mxu0 0.0
      %711 = vmatpush1.msra.mxu0 %v679
      %712 = vmatprep.subr.mxu0 0.0
      %713 = vmatpush1.msra.mxu0 0.0
      %714 = vmatprep.subr.mxu0 0.0
      %715 = vmatpush1.msra.mxu0 0.0
      %716 = vmatprep.subr.mxu0 0.0
      %717 = vmatpush1.msra.mxu0 0.0
      %718 = vmatprep.subr.mxu0 0.0
      %719 = vmatpush1.msra.mxu0 0.0
      %720 = vmatprep.subr.mxu0 0.0
      %721 = vmatpush1.msra.mxu0 0.0
      %722 = vmatprep.subr.mxu0 0.0
      %723 = vmatpush1.msra.mxu0 0.0
      %724 = vmatprep.subr.mxu0 0.0
      %725 = vmatpush1.msra.mxu0 0.0
      %726 = vmatprep.subr.mxu0 0.0
      %727 = vmatpush1.msra.mxu0 0.0
      %728 = vmatprep.subr.mxu0 0.0
      %729 = vmatpush1.msra.mxu0 0.0
      %730 = vmatprep.subr.mxu0 0.0
      %731 = vmatpush1.msra.mxu0 0.0
      %732 = vmatprep.subr.mxu0 0.0
      %733 = vmatpush1.msra.mxu0 0.0
      %734 = vmatprep.subr.mxu0 0.0
      %735 = vmatpush1.msra.mxu0 0.0
      %736 = vmatprep.subr.mxu0 0.0
      %737 = vmatpush1.msra.mxu0 0.0
      %738 = vmatprep.subr.mxu0 0.0
      %739 = vmatpush1.msra.mxu0 0.0
      %740 = vmatprep.subr.mxu0 0.0
      %741 = vmatpush1.msra.mxu0 0.0
      %742 = vmatprep.subr.mxu0 0.0
      %743 = vmatpush1.msra.mxu0 0.0
      %744 = vmatprep.mubr.f32.mxu0 0.0
      %745 = vmatmul.mubr.f32.gmra.mrb[0].mxu0 %v260
      %v746 = vpop.f32.mrb[0].mxu0
      %v747 = vadd.f32 0.0, %v746
      %v748 = vpop.f32.mrb[0].mxu0
      %749 = vmatprep.mubr.f32.mxu0 0.0
      %750 = vmatmul.mubr.f32.gmra.mrb[0].mxu0 %v261
      %v751 = vpop.f32.mrb[0].mxu0
      %v752 = vadd.f32 0.0, %v751
      %v753 = vpop.f32.mrb[0].mxu0
      %754 = vmatprep.mubr.f32.mxu0 0.0
      %755 = vmatmul.mubr.f32.gmra.mrb[0].mxu0 %v262
      %v756 = vpop.f32.mrb[0].mxu0
      %v757 = vadd.f32 0.0, %v756
      %v758 = vpop.f32.mrb[0].mxu0
      %759 = vmatprep.mubr.f32.mxu0 0.0
      %760 = vmatmul.mubr.f32.gmra.mrb[0].mxu0 %v263
      %v761 = vpop.f32.mrb[0].mxu0
      %v762 = vadd.f32 0.0, %v761
      %v763 = vpop.f32.mrb[0].mxu0
      %764 = vmatprep.mubr.f32.mxu0 0.0
      %765 = vmatmul.mubr.f32.gmra.mrb[0].mxu0 %v264
      %v766 = vpop.f32.mrb[0].mxu0
      %v767 = vadd.f32 0.0, %v766
      %v768 = vpop.f32.mrb[0].mxu0
      %769 = vmatprep.mubr.f32.mxu0 0.0
      %770 = vmatmul.mubr.f32.gmra.mrb[0].mxu0 %v265
      %v771 = vpop.f32.mrb[0].mxu0
      %v772 = vadd.f32 0.0, %v771
      %v773 = vpop.f32.mrb[0].mxu0
      %774 = vmatprep.mubr.f32.mxu0 0.0
      %775 = vmatmul.mubr.f32.gmra.mrb[0].mxu0 %v266
      %v776 = vpop.f32.mrb[0].mxu0
      %v777 = vadd.f32 0.0, %v776
      %v778 = vpop.f32.mrb[0].mxu0
      %779 = vmatprep.mubr.f32.mxu0 0.0
      %780 = vmatmul.mubr.f32.gmra.mrb[0].mxu0 %v267
      %v781 = vpop.f32.mrb[0].mxu0
      %v782 = vadd.f32 0.0, %v781
      %v783 = vpop.f32.mrb[0].mxu0
      %784 = vmatprep.mubr.f32.mxu0 0.0
      %785 = vmatmul.mubr.f32.gmra.mrb[0].mxu0 %v268
      %v786 = vpop.f32.mrb[0].mxu0
      %v787 = vadd.f32 0.0, %v786
      %v788 = vpop.f32.mrb[0].mxu0
      %789 = vmatprep.mubr.f32.mxu0 0.0
      %790 = vmatmul.mubr.f32.gmra.mrb[0].mxu0 %v269
      %v791 = vpop.f32.mrb[0].mxu0
      %v792 = vadd.f32 0.0, %v791
      %v793 = vpop.f32.mrb[0].mxu0
      %794 = vmatprep.mubr.f32.mxu0 0.0
      %795 = vmatmul.mubr.f32.gmra.mrb[0].mxu0 %v270
      %v796 = vpop.f32.mrb[0].mxu0
      %v797 = vadd.f32 0.0, %v796
      %v798 = vpop.f32.mrb[0].mxu0
      %799 = vmatprep.mubr.f32.mxu0 0.0
      %800 = vmatmul.mubr.f32.gmra.mrb[0].mxu0 %v271
      %v801 = vpop.f32.mrb[0].mxu0
      %v802 = vadd.f32 0.0, %v801
      %v803 = vpop.f32.mrb[0].mxu0
      %804 = vmatprep.mubr.f32.mxu0 0.0
      %805 = vmatmul.mubr.f32.gmra.mrb[0].mxu0 %v272
      %v806 = vpop.f32.mrb[0].mxu0
      %v807 = vadd.f32 0.0, %v806
      %v808 = vpop.f32.mrb[0].mxu0
      %809 = vmatprep.mubr.f32.mxu0 0.0
      %810 = vmatmul.mubr.f32.gmra.mrb[0].mxu0 %v273
      %v811 = vpop.f32.mrb[0].mxu0
      %v812 = vadd.f32 0.0, %v811
      %v813 = vpop.f32.mrb[0].mxu0
      %814 = vmatprep.mubr.f32.mxu0 0.0
      %815 = vmatmul.mubr.f32.gmra.mrb[0].mxu0 %v274
      %v816 = vpop.f32.mrb[0].mxu0
      %v817 = vadd.f32 0.0, %v816
      %v818 = vpop.f32.mrb[0].mxu0
      %819 = vmatprep.mubr.f32.mxu0 0.0
      %820 = vmatmul.mubr.f32.gmra.mrb[0].mxu0 %v275
      %v821 = vpop.f32.mrb[0].mxu0
      %v822 = vadd.f32 0.0, %v821
      %v823 = vpop.f32.mrb[0].mxu0
      %824 = vdwg.mxu0
      %826 = vset.pattern.permute.xlu0 32
      %827 = vperm.xlu0 %826, %v747
      %v828 = vpop.permute.xlu0 %827
      %831 = vset.pattern.permute.xlu0 32
      %832 = vperm.xlu0 %831, %v752
      %v833 = vpop.permute.xlu0 %832
      %836 = vset.pattern.permute.xlu0 32
      %837 = vperm.xlu0 %836, %v757
      %v838 = vpop.permute.xlu0 %837
      %841 = vset.pattern.permute.xlu0 32
      %842 = vperm.xlu0 %841, %v762
      %v843 = vpop.permute.xlu0 %842
      %846 = vset.pattern.permute.xlu0 32
      %847 = vperm.xlu0 %846, %v767
      %v848 = vpop.permute.xlu0 %847
      %851 = vset.pattern.permute.xlu0 32
      %852 = vperm.xlu0 %851, %v772
      %v853 = vpop.permute.xlu0 %852
      %856 = vset.pattern.permute.xlu0 32
      %857 = vperm.xlu0 %856, %v777
      %v858 = vpop.permute.xlu0 %857
      %861 = vset.pattern.permute.xlu0 32
      %862 = vperm.xlu0 %861, %v782
      %v863 = vpop.permute.xlu0 %862
      %866 = vset.pattern.permute.xlu0 32
      %867 = vperm.xlu0 %866, %v787
      %v868 = vpop.permute.xlu0 %867
      %871 = vset.pattern.permute.xlu0 32
      %872 = vperm.xlu0 %871, %v792
      %v873 = vpop.permute.xlu0 %872
      %876 = vset.pattern.permute.xlu0 32
      %877 = vperm.xlu0 %876, %v797
      %v878 = vpop.permute.xlu0 %877
      %881 = vset.pattern.permute.xlu0 32
      %882 = vperm.xlu0 %881, %v802
      %v883 = vpop.permute.xlu0 %882
      %886 = vset.pattern.permute.xlu0 32
      %887 = vperm.xlu0 %886, %v807
      %v888 = vpop.permute.xlu0 %887
      %891 = vset.pattern.permute.xlu0 32
      %892 = vperm.xlu0 %891, %v812
      %v893 = vpop.permute.xlu0 %892
      %896 = vset.pattern.permute.xlu0 32
      %897 = vperm.xlu0 %896, %v817
      %v898 = vpop.permute.xlu0 %897
      %901 = vset.pattern.permute.xlu0 32
      %902 = vperm.xlu0 %901, %v822
      %v903 = vpop.permute.xlu0 %902
      %v905 = vrcp.pop %v828
      %v906 = vmul.f32 %v747, %v905
      %v907 = vrcp.pop %v833
      %v908 = vmul.f32 %v752, %v907
      %v909 = vrcp.pop %v838
      %v910 = vmul.f32 %v757, %v909
      %v911 = vrcp.pop %v843
      %v912 = vmul.f32 %v762, %v911
      %v913 = vrcp.pop %v848
      %v914 = vmul.f32 %v767, %v913
      %v915 = vrcp.pop %v853
      %v916 = vmul.f32 %v772, %v915
      %v917 = vrcp.pop %v858
      %v918 = vmul.f32 %v777, %v917
      %v919 = vrcp.pop %v863
      %v920 = vmul.f32 %v782, %v919
      %v921 = vrcp.pop %v868
      %v922 = vmul.f32 %v787, %v921
      %v923 = vrcp.pop %v873
      %v924 = vmul.f32 %v792, %v923
      %v925 = vrcp.pop %v878
      %v926 = vmul.f32 %v797, %v925
      %v927 = vrcp.pop %v883
      %v928 = vmul.f32 %v802, %v927
      %v929 = vrcp.pop %v888
      %v930 = vmul.f32 %v807, %v929
      %v931 = vrcp.pop %v893
      %v932 = vmul.f32 %v812, %v931
      %v933 = vrcp.pop %v898
      %v934 = vmul.f32 %v817, %v933
      %v935 = vrcp.pop %v903
      %v936 = vmul.f32 %v822, %v935
      %v938 = vsel %vm300, %v906, 0
      %v941 = vsel %vm300, %v908, 0
      %v944 = vsel %vm300, %v910, 0
      %v947 = vsel %vm300, %v912, 0
      %v950 = vsel %vm300, %v914, 0
      %v953 = vsel %vm300, %v916, 0
      %v956 = vsel %vm300, %v918, 0
      %v959 = vsel %vm300, %v920, 0
      %v962 = vsel %vm300, %v922, 0
      %v965 = vsel %vm300, %v924, 0
      %v968 = vsel %vm300, %v926, 0
      %v971 = vsel %vm300, %v928, 0
      %v974 = vsel %vm300, %v930, 0
      %v977 = vsel %vm300, %v932, 0
      %v980 = vsel %vm300, %v934, 0
      %v983 = vsel %vm300, %v936, 0
      %985 = vmatprep.subr.mxu0 0.0
      %986 = vmatpush1.msra.mxu0 %v255
      %987 = vmatprep.subr.mxu0 0.0
      %988 = vmatpush1.msra.mxu0 %v256
      %989 = vmatprep.subr.mxu0 0.0
      %990 = vmatpush1.msra.mxu0 %v257
      %991 = vmatprep.subr.mxu0 0.0
      %992 = vmatpush1.msra.mxu0 %v258
      %993 = vmatprep.subr.mxu0 0.0
      %994 = vmatpush1.msra.mxu0 0.0
      %995 = vmatprep.subr.mxu0 0.0
      %996 = vmatpush1.msra.mxu0 0.0
      %997 = vmatprep.subr.mxu0 0.0
      %998 = vmatpush1.msra.mxu0 0.0
      %999 = vmatprep.subr.mxu0 0.0
      %1000 = vmatpush1.msra.mxu0 0.0
      %1001 = vmatprep.subr.mxu0 0.0
      %1002 = vmatpush1.msra.mxu0 0.0
      %1003 = vmatprep.subr.mxu0 0.0
      %1004 = vmatpush1.msra.mxu0 0.0
      %1005 = vmatprep.subr.mxu0 0.0
      %1006 = vmatpush1.msra.mxu0 0.0
      %1007 = vmatprep.subr.mxu0 0.0
      %1008 = vmatpush1.msra.mxu0 0.0
      %1009 = vmatprep.subr.mxu0 0.0
      %1010 = vmatpush1.msra.mxu0 0.0
      %1011 = vmatprep.subr.mxu0 0.0
      %1012 = vmatpush1.msra.mxu0 0.0
      %1013 = vmatprep.subr.mxu0 0.0
      %1014 = vmatpush1.msra.mxu0 0.0
      %1015 = vmatprep.subr.mxu0 0.0
      %1016 = vmatpush1.msra.mxu0 0.0
      %1017 = vmatprep.subr.mxu0 0.0
      %1018 = vmatpush1.msra.mxu0 0.0
      %1019 = vmatprep.subr.mxu0 0.0
      %1020 = vmatpush1.msra.mxu0 0.0
      %1021 = vmatprep.subr.mxu0 0.0
      %1022 = vmatpush1.msra.mxu0 0.0
      %1023 = vmatprep.subr.mxu0 0.0
      %1024 = vmatpush1.msra.mxu0 0.0
      %1025 = vmatprep.subr.mxu0 0.0
      %1026 = vmatpush1.msra.mxu0 0.0
      %1027 = vmatprep.subr.mxu0 0.0
      %1028 = vmatpush1.msra.mxu0 0.0
      %1029 = vmatprep.subr.mxu0 0.0
      %1030 = vmatpush1.msra.mxu0 0.0
      %1031 = vmatprep.subr.mxu0 0.0
      %1032 = vmatpush1.msra.mxu0 0.0
      %1033 = vmatprep.subr.mxu0 0.0
      %1034 = vmatpush1.msra.mxu0 0.0
      %1035 = vmatprep.subr.mxu0 0.0
      %1036 = vmatpush1.msra.mxu0 0.0
      %1037 = vmatprep.subr.mxu0 0.0
      %1038 = vmatpush1.msra.mxu0 0.0
      %1039 = vmatprep.subr.mxu0 0.0
      %1040 = vmatpush1.msra.mxu0 0.0
      %1041 = vmatprep.subr.mxu0 0.0
      %1042 = vmatpush1.msra.mxu0 0.0
      %1043 = vmatprep.subr.mxu0 0.0
      %1044 = vmatpush1.msra.mxu0 0.0
      %1045 = vmatprep.subr.mxu0 0.0
      %1046 = vmatpush1.msra.mxu0 0.0
      %1047 = vmatprep.subr.mxu0 0.0
      %1048 = vmatpush1.msra.mxu0 0.0
      %1049 = vmatprep.mubr.f32.mxu0 0.0
      %1050 = vmatmul.mubr.f32.gmra.mrb[0].mxu0 %v938
      %v1051 = vpop.f32.mrb[0].mxu0
      %v1052 = vadd.f32 %v298, %v1051
      %v1053 = vpop.f32.mrb[0].mxu0
      %1054 = vmatprep.mubr.f32.mxu0 0.0
      %1055 = vmatmul.mubr.f32.gmra.mrb[0].mxu0 %v941
      %v1056 = vpop.f32.mrb[0].mxu0
      %v1057 = vadd.f32 %v298, %v1056
      %v1058 = vpop.f32.mrb[0].mxu0
      %1059 = vmatprep.mubr.f32.mxu0 0.0
      %1060 = vmatmul.mubr.f32.gmra.mrb[0].mxu0 %v944
      %v1061 = vpop.f32.mrb[0].mxu0
      %v1062 = vadd.f32 %v298, %v1061
      %v1063 = vpop.f32.mrb[0].mxu0
      %1064 = vmatprep.mubr.f32.mxu0 0.0
      %1065 = vmatmul.mubr.f32.gmra.mrb[0].mxu0 %v947
      %v1066 = vpop.f32.mrb[0].mxu0
      %v1067 = vadd.f32 %v298, %v1066
      %v1068 = vpop.f32.mrb[0].mxu0
      %1069 = vmatprep.mubr.f32.mxu0 0.0
      %1070 = vmatmul.mubr.f32.gmra.mrb[0].mxu0 %v950
      %v1071 = vpop.f32.mrb[0].mxu0
      %v1072 = vadd.f32 %v298, %v1071
      %v1073 = vpop.f32.mrb[0].mxu0
      %1074 = vmatprep.mubr.f32.mxu0 0.0
      %1075 = vmatmul.mubr.f32.gmra.mrb[0].mxu0 %v953
      %v1076 = vpop.f32.mrb[0].mxu0
      %v1077 = vadd.f32 %v298, %v1076
      %v1078 = vpop.f32.mrb[0].mxu0
      %1079 = vmatprep.mubr.f32.mxu0 0.0
      %1080 = vmatmul.mubr.f32.gmra.mrb[0].mxu0 %v956
      %v1081 = vpop.f32.mrb[0].mxu0
      %v1082 = vadd.f32 %v298, %v1081
      %v1083 = vpop.f32.mrb[0].mxu0
      %1084 = vmatprep.mubr.f32.mxu0 0.0
      %1085 = vmatmul.mubr.f32.gmra.mrb[0].mxu0 %v959
      %v1086 = vpop.f32.mrb[0].mxu0
      %v1087 = vadd.f32 %v298, %v1086
      %v1088 = vpop.f32.mrb[0].mxu0
      %1089 = vmatprep.mubr.f32.mxu0 0.0
      %1090 = vmatmul.mubr.f32.gmra.mrb[0].mxu0 %v962
      %v1091 = vpop.f32.mrb[0].mxu0
      %v1092 = vadd.f32 %v298, %v1091
      %v1093 = vpop.f32.mrb[0].mxu0
      %1094 = vmatprep.mubr.f32.mxu0 0.0
      %1095 = vmatmul.mubr.f32.gmra.mrb[0].mxu0 %v965
      %v1096 = vpop.f32.mrb[0].mxu0
      %v1097 = vadd.f32 %v298, %v1096
      %v1098 = vpop.f32.mrb[0].mxu0
      %1099 = vmatprep.mubr.f32.mxu0 0.0
      %1100 = vmatmul.mubr.f32.gmra.mrb[0].mxu0 %v968
      %v1101 = vpop.f32.mrb[0].mxu0
      %v1102 = vadd.f32 %v298, %v1101
      %v1103 = vpop.f32.mrb[0].mxu0
      %1104 = vmatprep.mubr.f32.mxu0 0.0
      %1105 = vmatmul.mubr.f32.gmra.mrb[0].mxu0 %v971
      %v1106 = vpop.f32.mrb[0].mxu0
      %v1107 = vadd.f32 %v298, %v1106
      %v1108 = vpop.f32.mrb[0].mxu0
      %1109 = vmatprep.mubr.f32.mxu0 0.0
      %1110 = vmatmul.mubr.f32.gmra.mrb[0].mxu0 %v974
      %v1111 = vpop.f32.mrb[0].mxu0
      %v1112 = vadd.f32 %v298, %v1111
      %v1113 = vpop.f32.mrb[0].mxu0
      %1114 = vmatprep.mubr.f32.mxu0 0.0
      %1115 = vmatmul.mubr.f32.gmra.mrb[0].mxu0 %v977
      %v1116 = vpop.f32.mrb[0].mxu0
      %v1117 = vadd.f32 %v298, %v1116
      %v1118 = vpop.f32.mrb[0].mxu0
      %1119 = vmatprep.mubr.f32.mxu0 0.0
      %1120 = vmatmul.mubr.f32.gmra.mrb[0].mxu0 %v980
      %v1121 = vpop.f32.mrb[0].mxu0
      %v1122 = vadd.f32 %v298, %v1121
      %v1123 = vpop.f32.mrb[0].mxu0
      %1124 = vmatprep.mubr.f32.mxu0 0.0
      %1125 = vmatmul.mubr.f32.gmra.mrb[0].mxu0 %v983
      %v1126 = vpop.f32.mrb[0].mxu0
      %v1127 = vadd.f32 %v298, %v1126
      %v1128 = vpop.f32.mrb[0].mxu0
      %1129 = vdwg.mxu0
      %vm1130 = vcmask 285968
      %v1131 = vsel %vm1130, %v1052, -inf
      %v1132 = vsel %vm1130, %v1057, -inf
      %v1133 = vsel %vm1130, %v1062, -inf
      %v1134 = vsel %vm1130, %v1067, -inf
      %v1135 = vsel %vm1130, %v1072, -inf
      %v1136 = vmax.f32 %v1131, %v1135
      %v1137 = vsel %vm1130, %v1077, -inf
      %v1138 = vmax.f32 %v1132, %v1137
      %v1139 = vsel %vm1130, %v1082, -inf
      %v1140 = vmax.f32 %v1133, %v1139
      %v1141 = vsel %vm1130, %v1087, -inf
      %v1142 = vmax.f32 %v1134, %v1141
      %v1143 = vsel %vm1130, %v1092, -inf
      %v1144 = vmax.f32 %v1136, %v1143
      %v1145 = vsel %vm1130, %v1097, -inf
      %v1146 = vmax.f32 %v1138, %v1145
      %v1147 = vsel %vm1130, %v1102, -inf
      %v1148 = vmax.f32 %v1140, %v1147
      %v1149 = vsel %vm1130, %v1107, -inf
      %v1150 = vmax.f32 %v1142, %v1149
      %v1151 = vsel %vm1130, %v1112, -inf
      %v1152 = vmax.f32 %v1144, %v1151
      %v1153 = vsel %vm1130, %v1117, -inf
      %v1154 = vmax.f32 %v1146, %v1153
      %v1155 = vsel %vm1130, %v1122, -inf
      %v1156 = vmax.f32 %v1148, %v1155
      %v1157 = vsel %vm1130, %v1127, -inf
      %v1158 = vmax.f32 %v1150, %v1157
      %v1159 = vmax.f32 %v1152, %v1154
      %v1160 = vmax.f32 %v1156, %v1158
      %v1161 = vmax.f32 %v1159, %v1160
      %1162 = vmax.xlane.f32.xlu0 %v1161
      %v1163 = vpop.xlane.xlu0 %1162
      %v1164 = vrot.slane %v1163, 4
      %v1165 = vmax.f32 %v1163, %v1164
      %v1166 = vrot.slane %v1165, 2
      %v1167 = vmax.f32 %v1165, %v1166
      %v1168 = vrot.slane %v1167, 1
      %v1169 = vmax.f32 %v1167, %v1168
      %s1170 = vtos %v1169
      %v1171 = vstv %s1170
      %v1172 = vsub.f32 %v1052, %v1171
      %v1173 = vsub.f32 %v1057, %v1171
      %v1174 = vsub.f32 %v1062, %v1171
      %v1175 = vsub.f32 %v1067, %v1171
      %v1176 = vsub.f32 %v1072, %v1171
      %v1177 = vsub.f32 %v1077, %v1171
      %v1178 = vsub.f32 %v1082, %v1171
      %v1179 = vsub.f32 %v1087, %v1171
      %v1180 = vsub.f32 %v1092, %v1171
      %v1181 = vsub.f32 %v1097, %v1171
      %v1182 = vsub.f32 %v1102, %v1171
      %v1183 = vsub.f32 %v1107, %v1171
      %v1184 = vsub.f32 %v1112, %v1171
      %v1185 = vsub.f32 %v1117, %v1171
      %v1186 = vsub.f32 %v1122, %v1171
      %v1187 = vsub.f32 %v1127, %v1171
      %v1188 = vmul.f32 %v1172, 1.442695
      %v1189 = vpow.pop %v1188
      %v1190 = vmul.f32 %v1173, 1.442695
      %v1191 = vpow.pop %v1190
      %v1192 = vmul.f32 %v1174, 1.442695
      %v1193 = vpow.pop %v1192
      %v1194 = vmul.f32 %v1175, 1.442695
      %v1195 = vpow.pop %v1194
      %v1196 = vmul.f32 %v1176, 1.442695
      %v1197 = vpow.pop %v1196
      %v1198 = vmul.f32 %v1177, 1.442695
      %v1199 = vpow.pop %v1198
      %v1200 = vmul.f32 %v1178, 1.442695
      %v1201 = vpow.pop %v1200
      %v1202 = vmul.f32 %v1179, 1.442695
      %v1203 = vpow.pop %v1202
      %v1204 = vmul.f32 %v1180, 1.442695
      %v1205 = vpow.pop %v1204
      %v1206 = vmul.f32 %v1181, 1.442695
      %v1207 = vpow.pop %v1206
      %v1208 = vmul.f32 %v1182, 1.442695
      %v1209 = vpow.pop %v1208
      %v1210 = vmul.f32 %v1183, 1.442695
      %v1211 = vpow.pop %v1210
      %v1212 = vmul.f32 %v1184, 1.442695
      %v1213 = vpow.pop %v1212
      %v1214 = vmul.f32 %v1185, 1.442695
      %v1215 = vpow.pop %v1214
      %v1216 = vmul.f32 %v1186, 1.442695
      %v1217 = vpow.pop %v1216
      %v1218 = vmul.f32 %v1187, 1.442695
      %v1219 = vpow.pop %v1218
      %1221 = vset.pattern.permute.xlu0 34
      %1222 = vperm.xlu0 %1221, %v1189
      %v1223 = vpop.permute.xlu0 %1222
      %1226 = vset.pattern.permute.xlu0 34
      %1227 = vperm.xlu0 %1226, %v1191
      %v1228 = vpop.permute.xlu0 %1227
      %1231 = vset.pattern.permute.xlu0 34
      %1232 = vperm.xlu0 %1231, %v1193
      %v1233 = vpop.permute.xlu0 %1232
      %1236 = vset.pattern.permute.xlu0 34
      %1237 = vperm.xlu0 %1236, %v1195
      %v1238 = vpop.permute.xlu0 %1237
      %1241 = vset.pattern.permute.xlu0 34
      %1242 = vperm.xlu0 %1241, %v1197
      %v1243 = vpop.permute.xlu0 %1242
      %1246 = vset.pattern.permute.xlu0 34
      %1247 = vperm.xlu0 %1246, %v1199
      %v1248 = vpop.permute.xlu0 %1247
      %1251 = vset.pattern.permute.xlu0 34
      %1252 = vperm.xlu0 %1251, %v1201
      %v1253 = vpop.permute.xlu0 %1252
      %1256 = vset.pattern.permute.xlu0 34
      %1257 = vperm.xlu0 %1256, %v1203
      %v1258 = vpop.permute.xlu0 %1257
      %1261 = vset.pattern.permute.xlu0 34
      %1262 = vperm.xlu0 %1261, %v1205
      %v1263 = vpop.permute.xlu0 %1262
      %1266 = vset.pattern.permute.xlu0 34
      %1267 = vperm.xlu0 %1266, %v1207
      %v1268 = vpop.permute.xlu0 %1267
      %1271 = vset.pattern.permute.xlu0 34
      %1272 = vperm.xlu0 %1271, %v1209
      %v1273 = vpop.permute.xlu0 %1272
      %1276 = vset.pattern.permute.xlu0 34
      %1277 = vperm.xlu0 %1276, %v1211
      %v1278 = vpop.permute.xlu0 %1277
      %1281 = vset.pattern.permute.xlu0 34
      %1282 = vperm.xlu0 %1281, %v1213
      %v1283 = vpop.permute.xlu0 %1282
      %1286 = vset.pattern.permute.xlu0 34
      %1287 = vperm.xlu0 %1286, %v1215
      %v1288 = vpop.permute.xlu0 %1287
      %1291 = vset.pattern.permute.xlu0 34
      %1292 = vperm.xlu0 %1291, %v1217
      %v1293 = vpop.permute.xlu0 %1292
      %1296 = vset.pattern.permute.xlu0 34
      %1297 = vperm.xlu0 %1296, %v1219
      %v1298 = vpop.permute.xlu0 %1297
      %v1300 = vmul.f32 %v1223, %v1052
      %v1301 = vmul.f32 %v1228, %v1057
      %v1302 = vmul.f32 %v1233, %v1062
      %v1303 = vmul.f32 %v1238, %v1067
      %v1304 = vmul.f32 %v1243, %v1072
      %v1305 = vmul.f32 %v1248, %v1077
      %v1306 = vmul.f32 %v1253, %v1082
      %v1307 = vmul.f32 %v1258, %v1087
      %v1308 = vmul.f32 %v1263, %v1092
      %v1309 = vmul.f32 %v1268, %v1097
      %v1310 = vmul.f32 %v1273, %v1102
      %v1311 = vmul.f32 %v1278, %v1107
      %v1312 = vmul.f32 %v1283, %v1112
      %v1313 = vmul.f32 %v1288, %v1117
      %v1314 = vmul.f32 %v1293, %v1122
      %v1315 = vmul.f32 %v1298, %v1127
      %1316 = vmatprep.subr.mxu0 0.0
      %1317 = vmatpush1.msra.mxu0 %v1300
      %1318 = vmatprep.subr.mxu0 0.0
      %1319 = vmatpush1.msra.mxu0 %v1301
      %1320 = vmatprep.subr.mxu0 0.0
      %1321 = vmatpush1.msra.mxu0 %v1302
      %1322 = vmatprep.subr.mxu0 0.0
      %1323 = vmatpush1.msra.mxu0 %v1303
      %1324 = vmatprep.subr.mxu0 0.0
      %1325 = vmatpush1.msra.mxu0 %v1304
      %1326 = vmatprep.subr.mxu0 0.0
      %1327 = vmatpush1.msra.mxu0 %v1305
      %1328 = vmatprep.subr.mxu0 0.0
      %1329 = vmatpush1.msra.mxu0 %v1306
      %1330 = vmatprep.subr.mxu0 0.0
      %1331 = vmatpush1.msra.mxu0 %v1307
      %1332 = vmatprep.subr.mxu0 0.0
      %1333 = vmatpush1.msra.mxu0 %v1308
      %1334 = vmatprep.subr.mxu0 0.0
      %1335 = vmatpush1.msra.mxu0 %v1309
      %1336 = vmatprep.subr.mxu0 0.0
      %1337 = vmatpush1.msra.mxu0 %v1310
      %1338 = vmatprep.subr.mxu0 0.0
      %1339 = vmatpush1.msra.mxu0 %v1311
      %1340 = vmatprep.subr.mxu0 0.0
      %1341 = vmatpush1.msra.mxu0 %v1312
      %1342 = vmatprep.subr.mxu0 0.0
      %1343 = vmatpush1.msra.mxu0 %v1313
      %1344 = vmatprep.subr.mxu0 0.0
      %1345 = vmatpush1.msra.mxu0 %v1314
      %1346 = vmatprep.subr.mxu0 0.0
      %1347 = vmatpush1.msra.mxu0 %v1315
      %1348 = vmatprep.subr.mxu0 0.0
      %1349 = vmatpush1.msra.mxu0 0.0
      %1350 = vmatprep.subr.mxu0 0.0
      %1351 = vmatpush1.msra.mxu0 0.0
      %1352 = vmatprep.subr.mxu0 0.0
      %1353 = vmatpush1.msra.mxu0 0.0
      %1354 = vmatprep.subr.mxu0 0.0
      %1355 = vmatpush1.msra.mxu0 0.0
      %1356 = vmatprep.subr.mxu0 0.0
      %1357 = vmatpush1.msra.mxu0 0.0
      %1358 = vmatprep.subr.mxu0 0.0
      %1359 = vmatpush1.msra.mxu0 0.0
      %1360 = vmatprep.subr.mxu0 0.0
      %1361 = vmatpush1.msra.mxu0 0.0
      %1362 = vmatprep.subr.mxu0 0.0
      %1363 = vmatpush1.msra.mxu0 0.0
      %1364 = vmatprep.subr.mxu0 0.0
      %1365 = vmatpush1.msra.mxu0 0.0
      %1366 = vmatprep.subr.mxu0 0.0
      %1367 = vmatpush1.msra.mxu0 0.0
      %1368 = vmatprep.subr.mxu0 0.0
      %1369 = vmatpush1.msra.mxu0 0.0
      %1370 = vmatprep.subr.mxu0 0.0
      %1371 = vmatpush1.msra.mxu0 0.0
      %1372 = vmatprep.subr.mxu0 0.0
      %1373 = vmatpush1.msra.mxu0 0.0
      %1374 = vmatprep.subr.mxu0 0.0
      %1375 = vmatpush1.msra.mxu0 0.0
      %1376 = vmatprep.subr.mxu0 0.0
      %1377 = vmatpush1.msra.mxu0 0.0
      %1378 = vmatprep.subr.mxu0 0.0
      %1379 = vmatpush1.msra.mxu0 0.0
      %1380 = vmatprep.mubr.f32.mxu0 0.0
      %1381 = vmatmul.mubr.f32.gmra.mrb[0].mxu0 %v260
      %v1382 = vpop.f32.mrb[0].mxu0
      %v1383 = vadd.f32 0.0, %v1382
      %v1384 = vpop.f32.mrb[0].mxu0
      %1385 = vmatprep.mubr.f32.mxu0 0.0
      %1386 = vmatmul.mubr.f32.gmra.mrb[0].mxu0 %v261
      %v1387 = vpop.f32.mrb[0].mxu0
      %v1388 = vadd.f32 0.0, %v1387
      %v1389 = vpop.f32.mrb[0].mxu0
      %1390 = vmatprep.mubr.f32.mxu0 0.0
      %1391 = vmatmul.mubr.f32.gmra.mrb[0].mxu0 %v262
      %v1392 = vpop.f32.mrb[0].mxu0
      %v1393 = vadd.f32 0.0, %v1392
      %v1394 = vpop.f32.mrb[0].mxu0
      %1395 = vmatprep.mubr.f32.mxu0 0.0
      %1396 = vmatmul.mubr.f32.gmra.mrb[0].mxu0 %v263
      %v1397 = vpop.f32.mrb[0].mxu0
      %v1398 = vadd.f32 0.0, %v1397
      %v1399 = vpop.f32.mrb[0].mxu0
      %1400 = vmatprep.mubr.f32.mxu0 0.0
      %1401 = vmatmul.mubr.f32.gmra.mrb[0].mxu0 %v264
      %v1402 = vpop.f32.mrb[0].mxu0
      %v1403 = vadd.f32 0.0, %v1402
      %v1404 = vpop.f32.mrb[0].mxu0
      %1405 = vmatprep.mubr.f32.mxu0 0.0
      %1406 = vmatmul.mubr.f32.gmra.mrb[0].mxu0 %v265
      %v1407 = vpop.f32.mrb[0].mxu0
      %v1408 = vadd.f32 0.0, %v1407
      %v1409 = vpop.f32.mrb[0].mxu0
      %1410 = vmatprep.mubr.f32.mxu0 0.0
      %1411 = vmatmul.mubr.f32.gmra.mrb[0].mxu0 %v266
      %v1412 = vpop.f32.mrb[0].mxu0
      %v1413 = vadd.f32 0.0, %v1412
      %v1414 = vpop.f32.mrb[0].mxu0
      %1415 = vmatprep.mubr.f32.mxu0 0.0
      %1416 = vmatmul.mubr.f32.gmra.mrb[0].mxu0 %v267
      %v1417 = vpop.f32.mrb[0].mxu0
      %v1418 = vadd.f32 0.0, %v1417
      %v1419 = vpop.f32.mrb[0].mxu0
      %1420 = vmatprep.mubr.f32.mxu0 0.0
      %1421 = vmatmul.mubr.f32.gmra.mrb[0].mxu0 %v268
      %v1422 = vpop.f32.mrb[0].mxu0
      %v1423 = vadd.f32 0.0, %v1422
      %v1424 = vpop.f32.mrb[0].mxu0
      %1425 = vmatprep.mubr.f32.mxu0 0.0
      %1426 = vmatmul.mubr.f32.gmra.mrb[0].mxu0 %v269
      %v1427 = vpop.f32.mrb[0].mxu0
      %v1428 = vadd.f32 0.0, %v1427
      %v1429 = vpop.f32.mrb[0].mxu0
      %1430 = vmatprep.mubr.f32.mxu0 0.0
      %1431 = vmatmul.mubr.f32.gmra.mrb[0].mxu0 %v270
      %v1432 = vpop.f32.mrb[0].mxu0
      %v1433 = vadd.f32 0.0, %v1432
      %v1434 = vpop.f32.mrb[0].mxu0
      %1435 = vmatprep.mubr.f32.mxu0 0.0
      %1436 = vmatmul.mubr.f32.gmra.mrb[0].mxu0 %v271
      %v1437 = vpop.f32.mrb[0].mxu0
      %v1438 = vadd.f32 0.0, %v1437
      %v1439 = vpop.f32.mrb[0].mxu0
      %1440 = vmatprep.mubr.f32.mxu0 0.0
      %1441 = vmatmul.mubr.f32.gmra.mrb[0].mxu0 %v272
      %v1442 = vpop.f32.mrb[0].mxu0
      %v1443 = vadd.f32 0.0, %v1442
      %v1444 = vpop.f32.mrb[0].mxu0
      %1445 = vmatprep.mubr.f32.mxu0 0.0
      %1446 = vmatmul.mubr.f32.gmra.mrb[0].mxu0 %v273
      %v1447 = vpop.f32.mrb[0].mxu0
      %v1448 = vadd.f32 0.0, %v1447
      %v1449 = vpop.f32.mrb[0].mxu0
      %1450 = vmatprep.mubr.f32.mxu0 0.0
      %1451 = vmatmul.mubr.f32.gmra.mrb[0].mxu0 %v274
      %v1452 = vpop.f32.mrb[0].mxu0
      %v1453 = vadd.f32 0.0, %v1452
      %v1454 = vpop.f32.mrb[0].mxu0
      %1455 = vmatprep.mubr.f32.mxu0 0.0
      %1456 = vmatmul.mubr.f32.gmra.mrb[0].mxu0 %v275
      %v1457 = vpop.f32.mrb[0].mxu0
      %v1458 = vadd.f32 0.0, %v1457
      %v1459 = vpop.f32.mrb[0].mxu0
      %1460 = vdwg.mxu0
      %1462 = vset.pattern.permute.xlu0 32
      %1463 = vperm.xlu0 %1462, %v1383
      %v1464 = vpop.permute.xlu0 %1463
      %1467 = vset.pattern.permute.xlu0 32
      %1468 = vperm.xlu0 %1467, %v1388
      %v1469 = vpop.permute.xlu0 %1468
      %1472 = vset.pattern.permute.xlu0 32
      %1473 = vperm.xlu0 %1472, %v1393
      %v1474 = vpop.permute.xlu0 %1473
      %1477 = vset.pattern.permute.xlu0 32
      %1478 = vperm.xlu0 %1477, %v1398
      %v1479 = vpop.permute.xlu0 %1478
      %1482 = vset.pattern.permute.xlu0 32
      %1483 = vperm.xlu0 %1482, %v1403
      %v1484 = vpop.permute.xlu0 %1483
      %1487 = vset.pattern.permute.xlu0 32
      %1488 = vperm.xlu0 %1487, %v1408
      %v1489 = vpop.permute.xlu0 %1488
      %1492 = vset.pattern.permute.xlu0 32
      %1493 = vperm.xlu0 %1492, %v1413
      %v1494 = vpop.permute.xlu0 %1493
      %1497 = vset.pattern.permute.xlu0 32
      %1498 = vperm.xlu0 %1497, %v1418
      %v1499 = vpop.permute.xlu0 %1498
      %1502 = vset.pattern.permute.xlu0 32
      %1503 = vperm.xlu0 %1502, %v1423
      %v1504 = vpop.permute.xlu0 %1503
      %1507 = vset.pattern.permute.xlu0 32
      %1508 = vperm.xlu0 %1507, %v1428
      %v1509 = vpop.permute.xlu0 %1508
      %1512 = vset.pattern.permute.xlu0 32
      %1513 = vperm.xlu0 %1512, %v1433
      %v1514 = vpop.permute.xlu0 %1513
      %1517 = vset.pattern.permute.xlu0 32
      %1518 = vperm.xlu0 %1517, %v1438
      %v1519 = vpop.permute.xlu0 %1518
      %1522 = vset.pattern.permute.xlu0 32
      %1523 = vperm.xlu0 %1522, %v1443
      %v1524 = vpop.permute.xlu0 %1523
      %1527 = vset.pattern.permute.xlu0 32
      %1528 = vperm.xlu0 %1527, %v1448
      %v1529 = vpop.permute.xlu0 %1528
      %1532 = vset.pattern.permute.xlu0 32
      %1533 = vperm.xlu0 %1532, %v1453
      %v1534 = vpop.permute.xlu0 %1533
      %1537 = vset.pattern.permute.xlu0 32
      %1538 = vperm.xlu0 %1537, %v1458
      %v1539 = vpop.permute.xlu0 %1538
      %v1541 = vrcp.pop %v1464
      %v1542 = vmul.f32 %v1383, %v1541
      %v1543 = vrcp.pop %v1469
      %v1544 = vmul.f32 %v1388, %v1543
      %v1545 = vrcp.pop %v1474
      %v1546 = vmul.f32 %v1393, %v1545
      %v1547 = vrcp.pop %v1479
      %v1548 = vmul.f32 %v1398, %v1547
      %v1549 = vrcp.pop %v1484
      %v1550 = vmul.f32 %v1403, %v1549
      %v1551 = vrcp.pop %v1489
      %v1552 = vmul.f32 %v1408, %v1551
      %v1553 = vrcp.pop %v1494
      %v1554 = vmul.f32 %v1413, %v1553
      %v1555 = vrcp.pop %v1499
      %v1556 = vmul.f32 %v1418, %v1555
      %v1557 = vrcp.pop %v1504
      %v1558 = vmul.f32 %v1423, %v1557
      %v1559 = vrcp.pop %v1509
      %v1560 = vmul.f32 %v1428, %v1559
      %v1561 = vrcp.pop %v1514
      %v1562 = vmul.f32 %v1433, %v1561
      %v1563 = vrcp.pop %v1519
      %v1564 = vmul.f32 %v1438, %v1563
      %v1565 = vrcp.pop %v1524
      %v1566 = vmul.f32 %v1443, %v1565
      %v1567 = vrcp.pop %v1529
      %v1568 = vmul.f32 %v1448, %v1567
      %v1569 = vrcp.pop %v1534
      %v1570 = vmul.f32 %v1453, %v1569
      %v1571 = vrcp.pop %v1539
      %v1572 = vmul.f32 %v1458, %v1571
      %v1574 = vsel %vm300, %v1542, 0
      %v1577 = vsel %vm300, %v1544, 0
      %v1580 = vsel %vm300, %v1546, 0
      %v1583 = vsel %vm300, %v1548, 0
      %v1586 = vsel %vm300, %v1550, 0
      %v1589 = vsel %vm300, %v1552, 0
      %v1592 = vsel %vm300, %v1554, 0
      %v1595 = vsel %vm300, %v1556, 0
      %v1598 = vsel %vm300, %v1558, 0
      %v1601 = vsel %vm300, %v1560, 0
      %v1604 = vsel %vm300, %v1562, 0
      %v1607 = vsel %vm300, %v1564, 0
      %v1610 = vsel %vm300, %v1566, 0
      %v1613 = vsel %vm300, %v1568, 0
      %v1616 = vsel %vm300, %v1570, 0
      %v1619 = vsel %vm300, %v1572, 0
      %1621 = vmatprep.subr.mxu0 0.0
      %1622 = vmatpush1.msra.mxu0 %v255
      %1623 = vmatprep.subr.mxu0 0.0
      %1624 = vmatpush1.msra.mxu0 %v256
      %1625 = vmatprep.subr.mxu0 0.0
      %1626 = vmatpush1.msra.mxu0 %v257
      %1627 = vmatprep.subr.mxu0 0.0
      %1628 = vmatpush1.msra.mxu0 %v258
      %1629 = vmatprep.subr.mxu0 0.0
      %1630 = vmatpush1.msra.mxu0 0.0
      %1631 = vmatprep.subr.mxu0 0.0
      %1632 = vmatpush1.msra.mxu0 0.0
      %1633 = vmatprep.subr.mxu0 0.0
      %1634 = vmatpush1.msra.mxu0 0.0
      %1635 = vmatprep.subr.mxu0 0.0
      %1636 = vmatpush1.msra.mxu0 0.0
      %1637 = vmatprep.subr.mxu0 0.0
      %1638 = vmatpush1.msra.mxu0 0.0
      %1639 = vmatprep.subr.mxu0 0.0
      %1640 = vmatpush1.msra.mxu0 0.0
      %1641 = vmatprep.subr.mxu0 0.0
      %1642 = vmatpush1.msra.mxu0 0.0
      %1643 = vmatprep.subr.mxu0 0.0
      %1644 = vmatpush1.msra.mxu0 0.0
      %1645 = vmatprep.subr.mxu0 0.0
      %1646 = vmatpush1.msra.mxu0 0.0
      %1647 = vmatprep.subr.mxu0 0.0
      %1648 = vmatpush1.msra.mxu0 0.0
      %1649 = vmatprep.subr.mxu0 0.0
      %1650 = vmatpush1.msra.mxu0 0.0
      %1651 = vmatprep.subr.mxu0 0.0
      %1652 = vmatpush1.msra.mxu0 0.0
      %1653 = vmatprep.subr.mxu0 0.0
      %1654 = vmatpush1.msra.mxu0 0.0
      %1655 = vmatprep.subr.mxu0 0.0
      %1656 = vmatpush1.msra.mxu0 0.0
      %1657 = vmatprep.subr.mxu0 0.0
      %1658 = vmatpush1.msra.mxu0 0.0
      %1659 = vmatprep.subr.mxu0 0.0
      %1660 = vmatpush1.msra.mxu0 0.0
      %1661 = vmatprep.subr.mxu0 0.0
      %1662 = vmatpush1.msra.mxu0 0.0
      %1663 = vmatprep.subr.mxu0 0.0
      %1664 = vmatpush1.msra.mxu0 0.0
      %1665 = vmatprep.subr.mxu0 0.0
      %1666 = vmatpush1.msra.mxu0 0.0
      %1667 = vmatprep.subr.mxu0 0.0
      %1668 = vmatpush1.msra.mxu0 0.0
      %1669 = vmatprep.subr.mxu0 0.0
      %1670 = vmatpush1.msra.mxu0 0.0
      %1671 = vmatprep.subr.mxu0 0.0
      %1672 = vmatpush1.msra.mxu0 0.0
      %1673 = vmatprep.subr.mxu0 0.0
      %1674 = vmatpush1.msra.mxu0 0.0
      %1675 = vmatprep.subr.mxu0 0.0
      %1676 = vmatpush1.msra.mxu0 0.0
      %1677 = vmatprep.subr.mxu0 0.0
      %1678 = vmatpush1.msra.mxu0 0.0
      %1679 = vmatprep.subr.mxu0 0.0
      %1680 = vmatpush1.msra.mxu0 0.0
      %1681 = vmatprep.subr.mxu0 0.0
      %1682 = vmatpush1.msra.mxu0 0.0
      %1683 = vmatprep.subr.mxu0 0.0
      %1684 = vmatpush1.msra.mxu0 0.0
      %1685 = vmatprep.mubr.f32.mxu0 0.0
      %1686 = vmatmul.mubr.f32.gmra.mrb[0].mxu0 %v1574
      %v1687 = vpop.f32.mrb[0].mxu0
      %v1688 = vadd.f32 %v298, %v1687
      %v1689 = vpop.f32.mrb[0].mxu0
      %1690 = vmatprep.mubr.f32.mxu0 0.0
      %1691 = vmatmul.mubr.f32.gmra.mrb[0].mxu0 %v1577
      %v1692 = vpop.f32.mrb[0].mxu0
      %v1693 = vadd.f32 %v298, %v1692
      %v1694 = vpop.f32.mrb[0].mxu0
      %1695 = vmatprep.mubr.f32.mxu0 0.0
      %1696 = vmatmul.mubr.f32.gmra.mrb[0].mxu0 %v1580
      %v1697 = vpop.f32.mrb[0].mxu0
      %v1698 = vadd.f32 %v298, %v1697
      %v1699 = vpop.f32.mrb[0].mxu0
      %1700 = vmatprep.mubr.f32.mxu0 0.0
      %1701 = vmatmul.mubr.f32.gmra.mrb[0].mxu0 %v1583
      %v1702 = vpop.f32.mrb[0].mxu0
      %v1703 = vadd.f32 %v298, %v1702
      %v1704 = vpop.f32.mrb[0].mxu0
      %1705 = vmatprep.mubr.f32.mxu0 0.0
      %1706 = vmatmul.mubr.f32.gmra.mrb[0].mxu0 %v1586
      %v1707 = vpop.f32.mrb[0].mxu0
      %v1708 = vadd.f32 %v298, %v1707
      %v1709 = vpop.f32.mrb[0].mxu0
      %1710 = vmatprep.mubr.f32.mxu0 0.0
      %1711 = vmatmul.mubr.f32.gmra.mrb[0].mxu0 %v1589
      %v1712 = vpop.f32.mrb[0].mxu0
      %v1713 = vadd.f32 %v298, %v1712
      %v1714 = vpop.f32.mrb[0].mxu0
      %1715 = vmatprep.mubr.f32.mxu0 0.0
      %1716 = vmatmul.mubr.f32.gmra.mrb[0].mxu0 %v1592
      %v1717 = vpop.f32.mrb[0].mxu0
      %v1718 = vadd.f32 %v298, %v1717
      %v1719 = vpop.f32.mrb[0].mxu0
      %1720 = vmatprep.mubr.f32.mxu0 0.0
      %1721 = vmatmul.mubr.f32.gmra.mrb[0].mxu0 %v1595
      %v1722 = vpop.f32.mrb[0].mxu0
      %v1723 = vadd.f32 %v298, %v1722
      %v1724 = vpop.f32.mrb[0].mxu0
      %1725 = vmatprep.mubr.f32.mxu0 0.0
      %1726 = vmatmul.mubr.f32.gmra.mrb[0].mxu0 %v1598
      %v1727 = vpop.f32.mrb[0].mxu0
      %v1728 = vadd.f32 %v298, %v1727
      %v1729 = vpop.f32.mrb[0].mxu0
      %1730 = vmatprep.mubr.f32.mxu0 0.0
      %1731 = vmatmul.mubr.f32.gmra.mrb[0].mxu0 %v1601
      %v1732 = vpop.f32.mrb[0].mxu0
      %v1733 = vadd.f32 %v298, %v1732
      %v1734 = vpop.f32.mrb[0].mxu0
      %1735 = vmatprep.mubr.f32.mxu0 0.0
      %1736 = vmatmul.mubr.f32.gmra.mrb[0].mxu0 %v1604
      %v1737 = vpop.f32.mrb[0].mxu0
      %v1738 = vadd.f32 %v298, %v1737
      %v1739 = vpop.f32.mrb[0].mxu0
      %1740 = vmatprep.mubr.f32.mxu0 0.0
      %1741 = vmatmul.mubr.f32.gmra.mrb[0].mxu0 %v1607
      %v1742 = vpop.f32.mrb[0].mxu0
      %v1743 = vadd.f32 %v298, %v1742
      %v1744 = vpop.f32.mrb[0].mxu0
      %1745 = vmatprep.mubr.f32.mxu0 0.0
      %1746 = vmatmul.mubr.f32.gmra.mrb[0].mxu0 %v1610
      %v1747 = vpop.f32.mrb[0].mxu0
      %v1748 = vadd.f32 %v298, %v1747
      %v1749 = vpop.f32.mrb[0].mxu0
      %1750 = vmatprep.mubr.f32.mxu0 0.0
      %1751 = vmatmul.mubr.f32.gmra.mrb[0].mxu0 %v1613
      %v1752 = vpop.f32.mrb[0].mxu0
      %v1753 = vadd.f32 %v298, %v1752
      %v1754 = vpop.f32.mrb[0].mxu0
      %1755 = vmatprep.mubr.f32.mxu0 0.0
      %1756 = vmatmul.mubr.f32.gmra.mrb[0].mxu0 %v1616
      %v1757 = vpop.f32.mrb[0].mxu0
      %v1758 = vadd.f32 %v298, %v1757
      %v1759 = vpop.f32.mrb[0].mxu0
      %1760 = vmatprep.mubr.f32.mxu0 0.0
      %1761 = vmatmul.mubr.f32.gmra.mrb[0].mxu0 %v1619
      %v1762 = vpop.f32.mrb[0].mxu0
      %v1763 = vadd.f32 %v298, %v1762
      %v1764 = vpop.f32.mrb[0].mxu0
      %1765 = vdwg.mxu0
      %vm1766 = vcmask 294168
      %v1767 = vsel %vm1766, %v1688, -inf
      %v1768 = vsel %vm1766, %v1693, -inf
      %v1769 = vsel %vm1766, %v1698, -inf
      %v1770 = vsel %vm1766, %v1703, -inf
      %v1771 = vsel %vm1766, %v1708, -inf
      %v1772 = vmax.f32 %v1767, %v1771
      %v1773 = vsel %vm1766, %v1713, -inf
      %v1774 = vmax.f32 %v1768, %v1773
      %v1775 = vsel %vm1766, %v1718, -inf
      %v1776 = vmax.f32 %v1769, %v1775
      %v1777 = vsel %vm1766, %v1723, -inf
      %v1778 = vmax.f32 %v1770, %v1777
      %v1779 = vsel %vm1766, %v1728, -inf
      %v1780 = vmax.f32 %v1772, %v1779
      %v1781 = vsel %vm1766, %v1733, -inf
      %v1782 = vmax.f32 %v1774, %v1781
      %v1783 = vsel %vm1766, %v1738, -inf
      %v1784 = vmax.f32 %v1776, %v1783
      %v1785 = vsel %vm1766, %v1743, -inf
      %v1786 = vmax.f32 %v1778, %v1785
      %v1787 = vsel %vm1766, %v1748, -inf
      %v1788 = vmax.f32 %v1780, %v1787
      %v1789 = vsel %vm1766, %v1753, -inf
      %v1790 = vmax.f32 %v1782, %v1789
      %v1791 = vsel %vm1766, %v1758, -inf
      %v1792 = vmax.f32 %v1784, %v1791
      %v1793 = vsel %vm1766, %v1763, -inf
      %v1794 = vmax.f32 %v1786, %v1793
      %v1795 = vmax.f32 %v1788, %v1790
      %v1796 = vmax.f32 %v1792, %v1794
      %v1797 = vmax.f32 %v1795, %v1796
      %1798 = vmax.xlane.f32.xlu0 %v1797
      %v1799 = vpop.xlane.xlu0 %1798
      %v1800 = vrot.slane %v1799, 4
      %v1801 = vmax.f32 %v1799, %v1800
      %v1802 = vrot.slane %v1801, 2
      %v1803 = vmax.f32 %v1801, %v1802
      %v1804 = vrot.slane %v1803, 1
      %v1805 = vmax.f32 %v1803, %v1804
      %s1806 = vtos %v1805
      %v1807 = vstv %s1806
      %v1808 = vsub.f32 %v1688, %v1807
      %v1809 = vsub.f32 %v1693, %v1807
      %v1810 = vsub.f32 %v1698, %v1807
      %v1811 = vsub.f32 %v1703, %v1807
      %v1812 = vsub.f32 %v1708, %v1807
      %v1813 = vsub.f32 %v1713, %v1807
      %v1814 = vsub.f32 %v1718, %v1807
      %v1815 = vsub.f32 %v1723, %v1807
      %v1816 = vsub.f32 %v1728, %v1807
      %v1817 = vsub.f32 %v1733, %v1807
      %v1818 = vsub.f32 %v1738, %v1807
      %v1819 = vsub.f32 %v1743, %v1807
      %v1820 = vsub.f32 %v1748, %v1807
      %v1821 = vsub.f32 %v1753, %v1807
      %v1822 = vsub.f32 %v1758, %v1807
      %v1823 = vsub.f32 %v1763, %v1807
      %v1824 = vmul.f32 %v1808, 1.442695
      %v1825 = vpow.pop %v1824
      %v1826 = vmul.f32 %v1809, 1.442695
      %v1827 = vpow.pop %v1826
      %v1828 = vmul.f32 %v1810, 1.442695
      %v1829 = vpow.pop %v1828
      %v1830 = vmul.f32 %v1811, 1.442695
      %v1831 = vpow.pop %v1830
      %v1832 = vmul.f32 %v1812, 1.442695
      %v1833 = vpow.pop %v1832
      %v1834 = vmul.f32 %v1813, 1.442695
      %v1835 = vpow.pop %v1834
      %v1836 = vmul.f32 %v1814, 1.442695
      %v1837 = vpow.pop %v1836
      %v1838 = vmul.f32 %v1815, 1.442695
      %v1839 = vpow.pop %v1838
      %v1840 = vmul.f32 %v1816, 1.442695
      %v1841 = vpow.pop %v1840
      %v1842 = vmul.f32 %v1817, 1.442695
      %v1843 = vpow.pop %v1842
      %v1844 = vmul.f32 %v1818, 1.442695
      %v1845 = vpow.pop %v1844
      %v1846 = vmul.f32 %v1819, 1.442695
      %v1847 = vpow.pop %v1846
      %v1848 = vmul.f32 %v1820, 1.442695
      %v1849 = vpow.pop %v1848
      %v1850 = vmul.f32 %v1821, 1.442695
      %v1851 = vpow.pop %v1850
      %v1852 = vmul.f32 %v1822, 1.442695
      %v1853 = vpow.pop %v1852
      %v1854 = vmul.f32 %v1823, 1.442695
      %v1855 = vpow.pop %v1854
      %1857 = vset.pattern.permute.xlu0 35
      %1858 = vperm.xlu0 %1857, %v1825
      %v1859 = vpop.permute.xlu0 %1858
      %1862 = vset.pattern.permute.xlu0 35
      %1863 = vperm.xlu0 %1862, %v1827
      %v1864 = vpop.permute.xlu0 %1863
      %1867 = vset.pattern.permute.xlu0 35
      %1868 = vperm.xlu0 %1867, %v1829
      %v1869 = vpop.permute.xlu0 %1868
      %1872 = vset.pattern.permute.xlu0 35
      %1873 = vperm.xlu0 %1872, %v1831
      %v1874 = vpop.permute.xlu0 %1873
      %1877 = vset.pattern.permute.xlu0 35
      %1878 = vperm.xlu0 %1877, %v1833
      %v1879 = vpop.permute.xlu0 %1878
      %1882 = vset.pattern.permute.xlu0 35
      %1883 = vperm.xlu0 %1882, %v1835
      %v1884 = vpop.permute.xlu0 %1883
      %1887 = vset.pattern.permute.xlu0 35
      %1888 = vperm.xlu0 %1887, %v1837
      %v1889 = vpop.permute.xlu0 %1888
      %1892 = vset.pattern.permute.xlu0 35
      %1893 = vperm.xlu0 %1892, %v1839
      %v1894 = vpop.permute.xlu0 %1893
      %1897 = vset.pattern.permute.xlu0 35
      %1898 = vperm.xlu0 %1897, %v1841
      %v1899 = vpop.permute.xlu0 %1898
      %1902 = vset.pattern.permute.xlu0 35
      %1903 = vperm.xlu0 %1902, %v1843
      %v1904 = vpop.permute.xlu0 %1903
      %1907 = vset.pattern.permute.xlu0 35
      %1908 = vperm.xlu0 %1907, %v1845
      %v1909 = vpop.permute.xlu0 %1908
      %1912 = vset.pattern.permute.xlu0 35
      %1913 = vperm.xlu0 %1912, %v1847
      %v1914 = vpop.permute.xlu0 %1913
      %1917 = vset.pattern.permute.xlu0 35
      %1918 = vperm.xlu0 %1917, %v1849
      %v1919 = vpop.permute.xlu0 %1918
      %1922 = vset.pattern.permute.xlu0 35
      %1923 = vperm.xlu0 %1922, %v1851
      %v1924 = vpop.permute.xlu0 %1923
      %1927 = vset.pattern.permute.xlu0 35
      %1928 = vperm.xlu0 %1927, %v1853
      %v1929 = vpop.permute.xlu0 %1928
      %1932 = vset.pattern.permute.xlu0 35
      %1933 = vperm.xlu0 %1932, %v1855
      %v1934 = vpop.permute.xlu0 %1933
      %v1936 = vmul.f32 %v1859, %v1688
      %v1937 = vmul.f32 %v1864, %v1693
      %v1938 = vmul.f32 %v1869, %v1698
      %v1939 = vmul.f32 %v1874, %v1703
      %v1940 = vmul.f32 %v1879, %v1708
      %v1941 = vmul.f32 %v1884, %v1713
      %v1942 = vmul.f32 %v1889, %v1718
      %v1943 = vmul.f32 %v1894, %v1723
      %v1944 = vmul.f32 %v1899, %v1728
      %v1945 = vmul.f32 %v1904, %v1733
      %v1946 = vmul.f32 %v1909, %v1738
      %v1947 = vmul.f32 %v1914, %v1743
      %v1948 = vmul.f32 %v1919, %v1748
      %v1949 = vmul.f32 %v1924, %v1753
      %v1950 = vmul.f32 %v1929, %v1758
      %v1951 = vmul.f32 %v1934, %v1763
      %1952 = vmatprep.subr.mxu0 0.0
      %1953 = vmatpush1.msra.mxu0 %v1936
      %1954 = vmatprep.subr.mxu0 0.0
      %1955 = vmatpush1.msra.mxu0 %v1937
      %1956 = vmatprep.subr.mxu0 0.0
      %1957 = vmatpush1.msra.mxu0 %v1938
      %1958 = vmatprep.subr.mxu0 0.0
      %1959 = vmatpush1.msra.mxu0 %v1939
      %1960 = vmatprep.subr.mxu0 0.0
      %1961 = vmatpush1.msra.mxu0 %v1940
      %1962 = vmatprep.subr.mxu0 0.0
      %1963 = vmatpush1.msra.mxu0 %v1941
      %1964 = vmatprep.subr.mxu0 0.0
      %1965 = vmatpush1.msra.mxu0 %v1942
      %1966 = vmatprep.subr.mxu0 0.0
      %1967 = vmatpush1.msra.mxu0 %v1943
      %1968 = vmatprep.subr.mxu0 0.0
      %1969 = vmatpush1.msra.mxu0 %v1944
      %1970 = vmatprep.subr.mxu0 0.0
      %1971 = vmatpush1.msra.mxu0 %v1945
      %1972 = vmatprep.subr.mxu0 0.0
      %1973 = vmatpush1.msra.mxu0 %v1946
      %1974 = vmatprep.subr.mxu0 0.0
      %1975 = vmatpush1.msra.mxu0 %v1947
      %1976 = vmatprep.subr.mxu0 0.0
      %1977 = vmatpush1.msra.mxu0 %v1948
      %1978 = vmatprep.subr.mxu0 0.0
      %1979 = vmatpush1.msra.mxu0 %v1949
      %1980 = vmatprep.subr.mxu0 0.0
      %1981 = vmatpush1.msra.mxu0 %v1950
      %1982 = vmatprep.subr.mxu0 0.0
      %1983 = vmatpush1.msra.mxu0 %v1951
      %1984 = vmatprep.subr.mxu0 0.0
      %1985 = vmatpush1.msra.mxu0 0.0
      %1986 = vmatprep.subr.mxu0 0.0
      %1987 = vmatpush1.msra.mxu0 0.0
      %1988 = vmatprep.subr.mxu0 0.0
      %1989 = vmatpush1.msra.mxu0 0.0
      %1990 = vmatprep.subr.mxu0 0.0
      %1991 = vmatpush1.msra.mxu0 0.0
      %1992 = vmatprep.subr.mxu0 0.0
      %1993 = vmatpush1.msra.mxu0 0.0
      %1994 = vmatprep.subr.mxu0 0.0
      %1995 = vmatpush1.msra.mxu0 0.0
      %1996 = vmatprep.subr.mxu0 0.0
      %1997 = vmatpush1.msra.mxu0 0.0
      %1998 = vmatprep.subr.mxu0 0.0
      %1999 = vmatpush1.msra.mxu0 0.0
      %2000 = vmatprep.subr.mxu0 0.0
      %2001 = vmatpush1.msra.mxu0 0.0
      %2002 = vmatprep.subr.mxu0 0.0
      %2003 = vmatpush1.msra.mxu0 0.0
      %2004 = vmatprep.subr.mxu0 0.0
      %2005 = vmatpush1.msra.mxu0 0.0
      %2006 = vmatprep.subr.mxu0 0.0
      %2007 = vmatpush1.msra.mxu0 0.0
      %2008 = vmatprep.subr.mxu0 0.0
      %2009 = vmatpush1.msra.mxu0 0.0
      %2010 = vmatprep.subr.mxu0 0.0
      %2011 = vmatpush1.msra.mxu0 0.0
      %2012 = vmatprep.subr.mxu0 0.0
      %2013 = vmatpush1.msra.mxu0 0.0
      %2014 = vmatprep.subr.mxu0 0.0
      %2015 = vmatpush1.msra.mxu0 0.0
      %2016 = vmatprep.mubr.f32.mxu0 0.0
      %2017 = vmatmul.mubr.f32.gmra.mrb[0].mxu0 %v260
      %v2018 = vpop.f32.mrb[0].mxu0
      %v2019 = vadd.f32 0.0, %v2018
      %v2020 = vpop.f32.mrb[0].mxu0
      %2021 = vmatprep.mubr.f32.mxu0 0.0
      %2022 = vmatmul.mubr.f32.gmra.mrb[0].mxu0 %v261
      %v2023 = vpop.f32.mrb[0].mxu0
      %v2024 = vadd.f32 0.0, %v2023
      %v2025 = vpop.f32.mrb[0].mxu0
      %2026 = vmatprep.mubr.f32.mxu0 0.0
      %2027 = vmatmul.mubr.f32.gmra.mrb[0].mxu0 %v262
      %v2028 = vpop.f32.mrb[0].mxu0
      %v2029 = vadd.f32 0.0, %v2028
      %v2030 = vpop.f32.mrb[0].mxu0
      %2031 = vmatprep.mubr.f32.mxu0 0.0
      %2032 = vmatmul.mubr.f32.gmra.mrb[0].mxu0 %v263
      %v2033 = vpop.f32.mrb[0].mxu0
      %v2034 = vadd.f32 0.0, %v2033
      %v2035 = vpop.f32.mrb[0].mxu0
      %2036 = vmatprep.mubr.f32.mxu0 0.0
      %2037 = vmatmul.mubr.f32.gmra.mrb[0].mxu0 %v264
      %v2038 = vpop.f32.mrb[0].mxu0
      %v2039 = vadd.f32 0.0, %v2038
      %v2040 = vpop.f32.mrb[0].mxu0
      %2041 = vmatprep.mubr.f32.mxu0 0.0
      %2042 = vmatmul.mubr.f32.gmra.mrb[0].mxu0 %v265
      %v2043 = vpop.f32.mrb[0].mxu0
      %v2044 = vadd.f32 0.0, %v2043
      %v2045 = vpop.f32.mrb[0].mxu0
      %2046 = vmatprep.mubr.f32.mxu0 0.0
      %2047 = vmatmul.mubr.f32.gmra.mrb[0].mxu0 %v266
      %v2048 = vpop.f32.mrb[0].mxu0
      %v2049 = vadd.f32 0.0, %v2048
      %v2050 = vpop.f32.mrb[0].mxu0
      %2051 = vmatprep.mubr.f32.mxu0 0.0
      %2052 = vmatmul.mubr.f32.gmra.mrb[0].mxu0 %v267
      %v2053 = vpop.f32.mrb[0].mxu0
      %v2054 = vadd.f32 0.0, %v2053
      %v2055 = vpop.f32.mrb[0].mxu0
      %2056 = vmatprep.mubr.f32.mxu0 0.0
      %2057 = vmatmul.mubr.f32.gmra.mrb[0].mxu0 %v268
      %v2058 = vpop.f32.mrb[0].mxu0
      %v2059 = vadd.f32 0.0, %v2058
      %v2060 = vpop.f32.mrb[0].mxu0
      %2061 = vmatprep.mubr.f32.mxu0 0.0
      %2062 = vmatmul.mubr.f32.gmra.mrb[0].mxu0 %v269
      %v2063 = vpop.f32.mrb[0].mxu0
      %v2064 = vadd.f32 0.0, %v2063
      %v2065 = vpop.f32.mrb[0].mxu0
      %2066 = vmatprep.mubr.f32.mxu0 0.0
      %2067 = vmatmul.mubr.f32.gmra.mrb[0].mxu0 %v270
      %v2068 = vpop.f32.mrb[0].mxu0
      %v2069 = vadd.f32 0.0, %v2068
      %v2070 = vpop.f32.mrb[0].mxu0
      %2071 = vmatprep.mubr.f32.mxu0 0.0
      %2072 = vmatmul.mubr.f32.gmra.mrb[0].mxu0 %v271
      %v2073 = vpop.f32.mrb[0].mxu0
      %v2074 = vadd.f32 0.0, %v2073
      %v2075 = vpop.f32.mrb[0].mxu0
      %2076 = vmatprep.mubr.f32.mxu0 0.0
      %2077 = vmatmul.mubr.f32.gmra.mrb[0].mxu0 %v272
      %v2078 = vpop.f32.mrb[0].mxu0
      %v2079 = vadd.f32 0.0, %v2078
      %v2080 = vpop.f32.mrb[0].mxu0
      %2081 = vmatprep.mubr.f32.mxu0 0.0
      %2082 = vmatmul.mubr.f32.gmra.mrb[0].mxu0 %v273
      %v2083 = vpop.f32.mrb[0].mxu0
      %v2084 = vadd.f32 0.0, %v2083
      %v2085 = vpop.f32.mrb[0].mxu0
      %2086 = vmatprep.mubr.f32.mxu0 0.0
      %2087 = vmatmul.mubr.f32.gmra.mrb[0].mxu0 %v274
      %v2088 = vpop.f32.mrb[0].mxu0
      %v2089 = vadd.f32 0.0, %v2088
      %v2090 = vpop.f32.mrb[0].mxu0
      %2091 = vmatprep.mubr.f32.mxu0 0.0
      %2092 = vmatmul.mubr.f32.gmra.mrb[0].mxu0 %v275
      %v2093 = vpop.f32.mrb[0].mxu0
      %v2094 = vadd.f32 0.0, %v2093
      %v2095 = vpop.f32.mrb[0].mxu0
      %2096 = vdwg.mxu0
      %2098 = vset.pattern.permute.xlu0 32
      %2099 = vperm.xlu0 %2098, %v2019
      %v2100 = vpop.permute.xlu0 %2099
      %2103 = vset.pattern.permute.xlu0 32
      %2104 = vperm.xlu0 %2103, %v2024
      %v2105 = vpop.permute.xlu0 %2104
      %2108 = vset.pattern.permute.xlu0 32
      %2109 = vperm.xlu0 %2108, %v2029
      %v2110 = vpop.permute.xlu0 %2109
      %2113 = vset.pattern.permute.xlu0 32
      %2114 = vperm.xlu0 %2113, %v2034
      %v2115 = vpop.permute.xlu0 %2114
      %2118 = vset.pattern.permute.xlu0 32
      %2119 = vperm.xlu0 %2118, %v2039
      %v2120 = vpop.permute.xlu0 %2119
      %2123 = vset.pattern.permute.xlu0 32
      %2124 = vperm.xlu0 %2123, %v2044
      %v2125 = vpop.permute.xlu0 %2124
      %2128 = vset.pattern.permute.xlu0 32
      %2129 = vperm.xlu0 %2128, %v2049
      %v2130 = vpop.permute.xlu0 %2129
      %2133 = vset.pattern.permute.xlu0 32
      %2134 = vperm.xlu0 %2133, %v2054
      %v2135 = vpop.permute.xlu0 %2134
      %2138 = vset.pattern.permute.xlu0 32
      %2139 = vperm.xlu0 %2138, %v2059
      %v2140 = vpop.permute.xlu0 %2139
      %2143 = vset.pattern.permute.xlu0 32
      %2144 = vperm.xlu0 %2143, %v2064
      %v2145 = vpop.permute.xlu0 %2144
      %2148 = vset.pattern.permute.xlu0 32
      %2149 = vperm.xlu0 %2148, %v2069
      %v2150 = vpop.permute.xlu0 %2149
      %2153 = vset.pattern.permute.xlu0 32
      %2154 = vperm.xlu0 %2153, %v2074
      %v2155 = vpop.permute.xlu0 %2154
      %2158 = vset.pattern.permute.xlu0 32
      %2159 = vperm.xlu0 %2158, %v2079
      %v2160 = vpop.permute.xlu0 %2159
      %2163 = vset.pattern.permute.xlu0 32
      %2164 = vperm.xlu0 %2163, %v2084
      %v2165 = vpop.permute.xlu0 %2164
      %2168 = vset.pattern.permute.xlu0 32
      %2169 = vperm.xlu0 %2168, %v2089
      %v2170 = vpop.permute.xlu0 %2169
      %2173 = vset.pattern.permute.xlu0 32
      %2174 = vperm.xlu0 %2173, %v2094
      %v2175 = vpop.permute.xlu0 %2174
      %v2177 = vrcp.pop %v2100
      %v2178 = vmul.f32 %v2019, %v2177
      %v2179 = vrcp.pop %v2105
      %v2180 = vmul.f32 %v2024, %v2179
      %v2181 = vrcp.pop %v2110
      %v2182 = vmul.f32 %v2029, %v2181
      %v2183 = vrcp.pop %v2115
      %v2184 = vmul.f32 %v2034, %v2183
      %v2185 = vrcp.pop %v2120
      %v2186 = vmul.f32 %v2039, %v2185
      %v2187 = vrcp.pop %v2125
      %v2188 = vmul.f32 %v2044, %v2187
      %v2189 = vrcp.pop %v2130
      %v2190 = vmul.f32 %v2049, %v2189
      %v2191 = vrcp.pop %v2135
      %v2192 = vmul.f32 %v2054, %v2191
      %v2193 = vrcp.pop %v2140
      %v2194 = vmul.f32 %v2059, %v2193
      %v2195 = vrcp.pop %v2145
      %v2196 = vmul.f32 %v2064, %v2195
      %v2197 = vrcp.pop %v2150
      %v2198 = vmul.f32 %v2069, %v2197
      %v2199 = vrcp.pop %v2155
      %v2200 = vmul.f32 %v2074, %v2199
      %v2201 = vrcp.pop %v2160
      %v2202 = vmul.f32 %v2079, %v2201
      %v2203 = vrcp.pop %v2165
      %v2204 = vmul.f32 %v2084, %v2203
      %v2205 = vrcp.pop %v2170
      %v2206 = vmul.f32 %v2089, %v2205
      %v2207 = vrcp.pop %v2175
      %v2208 = vmul.f32 %v2094, %v2207
      %v2210 = vsel %vm300, %v2178, 0
      %v2213 = vsel %vm300, %v2180, 0
      %v2216 = vsel %vm300, %v2182, 0
      %v2219 = vsel %vm300, %v2184, 0
      %v2222 = vsel %vm300, %v2186, 0
      %v2225 = vsel %vm300, %v2188, 0
      %v2228 = vsel %vm300, %v2190, 0
      %v2231 = vsel %vm300, %v2192, 0
      %v2234 = vsel %vm300, %v2194, 0
      %v2237 = vsel %vm300, %v2196, 0
      %v2240 = vsel %vm300, %v2198, 0
      %v2243 = vsel %vm300, %v2200, 0
      %v2246 = vsel %vm300, %v2202, 0
      %v2249 = vsel %vm300, %v2204, 0
      %v2252 = vsel %vm300, %v2206, 0
      %v2255 = vsel %vm300, %v2208, 0
      %2257 = vmatprep.subr.mxu0 0.0
      %2258 = vmatpush1.msra.mxu0 %v255
      %2259 = vmatprep.subr.mxu0 0.0
      %2260 = vmatpush1.msra.mxu0 %v256
      %2261 = vmatprep.subr.mxu0 0.0
      %2262 = vmatpush1.msra.mxu0 %v257
      %2263 = vmatprep.subr.mxu0 0.0
      %2264 = vmatpush1.msra.mxu0 %v258
      %2265 = vmatprep.subr.mxu0 0.0
      %2266 = vmatpush1.msra.mxu0 0.0
      %2267 = vmatprep.subr.mxu0 0.0
      %2268 = vmatpush1.msra.mxu0 0.0
      %2269 = vmatprep.subr.mxu0 0.0
      %2270 = vmatpush1.msra.mxu0 0.0
      %2271 = vmatprep.subr.mxu0 0.0
      %2272 = vmatpush1.msra.mxu0 0.0
      %2273 = vmatprep.subr.mxu0 0.0
      %2274 = vmatpush1.msra.mxu0 0.0
      %2275 = vmatprep.subr.mxu0 0.0
      %2276 = vmatpush1.msra.mxu0 0.0
      %2277 = vmatprep.subr.mxu0 0.0
      %2278 = vmatpush1.msra.mxu0 0.0
      %2279 = vmatprep.subr.mxu0 0.0
      %2280 = vmatpush1.msra.mxu0 0.0
      %2281 = vmatprep.subr.mxu0 0.0
      %2282 = vmatpush1.msra.mxu0 0.0
      %2283 = vmatprep.subr.mxu0 0.0
      %2284 = vmatpush1.msra.mxu0 0.0
      %2285 = vmatprep.subr.mxu0 0.0
      %2286 = vmatpush1.msra.mxu0 0.0
      %2287 = vmatprep.subr.mxu0 0.0
      %2288 = vmatpush1.msra.mxu0 0.0
      %2289 = vmatprep.subr.mxu0 0.0
      %2290 = vmatpush1.msra.mxu0 0.0
      %2291 = vmatprep.subr.mxu0 0.0
      %2292 = vmatpush1.msra.mxu0 0.0
      %2293 = vmatprep.subr.mxu0 0.0
      %2294 = vmatpush1.msra.mxu0 0.0
      %2295 = vmatprep.subr.mxu0 0.0
      %2296 = vmatpush1.msra.mxu0 0.0
      %2297 = vmatprep.subr.mxu0 0.0
      %2298 = vmatpush1.msra.mxu0 0.0
      %2299 = vmatprep.subr.mxu0 0.0
      %2300 = vmatpush1.msra.mxu0 0.0
      %2301 = vmatprep.subr.mxu0 0.0
      %2302 = vmatpush1.msra.mxu0 0.0
      %2303 = vmatprep.subr.mxu0 0.0
      %2304 = vmatpush1.msra.mxu0 0.0
      %2305 = vmatprep.subr.mxu0 0.0
      %2306 = vmatpush1.msra.mxu0 0.0
      %2307 = vmatprep.subr.mxu0 0.0
      %2308 = vmatpush1.msra.mxu0 0.0
      %2309 = vmatprep.subr.mxu0 0.0
      %2310 = vmatpush1.msra.mxu0 0.0
      %2311 = vmatprep.subr.mxu0 0.0
      %2312 = vmatpush1.msra.mxu0 0.0
      %2313 = vmatprep.subr.mxu0 0.0
      %2314 = vmatpush1.msra.mxu0 0.0
      %2315 = vmatprep.subr.mxu0 0.0
      %2316 = vmatpush1.msra.mxu0 0.0
      %2317 = vmatprep.subr.mxu0 0.0
      %2318 = vmatpush1.msra.mxu0 0.0
      %2319 = vmatprep.subr.mxu0 0.0
      %2320 = vmatpush1.msra.mxu0 0.0
      %2321 = vmatprep.mubr.f32.mxu0 0.0
      %2322 = vmatmul.mubr.f32.gmra.mrb[0].mxu0 %v2210
      %v2323 = vpop.f32.mrb[0].mxu0
      %v2324 = vadd.f32 %v298, %v2323
      %v2325 = vpop.f32.mrb[0].mxu0
      %2326 = vmatprep.mubr.f32.mxu0 0.0
      %2327 = vmatmul.mubr.f32.gmra.mrb[0].mxu0 %v2213
      %v2328 = vpop.f32.mrb[0].mxu0
      %v2329 = vadd.f32 %v298, %v2328
      %v2330 = vpop.f32.mrb[0].mxu0
      %2331 = vmatprep.mubr.f32.mxu0 0.0
      %2332 = vmatmul.mubr.f32.gmra.mrb[0].mxu0 %v2216
      %v2333 = vpop.f32.mrb[0].mxu0
      %v2334 = vadd.f32 %v298, %v2333
      %v2335 = vpop.f32.mrb[0].mxu0
      %2336 = vmatprep.mubr.f32.mxu0 0.0
      %2337 = vmatmul.mubr.f32.gmra.mrb[0].mxu0 %v2219
      %v2338 = vpop.f32.mrb[0].mxu0
      %v2339 = vadd.f32 %v298, %v2338
      %v2340 = vpop.f32.mrb[0].mxu0
      %2341 = vmatprep.mubr.f32.mxu0 0.0
      %2342 = vmatmul.mubr.f32.gmra.mrb[0].mxu0 %v2222
      %v2343 = vpop.f32.mrb[0].mxu0
      %v2344 = vadd.f32 %v298, %v2343
      %v2345 = vpop.f32.mrb[0].mxu0
      %2346 = vmatprep.mubr.f32.mxu0 0.0
      %2347 = vmatmul.mubr.f32.gmra.mrb[0].mxu0 %v2225
      %v2348 = vpop.f32.mrb[0].mxu0
      %v2349 = vadd.f32 %v298, %v2348
      %v2350 = vpop.f32.mrb[0].mxu0
      %2351 = vmatprep.mubr.f32.mxu0 0.0
      %2352 = vmatmul.mubr.f32.gmra.mrb[0].mxu0 %v2228
      %v2353 = vpop.f32.mrb[0].mxu0
      %v2354 = vadd.f32 %v298, %v2353
      %v2355 = vpop.f32.mrb[0].mxu0
      %2356 = vmatprep.mubr.f32.mxu0 0.0
      %2357 = vmatmul.mubr.f32.gmra.mrb[0].mxu0 %v2231
      %v2358 = vpop.f32.mrb[0].mxu0
      %v2359 = vadd.f32 %v298, %v2358
      %v2360 = vpop.f32.mrb[0].mxu0
      %2361 = vmatprep.mubr.f32.mxu0 0.0
      %2362 = vmatmul.mubr.f32.gmra.mrb[0].mxu0 %v2234
      %v2363 = vpop.f32.mrb[0].mxu0
      %v2364 = vadd.f32 %v298, %v2363
      %v2365 = vpop.f32.mrb[0].mxu0
      %2366 = vmatprep.mubr.f32.mxu0 0.0
      %2367 = vmatmul.mubr.f32.gmra.mrb[0].mxu0 %v2237
      %v2368 = vpop.f32.mrb[0].mxu0
      %v2369 = vadd.f32 %v298, %v2368
      %v2370 = vpop.f32.mrb[0].mxu0
      %2371 = vmatprep.mubr.f32.mxu0 0.0
      %2372 = vmatmul.mubr.f32.gmra.mrb[0].mxu0 %v2240
      %v2373 = vpop.f32.mrb[0].mxu0
      %v2374 = vadd.f32 %v298, %v2373
      %v2375 = vpop.f32.mrb[0].mxu0
      %2376 = vmatprep.mubr.f32.mxu0 0.0
      %2377 = vmatmul.mubr.f32.gmra.mrb[0].mxu0 %v2243
      %v2378 = vpop.f32.mrb[0].mxu0
      %v2379 = vadd.f32 %v298, %v2378
      %v2380 = vpop.f32.mrb[0].mxu0
      %2381 = vmatprep.mubr.f32.mxu0 0.0
      %2382 = vmatmul.mubr.f32.gmra.mrb[0].mxu0 %v2246
      %v2383 = vpop.f32.mrb[0].mxu0
      %v2384 = vadd.f32 %v298, %v2383
      %v2385 = vpop.f32.mrb[0].mxu0
      %2386 = vmatprep.mubr.f32.mxu0 0.0
      %2387 = vmatmul.mubr.f32.gmra.mrb[0].mxu0 %v2249
      %v2388 = vpop.f32.mrb[0].mxu0
      %v2389 = vadd.f32 %v298, %v2388
      %v2390 = vpop.f32.mrb[0].mxu0
      %2391 = vmatprep.mubr.f32.mxu0 0.0
      %2392 = vmatmul.mubr.f32.gmra.mrb[0].mxu0 %v2252
      %v2393 = vpop.f32.mrb[0].mxu0
      %v2394 = vadd.f32 %v298, %v2393
      %v2395 = vpop.f32.mrb[0].mxu0
      %2396 = vmatprep.mubr.f32.mxu0 0.0
      %2397 = vmatmul.mubr.f32.gmra.mrb[0].mxu0 %v2255
      %v2398 = vpop.f32.mrb[0].mxu0
      %v2399 = vadd.f32 %v298, %v2398
      %v2400 = vpop.f32.mrb[0].mxu0
      %2401 = vdwg.mxu0
      %vm2402 = vcmask 302368
      %v2403 = vsel %vm2402, %v2324, -inf
      %v2404 = vsel %vm2402, %v2329, -inf
      %v2405 = vsel %vm2402, %v2334, -inf
      %v2406 = vsel %vm2402, %v2339, -inf
      %v2407 = vsel %vm2402, %v2344, -inf
      %v2408 = vmax.f32 %v2403, %v2407
      %v2409 = vsel %vm2402, %v2349, -inf
      %v2410 = vmax.f32 %v2404, %v2409
      %v2411 = vsel %vm2402, %v2354, -inf
      %v2412 = vmax.f32 %v2405, %v2411
      %v2413 = vsel %vm2402, %v2359, -inf
      %v2414 = vmax.f32 %v2406, %v2413
      %v2415 = vsel %vm2402, %v2364, -inf
      %v2416 = vmax.f32 %v2408, %v2415
      %v2417 = vsel %vm2402, %v2369, -inf
      %v2418 = vmax.f32 %v2410, %v2417
      %v2419 = vsel %vm2402, %v2374, -inf
      %v2420 = vmax.f32 %v2412, %v2419
      %v2421 = vsel %vm2402, %v2379, -inf
      %v2422 = vmax.f32 %v2414, %v2421
      %v2423 = vsel %vm2402, %v2384, -inf
      %v2424 = vmax.f32 %v2416, %v2423
      %v2425 = vsel %vm2402, %v2389, -inf
      %v2426 = vmax.f32 %v2418, %v2425
      %v2427 = vsel %vm2402, %v2394, -inf
      %v2428 = vmax.f32 %v2420, %v2427
      %v2429 = vsel %vm2402, %v2399, -inf
      %v2430 = vmax.f32 %v2422, %v2429
      %v2431 = vmax.f32 %v2424, %v2426
      %v2432 = vmax.f32 %v2428, %v2430
      %v2433 = vmax.f32 %v2431, %v2432
      %2434 = vmax.xlane.f32.xlu0 %v2433
      %v2435 = vpop.xlane.xlu0 %2434
      %v2436 = vrot.slane %v2435, 4
      %v2437 = vmax.f32 %v2435, %v2436
      %v2438 = vrot.slane %v2437, 2
      %v2439 = vmax.f32 %v2437, %v2438
      %v2440 = vrot.slane %v2439, 1
      %v2441 = vmax.f32 %v2439, %v2440
      %s2442 = vtos %v2441
      %v2443 = vstv %s2442
      %v2444 = vsub.f32 %v2324, %v2443
      %v2445 = vsub.f32 %v2329, %v2443
      %v2446 = vsub.f32 %v2334, %v2443
      %v2447 = vsub.f32 %v2339, %v2443
      %v2448 = vsub.f32 %v2344, %v2443
      %v2449 = vsub.f32 %v2349, %v2443
      %v2450 = vsub.f32 %v2354, %v2443
      %v2451 = vsub.f32 %v2359, %v2443
      %v2452 = vsub.f32 %v2364, %v2443
      %v2453 = vsub.f32 %v2369, %v2443
      %v2454 = vsub.f32 %v2374, %v2443
      %v2455 = vsub.f32 %v2379, %v2443
      %v2456 = vsub.f32 %v2384, %v2443
      %v2457 = vsub.f32 %v2389, %v2443
      %v2458 = vsub.f32 %v2394, %v2443
      %v2459 = vsub.f32 %v2399, %v2443
      %v2460 = vmul.f32 %v2444, 1.442695
      %v2461 = vpow.pop %v2460
      %v2462 = vmul.f32 %v2445, 1.442695
      %v2463 = vpow.pop %v2462
      %v2464 = vmul.f32 %v2446, 1.442695
      %v2465 = vpow.pop %v2464
      %v2466 = vmul.f32 %v2447, 1.442695
      %v2467 = vpow.pop %v2466
      %v2468 = vmul.f32 %v2448, 1.442695
      %v2469 = vpow.pop %v2468
      %v2470 = vmul.f32 %v2449, 1.442695
      %v2471 = vpow.pop %v2470
      %v2472 = vmul.f32 %v2450, 1.442695
      %v2473 = vpow.pop %v2472
      %v2474 = vmul.f32 %v2451, 1.442695
      %v2475 = vpow.pop %v2474
      %v2476 = vmul.f32 %v2452, 1.442695
      %v2477 = vpow.pop %v2476
      %v2478 = vmul.f32 %v2453, 1.442695
      %v2479 = vpow.pop %v2478
      %v2480 = vmul.f32 %v2454, 1.442695
      %v2481 = vpow.pop %v2480
      %v2482 = vmul.f32 %v2455, 1.442695
      %v2483 = vpow.pop %v2482
      %v2484 = vmul.f32 %v2456, 1.442695
      %v2485 = vpow.pop %v2484
      %v2486 = vmul.f32 %v2457, 1.442695
      %v2487 = vpow.pop %v2486
      %v2488 = vmul.f32 %v2458, 1.442695
      %v2489 = vpow.pop %v2488
      %v2490 = vmul.f32 %v2459, 1.442695
      %v2491 = vpow.pop %v2490
      %2493 = vset.pattern.permute.xlu0 36
      %2494 = vperm.xlu0 %2493, %v2461
      %v2495 = vpop.permute.xlu0 %2494
      %2498 = vset.pattern.permute.xlu0 36
      %2499 = vperm.xlu0 %2498, %v2463
      %v2500 = vpop.permute.xlu0 %2499
      %2503 = vset.pattern.permute.xlu0 36
      %2504 = vperm.xlu0 %2503, %v2465
      %v2505 = vpop.permute.xlu0 %2504
      %2508 = vset.pattern.permute.xlu0 36
      %2509 = vperm.xlu0 %2508, %v2467
      %v2510 = vpop.permute.xlu0 %2509
      %2513 = vset.pattern.permute.xlu0 36
      %2514 = vperm.xlu0 %2513, %v2469
      %v2515 = vpop.permute.xlu0 %2514
      %2518 = vset.pattern.permute.xlu0 36
      %2519 = vperm.xlu0 %2518, %v2471
      %v2520 = vpop.permute.xlu0 %2519
      %2523 = vset.pattern.permute.xlu0 36
      %2524 = vperm.xlu0 %2523, %v2473
      %v2525 = vpop.permute.xlu0 %2524
      %2528 = vset.pattern.permute.xlu0 36
      %2529 = vperm.xlu0 %2528, %v2475
      %v2530 = vpop.permute.xlu0 %2529
      %2533 = vset.pattern.permute.xlu0 36
      %2534 = vperm.xlu0 %2533, %v2477
      %v2535 = vpop.permute.xlu0 %2534
      %2538 = vset.pattern.permute.xlu0 36
      %2539 = vperm.xlu0 %2538, %v2479
      %v2540 = vpop.permute.xlu0 %2539
      %2543 = vset.pattern.permute.xlu0 36
      %2544 = vperm.xlu0 %2543, %v2481
      %v2545 = vpop.permute.xlu0 %2544
      %2548 = vset.pattern.permute.xlu0 36
      %2549 = vperm.xlu0 %2548, %v2483
      %v2550 = vpop.permute.xlu0 %2549
      %2553 = vset.pattern.permute.xlu0 36
      %2554 = vperm.xlu0 %2553, %v2485
      %v2555 = vpop.permute.xlu0 %2554
      %2558 = vset.pattern.permute.xlu0 36
      %2559 = vperm.xlu0 %2558, %v2487
      %v2560 = vpop.permute.xlu0 %2559
      %2563 = vset.pattern.permute.xlu0 36
      %2564 = vperm.xlu0 %2563, %v2489
      %v2565 = vpop.permute.xlu0 %2564
      %2568 = vset.pattern.permute.xlu0 36
      %2569 = vperm.xlu0 %2568, %v2491
      %v2570 = vpop.permute.xlu0 %2569
      %v2572 = vmul.f32 %v2495, %v2324
      %v2573 = vmul.f32 %v2500, %v2329
      %v2574 = vmul.f32 %v2505, %v2334
      %v2575 = vmul.f32 %v2510, %v2339
      %v2576 = vmul.f32 %v2515, %v2344
      %v2577 = vmul.f32 %v2520, %v2349
      %v2578 = vmul.f32 %v2525, %v2354
      %v2579 = vmul.f32 %v2530, %v2359
      %v2580 = vmul.f32 %v2535, %v2364
      %v2581 = vmul.f32 %v2540, %v2369
      %v2582 = vmul.f32 %v2545, %v2374
      %v2583 = vmul.f32 %v2550, %v2379
      %v2584 = vmul.f32 %v2555, %v2384
      %v2585 = vmul.f32 %v2560, %v2389
      %v2586 = vmul.f32 %v2565, %v2394
      %v2587 = vmul.f32 %v2570, %v2399
      %2588 = vmatprep.subr.mxu0 0.0
      %2589 = vmatpush1.msra.mxu0 %v2572
      %2590 = vmatprep.subr.mxu0 0.0
      %2591 = vmatpush1.msra.mxu0 %v2573
      %2592 = vmatprep.subr.mxu0 0.0
      %2593 = vmatpush1.msra.mxu0 %v2574
      %2594 = vmatprep.subr.mxu0 0.0
      %2595 = vmatpush1.msra.mxu0 %v2575
      %2596 = vmatprep.subr.mxu0 0.0
      %2597 = vmatpush1.msra.mxu0 %v2576
      %2598 = vmatprep.subr.mxu0 0.0
      %2599 = vmatpush1.msra.mxu0 %v2577
      %2600 = vmatprep.subr.mxu0 0.0
      %2601 = vmatpush1.msra.mxu0 %v2578
      %2602 = vmatprep.subr.mxu0 0.0
      %2603 = vmatpush1.msra.mxu0 %v2579
      %2604 = vmatprep.subr.mxu0 0.0
      %2605 = vmatpush1.msra.mxu0 %v2580
      %2606 = vmatprep.subr.mxu0 0.0
      %2607 = vmatpush1.msra.mxu0 %v2581
      %2608 = vmatprep.subr.mxu0 0.0
      %2609 = vmatpush1.msra.mxu0 %v2582
      %2610 = vmatprep.subr.mxu0 0.0
      %2611 = vmatpush1.msra.mxu0 %v2583
      %2612 = vmatprep.subr.mxu0 0.0
      %2613 = vmatpush1.msra.mxu0 %v2584
      %2614 = vmatprep.subr.mxu0 0.0
      %2615 = vmatpush1.msra.mxu0 %v2585
      %2616 = vmatprep.subr.mxu0 0.0
      %2617 = vmatpush1.msra.mxu0 %v2586
      %2618 = vmatprep.subr.mxu0 0.0
      %2619 = vmatpush1.msra.mxu0 %v2587
      %2620 = vmatprep.subr.mxu0 0.0
      %2621 = vmatpush1.msra.mxu0 0.0
      %2622 = vmatprep.subr.mxu0 0.0
      %2623 = vmatpush1.msra.mxu0 0.0
      %2624 = vmatprep.subr.mxu0 0.0
      %2625 = vmatpush1.msra.mxu0 0.0
      %2626 = vmatprep.subr.mxu0 0.0
      %2627 = vmatpush1.msra.mxu0 0.0
      %2628 = vmatprep.subr.mxu0 0.0
      %2629 = vmatpush1.msra.mxu0 0.0
      %2630 = vmatprep.subr.mxu0 0.0
      %2631 = vmatpush1.msra.mxu0 0.0
      %2632 = vmatprep.subr.mxu0 0.0
      %2633 = vmatpush1.msra.mxu0 0.0
      %2634 = vmatprep.subr.mxu0 0.0
      %2635 = vmatpush1.msra.mxu0 0.0
      %2636 = vmatprep.subr.mxu0 0.0
      %2637 = vmatpush1.msra.mxu0 0.0
      %2638 = vmatprep.subr.mxu0 0.0
      %2639 = vmatpush1.msra.mxu0 0.0
      %2640 = vmatprep.subr.mxu0 0.0
      %2641 = vmatpush1.msra.mxu0 0.0
      %2642 = vmatprep.subr.mxu0 0.0
      %2643 = vmatpush1.msra.mxu0 0.0
      %2644 = vmatprep.subr.mxu0 0.0
      %2645 = vmatpush1.msra.mxu0 0.0
      %2646 = vmatprep.subr.mxu0 0.0
      %2647 = vmatpush1.msra.mxu0 0.0
      %2648 = vmatprep.subr.mxu0 0.0
      %2649 = vmatpush1.msra.mxu0 0.0
      %2650 = vmatprep.subr.mxu0 0.0
      %2651 = vmatpush1.msra.mxu0 0.0
      %2652 = vmatprep.mubr.f32.mxu0 0.0
      %2653 = vmatmul.mubr.f32.gmra.mrb[0].mxu0 %v260
      %v2654 = vpop.f32.mrb[0].mxu0
      %v2655 = vadd.f32 0.0, %v2654
      %v2656 = vpop.f32.mrb[0].mxu0
      %2657 = vmatprep.mubr.f32.mxu0 0.0
      %2658 = vmatmul.mubr.f32.gmra.mrb[0].mxu0 %v261
      %v2659 = vpop.f32.mrb[0].mxu0
      %v2660 = vadd.f32 0.0, %v2659
      %v2661 = vpop.f32.mrb[0].mxu0
      %2662 = vmatprep.mubr.f32.mxu0 0.0
      %2663 = vmatmul.mubr.f32.gmra.mrb[0].mxu0 %v262
      %v2664 = vpop.f32.mrb[0].mxu0
      %v2665 = vadd.f32 0.0, %v2664
      %v2666 = vpop.f32.mrb[0].mxu0
      %2667 = vmatprep.mubr.f32.mxu0 0.0
      %2668 = vmatmul.mubr.f32.gmra.mrb[0].mxu0 %v263
      %v2669 = vpop.f32.mrb[0].mxu0
      %v2670 = vadd.f32 0.0, %v2669
      %v2671 = vpop.f32.mrb[0].mxu0
      %2672 = vmatprep.mubr.f32.mxu0 0.0
      %2673 = vmatmul.mubr.f32.gmra.mrb[0].mxu0 %v264
      %v2674 = vpop.f32.mrb[0].mxu0
      %v2675 = vadd.f32 0.0, %v2674
      %v2676 = vpop.f32.mrb[0].mxu0
      %2677 = vmatprep.mubr.f32.mxu0 0.0
      %2678 = vmatmul.mubr.f32.gmra.mrb[0].mxu0 %v265
      %v2679 = vpop.f32.mrb[0].mxu0
      %v2680 = vadd.f32 0.0, %v2679
      %v2681 = vpop.f32.mrb[0].mxu0
      %2682 = vmatprep.mubr.f32.mxu0 0.0
      %2683 = vmatmul.mubr.f32.gmra.mrb[0].mxu0 %v266
      %v2684 = vpop.f32.mrb[0].mxu0
      %v2685 = vadd.f32 0.0, %v2684
      %v2686 = vpop.f32.mrb[0].mxu0
      %2687 = vmatprep.mubr.f32.mxu0 0.0
      %2688 = vmatmul.mubr.f32.gmra.mrb[0].mxu0 %v267
      %v2689 = vpop.f32.mrb[0].mxu0
      %v2690 = vadd.f32 0.0, %v2689
      %v2691 = vpop.f32.mrb[0].mxu0
      %2692 = vmatprep.mubr.f32.mxu0 0.0
      %2693 = vmatmul.mubr.f32.gmra.mrb[0].mxu0 %v268
      %v2694 = vpop.f32.mrb[0].mxu0
      %v2695 = vadd.f32 0.0, %v2694
      %v2696 = vpop.f32.mrb[0].mxu0
      %2697 = vmatprep.mubr.f32.mxu0 0.0
      %2698 = vmatmul.mubr.f32.gmra.mrb[0].mxu0 %v269
      %v2699 = vpop.f32.mrb[0].mxu0
      %v2700 = vadd.f32 0.0, %v2699
      %v2701 = vpop.f32.mrb[0].mxu0
      %2702 = vmatprep.mubr.f32.mxu0 0.0
      %2703 = vmatmul.mubr.f32.gmra.mrb[0].mxu0 %v270
      %v2704 = vpop.f32.mrb[0].mxu0
      %v2705 = vadd.f32 0.0, %v2704
      %v2706 = vpop.f32.mrb[0].mxu0
      %2707 = vmatprep.mubr.f32.mxu0 0.0
      %2708 = vmatmul.mubr.f32.gmra.mrb[0].mxu0 %v271
      %v2709 = vpop.f32.mrb[0].mxu0
      %v2710 = vadd.f32 0.0, %v2709
      %v2711 = vpop.f32.mrb[0].mxu0
      %2712 = vmatprep.mubr.f32.mxu0 0.0
      %2713 = vmatmul.mubr.f32.gmra.mrb[0].mxu0 %v272
      %v2714 = vpop.f32.mrb[0].mxu0
      %v2715 = vadd.f32 0.0, %v2714
      %v2716 = vpop.f32.mrb[0].mxu0
      %2717 = vmatprep.mubr.f32.mxu0 0.0
      %2718 = vmatmul.mubr.f32.gmra.mrb[0].mxu0 %v273
      %v2719 = vpop.f32.mrb[0].mxu0
      %v2720 = vadd.f32 0.0, %v2719
      %v2721 = vpop.f32.mrb[0].mxu0
      %2722 = vmatprep.mubr.f32.mxu0 0.0
      %2723 = vmatmul.mubr.f32.gmra.mrb[0].mxu0 %v274
      %v2724 = vpop.f32.mrb[0].mxu0
      %v2725 = vadd.f32 0.0, %v2724
      %v2726 = vpop.f32.mrb[0].mxu0
      %2727 = vmatprep.mubr.f32.mxu0 0.0
      %2728 = vmatmul.mubr.f32.gmra.mrb[0].mxu0 %v275
      %v2729 = vpop.f32.mrb[0].mxu0
      %v2730 = vadd.f32 0.0, %v2729
      %v2731 = vpop.f32.mrb[0].mxu0
      %2732 = vdwg.mxu0
      %2734 = vset.pattern.permute.xlu0 32
      %2735 = vperm.xlu0 %2734, %v2655
      %v2736 = vpop.permute.xlu0 %2735
      %2739 = vset.pattern.permute.xlu0 32
      %2740 = vperm.xlu0 %2739, %v2660
      %v2741 = vpop.permute.xlu0 %2740
      %2744 = vset.pattern.permute.xlu0 32
      %2745 = vperm.xlu0 %2744, %v2665
      %v2746 = vpop.permute.xlu0 %2745
      %2749 = vset.pattern.permute.xlu0 32
      %2750 = vperm.xlu0 %2749, %v2670
      %v2751 = vpop.permute.xlu0 %2750
      %2754 = vset.pattern.permute.xlu0 32
      %2755 = vperm.xlu0 %2754, %v2675
      %v2756 = vpop.permute.xlu0 %2755
      %2759 = vset.pattern.permute.xlu0 32
      %2760 = vperm.xlu0 %2759, %v2680
      %v2761 = vpop.permute.xlu0 %2760
      %2764 = vset.pattern.permute.xlu0 32
      %2765 = vperm.xlu0 %2764, %v2685
      %v2766 = vpop.permute.xlu0 %2765
      %2769 = vset.pattern.permute.xlu0 32
      %2770 = vperm.xlu0 %2769, %v2690
      %v2771 = vpop.permute.xlu0 %2770
      %2774 = vset.pattern.permute.xlu0 32
      %2775 = vperm.xlu0 %2774, %v2695
      %v2776 = vpop.permute.xlu0 %2775
      %2779 = vset.pattern.permute.xlu0 32
      %2780 = vperm.xlu0 %2779, %v2700
      %v2781 = vpop.permute.xlu0 %2780
      %2784 = vset.pattern.permute.xlu0 32
      %2785 = vperm.xlu0 %2784, %v2705
      %v2786 = vpop.permute.xlu0 %2785
      %2789 = vset.pattern.permute.xlu0 32
      %2790 = vperm.xlu0 %2789, %v2710
      %v2791 = vpop.permute.xlu0 %2790
      %2794 = vset.pattern.permute.xlu0 32
      %2795 = vperm.xlu0 %2794, %v2715
      %v2796 = vpop.permute.xlu0 %2795
      %2799 = vset.pattern.permute.xlu0 32
      %2800 = vperm.xlu0 %2799, %v2720
      %v2801 = vpop.permute.xlu0 %2800
      %2804 = vset.pattern.permute.xlu0 32
      %2805 = vperm.xlu0 %2804, %v2725
      %v2806 = vpop.permute.xlu0 %2805
      %2809 = vset.pattern.permute.xlu0 32
      %2810 = vperm.xlu0 %2809, %v2730
      %v2811 = vpop.permute.xlu0 %2810
      %v2813 = vrcp.pop %v2736
      %v2814 = vmul.f32 %v2655, %v2813
      %v2815 = vrcp.pop %v2741
      %v2816 = vmul.f32 %v2660, %v2815
      %v2817 = vrcp.pop %v2746
      %v2818 = vmul.f32 %v2665, %v2817
      %v2819 = vrcp.pop %v2751
      %v2820 = vmul.f32 %v2670, %v2819
      %v2821 = vrcp.pop %v2756
      %v2822 = vmul.f32 %v2675, %v2821
      %v2823 = vrcp.pop %v2761
      %v2824 = vmul.f32 %v2680, %v2823
      %v2825 = vrcp.pop %v2766
      %v2826 = vmul.f32 %v2685, %v2825
      %v2827 = vrcp.pop %v2771
      %v2828 = vmul.f32 %v2690, %v2827
      %v2829 = vrcp.pop %v2776
      %v2830 = vmul.f32 %v2695, %v2829
      %v2831 = vrcp.pop %v2781
      %v2832 = vmul.f32 %v2700, %v2831
      %v2833 = vrcp.pop %v2786
      %v2834 = vmul.f32 %v2705, %v2833
      %v2835 = vrcp.pop %v2791
      %v2836 = vmul.f32 %v2710, %v2835
      %v2837 = vrcp.pop %v2796
      %v2838 = vmul.f32 %v2715, %v2837
      %v2839 = vrcp.pop %v2801
      %v2840 = vmul.f32 %v2720, %v2839
      %v2841 = vrcp.pop %v2806
      %v2842 = vmul.f32 %v2725, %v2841
      %v2843 = vrcp.pop %v2811
      %v2844 = vmul.f32 %v2730, %v2843
      %v2845 = vsel %vm300, %v2814, 0.0
      %2846 = vadd.xlane.f32.xlu0 %v2845
      %v2847 = vpop.xlane.xlu0 %2846
      %v2848 = vsel %vm300, %v2816, 0.0
      %2849 = vadd.xlane.f32.xlu0 %v2848
      %v2850 = vpop.xlane.xlu0 %2849
      %v2851 = vsel %vm300, %v2818, 0.0
      %2852 = vadd.xlane.f32.xlu0 %v2851
      %v2853 = vpop.xlane.xlu0 %2852
      %v2854 = vsel %vm300, %v2820, 0.0
      %2855 = vadd.xlane.f32.xlu0 %v2854
      %v2856 = vpop.xlane.xlu0 %2855
      %v2857 = vsel %vm300, %v2822, 0.0
      %2858 = vadd.xlane.f32.xlu0 %v2857
      %v2859 = vpop.xlane.xlu0 %2858
      %v2860 = vsel %vm300, %v2824, 0.0
      %2861 = vadd.xlane.f32.xlu0 %v2860
      %v2862 = vpop.xlane.xlu0 %2861
      %v2863 = vsel %vm300, %v2826, 0.0
      %2864 = vadd.xlane.f32.xlu0 %v2863
      %v2865 = vpop.xlane.xlu0 %2864
      %v2866 = vsel %vm300, %v2828, 0.0
      %2867 = vadd.xlane.f32.xlu0 %v2866
      %v2868 = vpop.xlane.xlu0 %2867
      %v2869 = vsel %vm300, %v2830, 0.0
      %2870 = vadd.xlane.f32.xlu0 %v2869
      %v2871 = vpop.xlane.xlu0 %2870
      %v2872 = vsel %vm300, %v2832, 0.0
      %2873 = vadd.xlane.f32.xlu0 %v2872
      %v2874 = vpop.xlane.xlu0 %2873
      %v2875 = vsel %vm300, %v2834, 0.0
      %2876 = vadd.xlane.f32.xlu0 %v2875
      %v2877 = vpop.xlane.xlu0 %2876
      %v2878 = vsel %vm300, %v2836, 0.0
      %2879 = vadd.xlane.f32.xlu0 %v2878
      %v2880 = vpop.xlane.xlu0 %2879
      %v2881 = vsel %vm300, %v2838, 0.0
      %2882 = vadd.xlane.f32.xlu0 %v2881
      %v2883 = vpop.xlane.xlu0 %2882
      %v2884 = vsel %vm300, %v2840, 0.0
      %2885 = vadd.xlane.f32.xlu0 %v2884
      %v2886 = vpop.xlane.xlu0 %2885
      %v2887 = vsel %vm300, %v2842, 0.0
      %2888 = vadd.xlane.f32.xlu0 %v2887
      %v2889 = vpop.xlane.xlu0 %2888
      %v2890 = vsel %vm300, %v2844, 0.0
      %2891 = vadd.xlane.f32.xlu0 %v2890
      %v2892 = vpop.xlane.xlu0 %2891
      %v2893 = vrcp.pop 32.0
      %v2894 = vmul.f32 %v2847, %v2893
      %v2895 = vmul.f32 %v2850, %v2893
      %v2896 = vmul.f32 %v2853, %v2893
      %v2897 = vmul.f32 %v2856, %v2893
      %v2898 = vmul.f32 %v2859, %v2893
      %v2899 = vmul.f32 %v2862, %v2893
      %v2900 = vmul.f32 %v2865, %v2893
      %v2901 = vmul.f32 %v2868, %v2893
      %v2902 = vmul.f32 %v2871, %v2893
      %v2903 = vmul.f32 %v2874, %v2893
      %v2904 = vmul.f32 %v2877, %v2893
      %v2905 = vmul.f32 %v2880, %v2893
      %v2906 = vmul.f32 %v2883, %v2893
      %v2907 = vmul.f32 %v2886, %v2893
      %v2908 = vmul.f32 %v2889, %v2893
      %v2909 = vmul.f32 %v2892, %v2893
      %v2910 = vsub.f32 %v2814, %v2894
      %v2911 = vsub.f32 %v2816, %v2895
      %v2912 = vsub.f32 %v2818, %v2896
      %v2913 = vsub.f32 %v2820, %v2897
      %v2914 = vsub.f32 %v2822, %v2898
      %v2915 = vsub.f32 %v2824, %v2899
      %v2916 = vsub.f32 %v2826, %v2900
      %v2917 = vsub.f32 %v2828, %v2901
      %v2918 = vsub.f32 %v2830, %v2902
      %v2919 = vsub.f32 %v2832, %v2903
      %v2920 = vsub.f32 %v2834, %v2904
      %v2921 = vsub.f32 %v2836, %v2905
      %v2922 = vsub.f32 %v2838, %v2906
      %v2923 = vsub.f32 %v2840, %v2907
      %v2924 = vsub.f32 %v2842, %v2908
      %v2925 = vsub.f32 %v2844, %v2909
      %v2926 = vmul.f32 %v2910, %v2910
      %v2927 = vmul.f32 %v2911, %v2911
      %v2928 = vmul.f32 %v2912, %v2912
      %v2929 = vmul.f32 %v2913, %v2913
      %v2930 = vmul.f32 %v2914, %v2914
      %v2931 = vmul.f32 %v2915, %v2915
      %v2932 = vmul.f32 %v2916, %v2916
      %v2933 = vmul.f32 %v2917, %v2917
      %v2934 = vmul.f32 %v2918, %v2918
      %v2935 = vmul.f32 %v2919, %v2919
      %v2936 = vmul.f32 %v2920, %v2920
      %v2937 = vmul.f32 %v2921, %v2921
      %v2938 = vmul.f32 %v2922, %v2922
      %v2939 = vmul.f32 %v2923, %v2923
      %v2940 = vmul.f32 %v2924, %v2924
      %v2941 = vmul.f32 %v2925, %v2925
      %v2942 = vsel %vm300, %v2926, 0.0
      %2943 = vadd.xlane.f32.xlu0 %v2942
      %v2944 = vpop.xlane.xlu0 %2943
      %v2945 = vsel %vm300, %v2927, 0.0
      %2946 = vadd.xlane.f32.xlu0 %v2945
      %v2947 = vpop.xlane.xlu0 %2946
      %v2948 = vsel %vm300, %v2928, 0.0
      %2949 = vadd.xlane.f32.xlu0 %v2948
      %v2950 = vpop.xlane.xlu0 %2949
      %v2951 = vsel %vm300, %v2929, 0.0
      %2952 = vadd.xlane.f32.xlu0 %v2951
      %v2953 = vpop.xlane.xlu0 %2952
      %v2954 = vsel %vm300, %v2930, 0.0
      %2955 = vadd.xlane.f32.xlu0 %v2954
      %v2956 = vpop.xlane.xlu0 %2955
      %v2957 = vsel %vm300, %v2931, 0.0
      %2958 = vadd.xlane.f32.xlu0 %v2957
      %v2959 = vpop.xlane.xlu0 %2958
      %v2960 = vsel %vm300, %v2932, 0.0
      %2961 = vadd.xlane.f32.xlu0 %v2960
      %v2962 = vpop.xlane.xlu0 %2961
      %v2963 = vsel %vm300, %v2933, 0.0
      %2964 = vadd.xlane.f32.xlu0 %v2963
      %v2965 = vpop.xlane.xlu0 %2964
      %v2966 = vsel %vm300, %v2934, 0.0
      %2967 = vadd.xlane.f32.xlu0 %v2966
      %v2968 = vpop.xlane.xlu0 %2967
      %v2969 = vsel %vm300, %v2935, 0.0
      %2970 = vadd.xlane.f32.xlu0 %v2969
      %v2971 = vpop.xlane.xlu0 %2970
      %v2972 = vsel %vm300, %v2936, 0.0
      %2973 = vadd.xlane.f32.xlu0 %v2972
      %v2974 = vpop.xlane.xlu0 %2973
      %v2975 = vsel %vm300, %v2937, 0.0
      %2976 = vadd.xlane.f32.xlu0 %v2975
      %v2977 = vpop.xlane.xlu0 %2976
      %v2978 = vsel %vm300, %v2938, 0.0
      %2979 = vadd.xlane.f32.xlu0 %v2978
      %v2980 = vpop.xlane.xlu0 %2979
      %v2981 = vsel %vm300, %v2939, 0.0
      %2982 = vadd.xlane.f32.xlu0 %v2981
      %v2983 = vpop.xlane.xlu0 %2982
      %v2984 = vsel %vm300, %v2940, 0.0
      %2985 = vadd.xlane.f32.xlu0 %v2984
      %v2986 = vpop.xlane.xlu0 %2985
      %v2987 = vsel %vm300, %v2941, 0.0
      %2988 = vadd.xlane.f32.xlu0 %v2987
      %v2989 = vpop.xlane.xlu0 %2988
      %v2990 = vmul.f32 %v2944, %v2893
      %v2991 = vmul.f32 %v2947, %v2893
      %v2992 = vmul.f32 %v2950, %v2893
      %v2993 = vmul.f32 %v2953, %v2893
      %v2994 = vmul.f32 %v2956, %v2893
      %v2995 = vmul.f32 %v2959, %v2893
      %v2996 = vmul.f32 %v2962, %v2893
      %v2997 = vmul.f32 %v2965, %v2893
      %v2998 = vmul.f32 %v2968, %v2893
      %v2999 = vmul.f32 %v2971, %v2893
      %v3000 = vmul.f32 %v2974, %v2893
      %v3001 = vmul.f32 %v2977, %v2893
      %v3002 = vmul.f32 %v2980, %v2893
      %v3003 = vmul.f32 %v2983, %v2893
      %v3004 = vmul.f32 %v2986, %v2893
      %v3005 = vmul.f32 %v2989, %v2893
      %v3006 = vadd.f32 %v2990, 1e-05
      %v3007 = vadd.f32 %v2991, 1e-05
      %v3008 = vadd.f32 %v2992, 1e-05
      %v3009 = vadd.f32 %v2993, 1e-05
      %v3010 = vadd.f32 %v2994, 1e-05
      %v3011 = vadd.f32 %v2995, 1e-05
      %v3012 = vadd.f32 %v2996, 1e-05
      %v3013 = vadd.f32 %v2997, 1e-05
      %v3014 = vadd.f32 %v2998, 1e-05
      %v3015 = vadd.f32 %v2999, 1e-05
      %v3016 = vadd.f32 %v3000, 1e-05
      %v3017 = vadd.f32 %v3001, 1e-05
      %v3018 = vadd.f32 %v3002, 1e-05
      %v3019 = vadd.f32 %v3003, 1e-05
      %v3020 = vadd.f32 %v3004, 1e-05
      %v3021 = vadd.f32 %v3005, 1e-05
      %v3022 = vrsqrt.pop %v3006
      %v3023 = vrsqrt.pop %v3007
      %v3024 = vrsqrt.pop %v3008
      %v3025 = vrsqrt.pop %v3009
      %v3026 = vrsqrt.pop %v3010
      %v3027 = vrsqrt.pop %v3011
      %v3028 = vrsqrt.pop %v3012
      %v3029 = vrsqrt.pop %v3013
      %v3030 = vrsqrt.pop %v3014
      %v3031 = vrsqrt.pop %v3015
      %v3032 = vrsqrt.pop %v3016
      %v3033 = vrsqrt.pop %v3017
      %v3034 = vrsqrt.pop %v3018
      %v3035 = vrsqrt.pop %v3019
      %v3036 = vrsqrt.pop %v3020
      %v3037 = vrsqrt.pop %v3021
      %v3038 = vmul.f32 %v2910, %v3022
      %v3039 = vmul.f32 %v2911, %v3023
      %v3040 = vmul.f32 %v2912, %v3024
      %v3041 = vmul.f32 %v2913, %v3025
      %v3042 = vmul.f32 %v2914, %v3026
      %v3043 = vmul.f32 %v2915, %v3027
      %v3044 = vmul.f32 %v2916, %v3028
      %v3045 = vmul.f32 %v2917, %v3029
      %v3046 = vmul.f32 %v2918, %v3030
      %v3047 = vmul.f32 %v2919, %v3031
      %v3048 = vmul.f32 %v2920, %v3032
      %v3049 = vmul.f32 %v2921, %v3033
      %v3050 = vmul.f32 %v2922, %v3034
      %v3051 = vmul.f32 %v2923, %v3035
      %v3052 = vmul.f32 %v2924, %v3036
      %v3053 = vmul.f32 %v2925, %v3037
      %v3055 = vlaneseq
      %v3056 = vshrl.u32 %v3055, 7
      %v3057 = vsub.s32 0, %v3056
      %v3058 = vrot.slane %v276, %v3057
      %v3060 = vmul.f32 %v3038, %v3058
      %v3061 = vmul.f32 %v3039, %v3058
      %v3062 = vmul.f32 %v3040, %v3058
      %v3063 = vmul.f32 %v3041, %v3058
      %v3064 = vmul.f32 %v3042, %v3058
      %v3065 = vmul.f32 %v3043, %v3058
      %v3066 = vmul.f32 %v3044, %v3058
      %v3067 = vmul.f32 %v3045, %v3058
      %v3068 = vmul.f32 %v3046, %v3058
      %v3069 = vmul.f32 %v3047, %v3058
      %v3070 = vmul.f32 %v3048, %v3058
      %v3071 = vmul.f32 %v3049, %v3058
      %v3072 = vmul.f32 %v3050, %v3058
      %v3073 = vmul.f32 %v3051, %v3058
      %v3074 = vmul.f32 %v3052, %v3058
      %v3075 = vmul.f32 %v3053, %v3058
      %v3077 = vlaneseq
      %v3078 = vshrl.u32 %v3077, 7
      %v3079 = vsub.s32 0, %v3078
      %v3080 = vrot.slane %v277, %v3079
      %v3082 = vadd.f32 %v3060, %v3080
      %v3083 = vadd.f32 %v3061, %v3080
      %v3084 = vadd.f32 %v3062, %v3080
      %v3085 = vadd.f32 %v3063, %v3080
      %v3086 = vadd.f32 %v3064, %v3080
      %v3087 = vadd.f32 %v3065, %v3080
      %v3088 = vadd.f32 %v3066, %v3080
      %v3089 = vadd.f32 %v3067, %v3080
      %v3090 = vadd.f32 %v3068, %v3080
      %v3091 = vadd.f32 %v3069, %v3080
      %v3092 = vadd.f32 %v3070, %v3080
      %v3093 = vadd.f32 %v3071, %v3080
      %v3094 = vadd.f32 %v3072, %v3080
      %v3095 = vadd.f32 %v3073, %v3080
      %v3096 = vadd.f32 %v3074, %v3080
      %v3097 = vadd.f32 %v3075, %v3080
      %3098 = vst.msk [vmem:[%s253] sm:$0xff] %vm300, %v3082
      %3099 = vst.msk [vmem:[%s253 + $0x8] sm:$0xff] %vm300, %v3083
      %3100 = vst.msk [vmem:[%s253 + $0x10] sm:$0xff] %vm300, %v3084
      %3101 = vst.msk [vmem:[%s253 + $0x18] sm:$0xff] %vm300, %v3085
      %3102 = vst.msk [vmem:[%s253 + $0x20] sm:$0xff] %vm300, %v3086
      %3103 = vst.msk [vmem:[%s253 + $0x28] sm:$0xff] %vm300, %v3087
      %3104 = vst.msk [vmem:[%s253 + $0x30] sm:$0xff] %vm300, %v3088
      %3105 = vst.msk [vmem:[%s253 + $0x38] sm:$0xff] %vm300, %v3089
      %3106 = vst.msk [vmem:[%s253 + $0x40] sm:$0xff] %vm300, %v3090
      %3107 = vst.msk [vmem:[%s253 + $0x48] sm:$0xff] %vm300, %v3091
      %3108 = vst.msk [vmem:[%s253 + $0x50] sm:$0xff] %vm300, %v3092
      %3109 = vst.msk [vmem:[%s253 + $0x58] sm:$0xff] %vm300, %v3093
      %3110 = vst.msk [vmem:[%s253 + $0x60] sm:$0xff] %vm300, %v3094
      %3111 = vst.msk [vmem:[%s253 + $0x68] sm:$0xff] %vm300, %v3095
      %3112 = vst.msk [vmem:[%s253 + $0x70] sm:$0xff] %vm300, %v3096
      %3113 = vst.msk [vmem:[%s253 + $0x78] sm:$0xff] %vm300, %v3097
      %v3114 = vld [vmem:[%s247 + $0x80] sm:$0xff]
      %v3115 = vld [vmem:[%s247 + $0x88] sm:$0xff]
      %v3116 = vld [vmem:[%s247 + $0x90] sm:$0xff]
      %v3117 = vld [vmem:[%s247 + $0x98] sm:$0xff]
      %v3118 = vld [vmem:[%s247 + $0xa0] sm:$0xff]
      %v3119 = vld [vmem:[%s247 + $0xa8] sm:$0xff]
      %v3120 = vld [vmem:[%s247 + $0xb0] sm:$0xff]
      %v3121 = vld [vmem:[%s247 + $0xb8] sm:$0xff]
      %v3122 = vld [vmem:[%s247 + $0xc0] sm:$0xff]
      %v3123 = vld [vmem:[%s247 + $0xc8] sm:$0xff]
      %v3124 = vld [vmem:[%s247 + $0xd0] sm:$0xff]
      %v3125 = vld [vmem:[%s247 + $0xd8] sm:$0xff]
      %v3126 = vld [vmem:[%s247 + $0xe0] sm:$0xff]
      %v3127 = vld [vmem:[%s247 + $0xe8] sm:$0xff]
      %v3128 = vld [vmem:[%s247 + $0xf0] sm:$0xff]
      %v3129 = vld [vmem:[%s247 + $0xf8] sm:$0xff]
      %v3131 = vsel %vm300, %v3114, 0
      %v3134 = vsel %vm300, %v3115, 0
      %v3137 = vsel %vm300, %v3116, 0
      %v3140 = vsel %vm300, %v3117, 0
      %v3143 = vsel %vm300, %v3118, 0
      %v3146 = vsel %vm300, %v3119, 0
      %v3149 = vsel %vm300, %v3120, 0
      %v3152 = vsel %vm300, %v3121, 0
      %v3155 = vsel %vm300, %v3122, 0
      %v3158 = vsel %vm300, %v3123, 0
      %v3161 = vsel %vm300, %v3124, 0
      %v3164 = vsel %vm300, %v3125, 0
      %v3167 = vsel %vm300, %v3126, 0
      %v3170 = vsel %vm300, %v3127, 0
      %v3173 = vsel %vm300, %v3128, 0
      %v3176 = vsel %vm300, %v3129, 0
      %3178 = vmatprep.subr.mxu0 0.0
      %3179 = vmatpush1.msra.mxu0 %v255
      %3180 = vmatprep.subr.mxu0 0.0
      %3181 = vmatpush1.msra.mxu0 %v256
      %3182 = vmatprep.subr.mxu0 0.0
      %3183 = vmatpush1.msra.mxu0 %v257
      %3184 = vmatprep.subr.mxu0 0.0
      %3185 = vmatpush1.msra.mxu0 %v258
      %3186 = vmatprep.subr.mxu0 0.0
      %3187 = vmatpush1.msra.mxu0 0.0
      %3188 = vmatprep.subr.mxu0 0.0
      %3189 = vmatpush1.msra.mxu0 0.0
      %3190 = vmatprep.subr.mxu0 0.0
      %3191 = vmatpush1.msra.mxu0 0.0
      %3192 = vmatprep.subr.mxu0 0.0
      %3193 = vmatpush1.msra.mxu0 0.0
      %3194 = vmatprep.subr.mxu0 0.0
      %3195 = vmatpush1.msra.mxu0 0.0
      %3196 = vmatprep.subr.mxu0 0.0
      %3197 = vmatpush1.msra.mxu0 0.0
      %3198 = vmatprep.subr.mxu0 0.0
      %3199 = vmatpush1.msra.mxu0 0.0
      %3200 = vmatprep.subr.mxu0 0.0
      %3201 = vmatpush1.msra.mxu0 0.0
      %3202 = vmatprep.subr.mxu0 0.0
      %3203 = vmatpush1.msra.mxu0 0.0
      %3204 = vmatprep.subr.mxu0 0.0
      %3205 = vmatpush1.msra.mxu0 0.0
      %3206 = vmatprep.subr.mxu0 0.0
      %3207 = vmatpush1.msra.mxu0 0.0
      %3208 = vmatprep.subr.mxu0 0.0
      %3209 = vmatpush1.msra.mxu0 0.0
      %3210 = vmatprep.subr.mxu0 0.0
      %3211 = vmatpush1.msra.mxu0 0.0
      %3212 = vmatprep.subr.mxu0 0.0
      %3213 = vmatpush1.msra.mxu0 0.0
      %3214 = vmatprep.subr.mxu0 0.0
      %3215 = vmatpush1.msra.mxu0 0.0
      %3216 = vmatprep.subr.mxu0 0.0
      %3217 = vmatpush1.msra.mxu0 0.0
      %3218 = vmatprep.subr.mxu0 0.0
      %3219 = vmatpush1.msra.mxu0 0.0
      %3220 = vmatprep.subr.mxu0 0.0
      %3221 = vmatpush1.msra.mxu0 0.0
      %3222 = vmatprep.subr.mxu0 0.0
      %3223 = vmatpush1.msra.mxu0 0.0
      %3224 = vmatprep.subr.mxu0 0.0
      %3225 = vmatpush1.msra.mxu0 0.0
      %3226 = vmatprep.subr.mxu0 0.0
      %3227 = vmatpush1.msra.mxu0 0.0
      %3228 = vmatprep.subr.mxu0 0.0
      %3229 = vmatpush1.msra.mxu0 0.0
      %3230 = vmatprep.subr.mxu0 0.0
      %3231 = vmatpush1.msra.mxu0 0.0
      %3232 = vmatprep.subr.mxu0 0.0
      %3233 = vmatpush1.msra.mxu0 0.0
      %3234 = vmatprep.subr.mxu0 0.0
      %3235 = vmatpush1.msra.mxu0 0.0
      %3236 = vmatprep.subr.mxu0 0.0
      %3237 = vmatpush1.msra.mxu0 0.0
      %3238 = vmatprep.subr.mxu0 0.0
      %3239 = vmatpush1.msra.mxu0 0.0
      %3240 = vmatprep.subr.mxu0 0.0
      %3241 = vmatpush1.msra.mxu0 0.0
      %3242 = vmatprep.mubr.f32.mxu0 0.0
      %3243 = vmatmul.mubr.f32.gmra.mrb[0].mxu0 %v3131
      %v3244 = vpop.f32.mrb[0].mxu0
      %v3245 = vadd.f32 %v298, %v3244
      %v3246 = vpop.f32.mrb[0].mxu0
      %3247 = vmatprep.mubr.f32.mxu0 0.0
      %3248 = vmatmul.mubr.f32.gmra.mrb[0].mxu0 %v3134
      %v3249 = vpop.f32.mrb[0].mxu0
      %v3250 = vadd.f32 %v298, %v3249
      %v3251 = vpop.f32.mrb[0].mxu0
      %3252 = vmatprep.mubr.f32.mxu0 0.0
      %3253 = vmatmul.mubr.f32.gmra.mrb[0].mxu0 %v3137
      %v3254 = vpop.f32.mrb[0].mxu0
      %v3255 = vadd.f32 %v298, %v3254
      %v3256 = vpop.f32.mrb[0].mxu0
      %3257 = vmatprep.mubr.f32.mxu0 0.0
      %3258 = vmatmul.mubr.f32.gmra.mrb[0].mxu0 %v3140
      %v3259 = vpop.f32.mrb[0].mxu0
      %v3260 = vadd.f32 %v298, %v3259
      %v3261 = vpop.f32.mrb[0].mxu0
      %3262 = vmatprep.mubr.f32.mxu0 0.0
      %3263 = vmatmul.mubr.f32.gmra.mrb[0].mxu0 %v3143
      %v3264 = vpop.f32.mrb[0].mxu0
      %v3265 = vadd.f32 %v298, %v3264
      %v3266 = vpop.f32.mrb[0].mxu0
      %3267 = vmatprep.mubr.f32.mxu0 0.0
      %3268 = vmatmul.mubr.f32.gmra.mrb[0].mxu0 %v3146
      %v3269 = vpop.f32.mrb[0].mxu0
      %v3270 = vadd.f32 %v298, %v3269
      %v3271 = vpop.f32.mrb[0].mxu0
      %3272 = vmatprep.mubr.f32.mxu0 0.0
      %3273 = vmatmul.mubr.f32.gmra.mrb[0].mxu0 %v3149
      %v3274 = vpop.f32.mrb[0].mxu0
      %v3275 = vadd.f32 %v298, %v3274
      %v3276 = vpop.f32.mrb[0].mxu0
      %3277 = vmatprep.mubr.f32.mxu0 0.0
      %3278 = vmatmul.mubr.f32.gmra.mrb[0].mxu0 %v3152
      %v3279 = vpop.f32.mrb[0].mxu0
      %v3280 = vadd.f32 %v298, %v3279
      %v3281 = vpop.f32.mrb[0].mxu0
      %3282 = vmatprep.mubr.f32.mxu0 0.0
      %3283 = vmatmul.mubr.f32.gmra.mrb[0].mxu0 %v3155
      %v3284 = vpop.f32.mrb[0].mxu0
      %v3285 = vadd.f32 %v298, %v3284
      %v3286 = vpop.f32.mrb[0].mxu0
      %3287 = vmatprep.mubr.f32.mxu0 0.0
      %3288 = vmatmul.mubr.f32.gmra.mrb[0].mxu0 %v3158
      %v3289 = vpop.f32.mrb[0].mxu0
      %v3290 = vadd.f32 %v298, %v3289
      %v3291 = vpop.f32.mrb[0].mxu0
      %3292 = vmatprep.mubr.f32.mxu0 0.0
      %3293 = vmatmul.mubr.f32.gmra.mrb[0].mxu0 %v3161
      %v3294 = vpop.f32.mrb[0].mxu0
      %v3295 = vadd.f32 %v298, %v3294
      %v3296 = vpop.f32.mrb[0].mxu0
      %3297 = vmatprep.mubr.f32.mxu0 0.0
      %3298 = vmatmul.mubr.f32.gmra.mrb[0].mxu0 %v3164
      %v3299 = vpop.f32.mrb[0].mxu0
      %v3300 = vadd.f32 %v298, %v3299
      %v3301 = vpop.f32.mrb[0].mxu0
      %3302 = vmatprep.mubr.f32.mxu0 0.0
      %3303 = vmatmul.mubr.f32.gmra.mrb[0].mxu0 %v3167
      %v3304 = vpop.f32.mrb[0].mxu0
      %v3305 = vadd.f32 %v298, %v3304
      %v3306 = vpop.f32.mrb[0].mxu0
      %3307 = vmatprep.mubr.f32.mxu0 0.0
      %3308 = vmatmul.mubr.f32.gmra.mrb[0].mxu0 %v3170
      %v3309 = vpop.f32.mrb[0].mxu0
      %v3310 = vadd.f32 %v298, %v3309
      %v3311 = vpop.f32.mrb[0].mxu0
      %3312 = vmatprep.mubr.f32.mxu0 0.0
      %3313 = vmatmul.mubr.f32.gmra.mrb[0].mxu0 %v3173
      %v3314 = vpop.f32.mrb[0].mxu0
      %v3315 = vadd.f32 %v298, %v3314
      %v3316 = vpop.f32.mrb[0].mxu0
      %3317 = vmatprep.mubr.f32.mxu0 0.0
      %3318 = vmatmul.mubr.f32.gmra.mrb[0].mxu0 %v3176
      %v3319 = vpop.f32.mrb[0].mxu0
      %v3320 = vadd.f32 %v298, %v3319
      %v3321 = vpop.f32.mrb[0].mxu0
      %3322 = vdwg.mxu0
      %v3323 = vsel %vm494, %v3245, -inf
      %v3324 = vsel %vm494, %v3250, -inf
      %v3325 = vsel %vm494, %v3255, -inf
      %v3326 = vsel %vm494, %v3260, -inf
      %v3327 = vsel %vm494, %v3265, -inf
      %v3328 = vmax.f32 %v3323, %v3327
      %v3329 = vsel %vm494, %v3270, -inf
      %v3330 = vmax.f32 %v3324, %v3329
      %v3331 = vsel %vm494, %v3275, -inf
      %v3332 = vmax.f32 %v3325, %v3331
      %v3333 = vsel %vm494, %v3280, -inf
      %v3334 = vmax.f32 %v3326, %v3333
      %v3335 = vsel %vm494, %v3285, -inf
      %v3336 = vmax.f32 %v3328, %v3335
      %v3337 = vsel %vm494, %v3290, -inf
      %v3338 = vmax.f32 %v3330, %v3337
      %v3339 = vsel %vm494, %v3295, -inf
      %v3340 = vmax.f32 %v3332, %v3339
      %v3341 = vsel %vm494, %v3300, -inf
      %v3342 = vmax.f32 %v3334, %v3341
      %v3343 = vsel %vm494, %v3305, -inf
      %v3344 = vmax.f32 %v3336, %v3343
      %v3345 = vsel %vm494, %v3310, -inf
      %v3346 = vmax.f32 %v3338, %v3345
      %v3347 = vsel %vm494, %v3315, -inf
      %v3348 = vmax.f32 %v3340, %v3347
      %v3349 = vsel %vm494, %v3320, -inf
      %v3350 = vmax.f32 %v3342, %v3349
      %v3351 = vmax.f32 %v3344, %v3346
      %v3352 = vmax.f32 %v3348, %v3350
      %v3353 = vmax.f32 %v3351, %v3352
      %3354 = vmax.xlane.f32.xlu0 %v3353
      %v3355 = vpop.xlane.xlu0 %3354
      %v3356 = vrot.slane %v3355, 4
      %v3357 = vmax.f32 %v3355, %v3356
      %v3358 = vrot.slane %v3357, 2
      %v3359 = vmax.f32 %v3357, %v3358
      %v3360 = vrot.slane %v3359, 1
      %v3361 = vmax.f32 %v3359, %v3360
      %s3362 = vtos %v3361
      %v3363 = vstv %s3362
      %v3364 = vsub.f32 %v3245, %v3363
      %v3365 = vsub.f32 %v3250, %v3363
      %v3366 = vsub.f32 %v3255, %v3363
      %v3367 = vsub.f32 %v3260, %v3363
      %v3368 = vsub.f32 %v3265, %v3363
      %v3369 = vsub.f32 %v3270, %v3363
      %v3370 = vsub.f32 %v3275, %v3363
      %v3371 = vsub.f32 %v3280, %v3363
      %v3372 = vsub.f32 %v3285, %v3363
      %v3373 = vsub.f32 %v3290, %v3363
      %v3374 = vsub.f32 %v3295, %v3363
      %v3375 = vsub.f32 %v3300, %v3363
      %v3376 = vsub.f32 %v3305, %v3363
      %v3377 = vsub.f32 %v3310, %v3363
      %v3378 = vsub.f32 %v3315, %v3363
      %v3379 = vsub.f32 %v3320, %v3363
      %v3380 = vmul.f32 %v3364, 1.442695
      %v3381 = vpow.pop %v3380
      %v3382 = vmul.f32 %v3365, 1.442695
      %v3383 = vpow.pop %v3382
      %v3384 = vmul.f32 %v3366, 1.442695
      %v3385 = vpow.pop %v3384
      %v3386 = vmul.f32 %v3367, 1.442695
      %v3387 = vpow.pop %v3386
      %v3388 = vmul.f32 %v3368, 1.442695
      %v3389 = vpow.pop %v3388
      %v3390 = vmul.f32 %v3369, 1.442695
      %v3391 = vpow.pop %v3390
      %v3392 = vmul.f32 %v3370, 1.442695
      %v3393 = vpow.pop %v3392
      %v3394 = vmul.f32 %v3371, 1.442695
      %v3395 = vpow.pop %v3394
      %v3396 = vmul.f32 %v3372, 1.442695
      %v3397 = vpow.pop %v3396
      %v3398 = vmul.f32 %v3373, 1.442695
      %v3399 = vpow.pop %v3398
      %v3400 = vmul.f32 %v3374, 1.442695
      %v3401 = vpow.pop %v3400
      %v3402 = vmul.f32 %v3375, 1.442695
      %v3403 = vpow.pop %v3402
      %v3404 = vmul.f32 %v3376, 1.442695
      %v3405 = vpow.pop %v3404
      %v3406 = vmul.f32 %v3377, 1.442695
      %v3407 = vpow.pop %v3406
      %v3408 = vmul.f32 %v3378, 1.442695
      %v3409 = vpow.pop %v3408
      %v3410 = vmul.f32 %v3379, 1.442695
      %v3411 = vpow.pop %v3410
      %3413 = vset.pattern.permute.xlu0 33
      %3414 = vperm.xlu0 %3413, %v3381
      %v3415 = vpop.permute.xlu0 %3414
      %3418 = vset.pattern.permute.xlu0 33
      %3419 = vperm.xlu0 %3418, %v3383
      %v3420 = vpop.permute.xlu0 %3419
      %3423 = vset.pattern.permute.xlu0 33
      %3424 = vperm.xlu0 %3423, %v3385
      %v3425 = vpop.permute.xlu0 %3424
      %3428 = vset.pattern.permute.xlu0 33
      %3429 = vperm.xlu0 %3428, %v3387
      %v3430 = vpop.permute.xlu0 %3429
      %3433 = vset.pattern.permute.xlu0 33
      %3434 = vperm.xlu0 %3433, %v3389
      %v3435 = vpop.permute.xlu0 %3434
      %3438 = vset.pattern.permute.xlu0 33
      %3439 = vperm.xlu0 %3438, %v3391
      %v3440 = vpop.permute.xlu0 %3439
      %3443 = vset.pattern.permute.xlu0 33
      %3444 = vperm.xlu0 %3443, %v3393
      %v3445 = vpop.permute.xlu0 %3444
      %3448 = vset.pattern.permute.xlu0 33
      %3449 = vperm.xlu0 %3448, %v3395
      %v3450 = vpop.permute.xlu0 %3449
      %3453 = vset.pattern.permute.xlu0 33
      %3454 = vperm.xlu0 %3453, %v3397
      %v3455 = vpop.permute.xlu0 %3454
      %3458 = vset.pattern.permute.xlu0 33
      %3459 = vperm.xlu0 %3458, %v3399
      %v3460 = vpop.permute.xlu0 %3459
      %3463 = vset.pattern.permute.xlu0 33
      %3464 = vperm.xlu0 %3463, %v3401
      %v3465 = vpop.permute.xlu0 %3464
      %3468 = vset.pattern.permute.xlu0 33
      %3469 = vperm.xlu0 %3468, %v3403
      %v3470 = vpop.permute.xlu0 %3469
      %3473 = vset.pattern.permute.xlu0 33
      %3474 = vperm.xlu0 %3473, %v3405
      %v3475 = vpop.permute.xlu0 %3474
      %3478 = vset.pattern.permute.xlu0 33
      %3479 = vperm.xlu0 %3478, %v3407
      %v3480 = vpop.permute.xlu0 %3479
      %3483 = vset.pattern.permute.xlu0 33
      %3484 = vperm.xlu0 %3483, %v3409
      %v3485 = vpop.permute.xlu0 %3484
      %3488 = vset.pattern.permute.xlu0 33
      %3489 = vperm.xlu0 %3488, %v3411
      %v3490 = vpop.permute.xlu0 %3489
      %v3492 = vmul.f32 %v3415, %v3245
      %v3493 = vmul.f32 %v3420, %v3250
      %v3494 = vmul.f32 %v3425, %v3255
      %v3495 = vmul.f32 %v3430, %v3260
      %v3496 = vmul.f32 %v3435, %v3265
      %v3497 = vmul.f32 %v3440, %v3270
      %v3498 = vmul.f32 %v3445, %v3275
      %v3499 = vmul.f32 %v3450, %v3280
      %v3500 = vmul.f32 %v3455, %v3285
      %v3501 = vmul.f32 %v3460, %v3290
      %v3502 = vmul.f32 %v3465, %v3295
      %v3503 = vmul.f32 %v3470, %v3300
      %v3504 = vmul.f32 %v3475, %v3305
      %v3505 = vmul.f32 %v3480, %v3310
      %v3506 = vmul.f32 %v3485, %v3315
      %v3507 = vmul.f32 %v3490, %v3320
      %3508 = vmatprep.subr.mxu0 0.0
      %3509 = vmatpush1.msra.mxu0 %v3492
      %3510 = vmatprep.subr.mxu0 0.0
      %3511 = vmatpush1.msra.mxu0 %v3493
      %3512 = vmatprep.subr.mxu0 0.0
      %3513 = vmatpush1.msra.mxu0 %v3494
      %3514 = vmatprep.subr.mxu0 0.0
      %3515 = vmatpush1.msra.mxu0 %v3495
      %3516 = vmatprep.subr.mxu0 0.0
      %3517 = vmatpush1.msra.mxu0 %v3496
      %3518 = vmatprep.subr.mxu0 0.0
      %3519 = vmatpush1.msra.mxu0 %v3497
      %3520 = vmatprep.subr.mxu0 0.0
      %3521 = vmatpush1.msra.mxu0 %v3498
      %3522 = vmatprep.subr.mxu0 0.0
      %3523 = vmatpush1.msra.mxu0 %v3499
      %3524 = vmatprep.subr.mxu0 0.0
      %3525 = vmatpush1.msra.mxu0 %v3500
      %3526 = vmatprep.subr.mxu0 0.0
      %3527 = vmatpush1.msra.mxu0 %v3501
      %3528 = vmatprep.subr.mxu0 0.0
      %3529 = vmatpush1.msra.mxu0 %v3502
      %3530 = vmatprep.subr.mxu0 0.0
      %3531 = vmatpush1.msra.mxu0 %v3503
      %3532 = vmatprep.subr.mxu0 0.0
      %3533 = vmatpush1.msra.mxu0 %v3504
      %3534 = vmatprep.subr.mxu0 0.0
      %3535 = vmatpush1.msra.mxu0 %v3505
      %3536 = vmatprep.subr.mxu0 0.0
      %3537 = vmatpush1.msra.mxu0 %v3506
      %3538 = vmatprep.subr.mxu0 0.0
      %3539 = vmatpush1.msra.mxu0 %v3507
      %3540 = vmatprep.subr.mxu0 0.0
      %3541 = vmatpush1.msra.mxu0 0.0
      %3542 = vmatprep.subr.mxu0 0.0
      %3543 = vmatpush1.msra.mxu0 0.0
      %3544 = vmatprep.subr.mxu0 0.0
      %3545 = vmatpush1.msra.mxu0 0.0
      %3546 = vmatprep.subr.mxu0 0.0
      %3547 = vmatpush1.msra.mxu0 0.0
      %3548 = vmatprep.subr.mxu0 0.0
      %3549 = vmatpush1.msra.mxu0 0.0
      %3550 = vmatprep.subr.mxu0 0.0
      %3551 = vmatpush1.msra.mxu0 0.0
      %3552 = vmatprep.subr.mxu0 0.0
      %3553 = vmatpush1.msra.mxu0 0.0
      %3554 = vmatprep.subr.mxu0 0.0
      %3555 = vmatpush1.msra.mxu0 0.0
      %3556 = vmatprep.subr.mxu0 0.0
      %3557 = vmatpush1.msra.mxu0 0.0
      %3558 = vmatprep.subr.mxu0 0.0
      %3559 = vmatpush1.msra.mxu0 0.0
      %3560 = vmatprep.subr.mxu0 0.0
      %3561 = vmatpush1.msra.mxu0 0.0
      %3562 = vmatprep.subr.mxu0 0.0
      %3563 = vmatpush1.msra.mxu0 0.0
      %3564 = vmatprep.subr.mxu0 0.0
      %3565 = vmatpush1.msra.mxu0 0.0
      %3566 = vmatprep.subr.mxu0 0.0
      %3567 = vmatpush1.msra.mxu0 0.0
      %3568 = vmatprep.subr.mxu0 0.0
      %3569 = vmatpush1.msra.mxu0 0.0
      %3570 = vmatprep.subr.mxu0 0.0
      %3571 = vmatpush1.msra.mxu0 0.0
      %3572 = vmatprep.mubr.f32.mxu0 0.0
      %3573 = vmatmul.mubr.f32.gmra.mrb[0].mxu0 %v260
      %v3574 = vpop.f32.mrb[0].mxu0
      %v3575 = vadd.f32 0.0, %v3574
      %v3576 = vpop.f32.mrb[0].mxu0
      %3577 = vmatprep.mubr.f32.mxu0 0.0
      %3578 = vmatmul.mubr.f32.gmra.mrb[0].mxu0 %v261
      %v3579 = vpop.f32.mrb[0].mxu0
      %v3580 = vadd.f32 0.0, %v3579
      %v3581 = vpop.f32.mrb[0].mxu0
      %3582 = vmatprep.mubr.f32.mxu0 0.0
      %3583 = vmatmul.mubr.f32.gmra.mrb[0].mxu0 %v262
      %v3584 = vpop.f32.mrb[0].mxu0
      %v3585 = vadd.f32 0.0, %v3584
      %v3586 = vpop.f32.mrb[0].mxu0
      %3587 = vmatprep.mubr.f32.mxu0 0.0
      %3588 = vmatmul.mubr.f32.gmra.mrb[0].mxu0 %v263
      %v3589 = vpop.f32.mrb[0].mxu0
      %v3590 = vadd.f32 0.0, %v3589
      %v3591 = vpop.f32.mrb[0].mxu0
      %3592 = vmatprep.mubr.f32.mxu0 0.0
      %3593 = vmatmul.mubr.f32.gmra.mrb[0].mxu0 %v264
      %v3594 = vpop.f32.mrb[0].mxu0
      %v3595 = vadd.f32 0.0, %v3594
      %v3596 = vpop.f32.mrb[0].mxu0
      %3597 = vmatprep.mubr.f32.mxu0 0.0
      %3598 = vmatmul.mubr.f32.gmra.mrb[0].mxu0 %v265
      %v3599 = vpop.f32.mrb[0].mxu0
      %v3600 = vadd.f32 0.0, %v3599
      %v3601 = vpop.f32.mrb[0].mxu0
      %3602 = vmatprep.mubr.f32.mxu0 0.0
      %3603 = vmatmul.mubr.f32.gmra.mrb[0].mxu0 %v266
      %v3604 = vpop.f32.mrb[0].mxu0
      %v3605 = vadd.f32 0.0, %v3604
      %v3606 = vpop.f32.mrb[0].mxu0
      %3607 = vmatprep.mubr.f32.mxu0 0.0
      %3608 = vmatmul.mubr.f32.gmra.mrb[0].mxu0 %v267
      %v3609 = vpop.f32.mrb[0].mxu0
      %v3610 = vadd.f32 0.0, %v3609
      %v3611 = vpop.f32.mrb[0].mxu0
      %3612 = vmatprep.mubr.f32.mxu0 0.0
      %3613 = vmatmul.mubr.f32.gmra.mrb[0].mxu0 %v268
      %v3614 = vpop.f32.mrb[0].mxu0
      %v3615 = vadd.f32 0.0, %v3614
      %v3616 = vpop.f32.mrb[0].mxu0
      %3617 = vmatprep.mubr.f32.mxu0 0.0
      %3618 = vmatmul.mubr.f32.gmra.mrb[0].mxu0 %v269
      %v3619 = vpop.f32.mrb[0].mxu0
      %v3620 = vadd.f32 0.0, %v3619
      %v3621 = vpop.f32.mrb[0].mxu0
      %3622 = vmatprep.mubr.f32.mxu0 0.0
      %3623 = vmatmul.mubr.f32.gmra.mrb[0].mxu0 %v270
      %v3624 = vpop.f32.mrb[0].mxu0
      %v3625 = vadd.f32 0.0, %v3624
      %v3626 = vpop.f32.mrb[0].mxu0
      %3627 = vmatprep.mubr.f32.mxu0 0.0
      %3628 = vmatmul.mubr.f32.gmra.mrb[0].mxu0 %v271
      %v3629 = vpop.f32.mrb[0].mxu0
      %v3630 = vadd.f32 0.0, %v3629
      %v3631 = vpop.f32.mrb[0].mxu0
      %3632 = vmatprep.mubr.f32.mxu0 0.0
      %3633 = vmatmul.mubr.f32.gmra.mrb[0].mxu0 %v272
      %v3634 = vpop.f32.mrb[0].mxu0
      %v3635 = vadd.f32 0.0, %v3634
      %v3636 = vpop.f32.mrb[0].mxu0
      %3637 = vmatprep.mubr.f32.mxu0 0.0
      %3638 = vmatmul.mubr.f32.gmra.mrb[0].mxu0 %v273
      %v3639 = vpop.f32.mrb[0].mxu0
      %v3640 = vadd.f32 0.0, %v3639
      %v3641 = vpop.f32.mrb[0].mxu0
      %3642 = vmatprep.mubr.f32.mxu0 0.0
      %3643 = vmatmul.mubr.f32.gmra.mrb[0].mxu0 %v274
      %v3644 = vpop.f32.mrb[0].mxu0
      %v3645 = vadd.f32 0.0, %v3644
      %v3646 = vpop.f32.mrb[0].mxu0
      %3647 = vmatprep.mubr.f32.mxu0 0.0
      %3648 = vmatmul.mubr.f32.gmra.mrb[0].mxu0 %v275
      %v3649 = vpop.f32.mrb[0].mxu0
      %v3650 = vadd.f32 0.0, %v3649
      %v3651 = vpop.f32.mrb[0].mxu0
      %3652 = vdwg.mxu0
      %3654 = vset.pattern.permute.xlu0 32
      %3655 = vperm.xlu0 %3654, %v3575
      %v3656 = vpop.permute.xlu0 %3655
      %3659 = vset.pattern.permute.xlu0 32
      %3660 = vperm.xlu0 %3659, %v3580
      %v3661 = vpop.permute.xlu0 %3660
      %3664 = vset.pattern.permute.xlu0 32
      %3665 = vperm.xlu0 %3664, %v3585
      %v3666 = vpop.permute.xlu0 %3665
      %3669 = vset.pattern.permute.xlu0 32
      %3670 = vperm.xlu0 %3669, %v3590
      %v3671 = vpop.permute.xlu0 %3670
      %3674 = vset.pattern.permute.xlu0 32
      %3675 = vperm.xlu0 %3674, %v3595
      %v3676 = vpop.permute.xlu0 %3675
      %3679 = vset.pattern.permute.xlu0 32
      %3680 = vperm.xlu0 %3679, %v3600
      %v3681 = vpop.permute.xlu0 %3680
      %3684 = vset.pattern.permute.xlu0 32
      %3685 = vperm.xlu0 %3684, %v3605
      %v3686 = vpop.permute.xlu0 %3685
      %3689 = vset.pattern.permute.xlu0 32
      %3690 = vperm.xlu0 %3689, %v3610
      %v3691 = vpop.permute.xlu0 %3690
      %3694 = vset.pattern.permute.xlu0 32
      %3695 = vperm.xlu0 %3694, %v3615
      %v3696 = vpop.permute.xlu0 %3695
      %3699 = vset.pattern.permute.xlu0 32
      %3700 = vperm.xlu0 %3699, %v3620
      %v3701 = vpop.permute.xlu0 %3700
      %3704 = vset.pattern.permute.xlu0 32
      %3705 = vperm.xlu0 %3704, %v3625
      %v3706 = vpop.permute.xlu0 %3705
      %3709 = vset.pattern.permute.xlu0 32
      %3710 = vperm.xlu0 %3709, %v3630
      %v3711 = vpop.permute.xlu0 %3710
      %3714 = vset.pattern.permute.xlu0 32
      %3715 = vperm.xlu0 %3714, %v3635
      %v3716 = vpop.permute.xlu0 %3715
      %3719 = vset.pattern.permute.xlu0 32
      %3720 = vperm.xlu0 %3719, %v3640
      %v3721 = vpop.permute.xlu0 %3720
      %3724 = vset.pattern.permute.xlu0 32
      %3725 = vperm.xlu0 %3724, %v3645
      %v3726 = vpop.permute.xlu0 %3725
      %3729 = vset.pattern.permute.xlu0 32
      %3730 = vperm.xlu0 %3729, %v3650
      %v3731 = vpop.permute.xlu0 %3730
      %v3733 = vrcp.pop %v3656
      %v3734 = vmul.f32 %v3575, %v3733
      %v3735 = vrcp.pop %v3661
      %v3736 = vmul.f32 %v3580, %v3735
      %v3737 = vrcp.pop %v3666
      %v3738 = vmul.f32 %v3585, %v3737
      %v3739 = vrcp.pop %v3671
      %v3740 = vmul.f32 %v3590, %v3739
      %v3741 = vrcp.pop %v3676
      %v3742 = vmul.f32 %v3595, %v3741
      %v3743 = vrcp.pop %v3681
      %v3744 = vmul.f32 %v3600, %v3743
      %v3745 = vrcp.pop %v3686
      %v3746 = vmul.f32 %v3605, %v3745
      %v3747 = vrcp.pop %v3691
      %v3748 = vmul.f32 %v3610, %v3747
      %v3749 = vrcp.pop %v3696
      %v3750 = vmul.f32 %v3615, %v3749
      %v3751 = vrcp.pop %v3701
      %v3752 = vmul.f32 %v3620, %v3751
      %v3753 = vrcp.pop %v3706
      %v3754 = vmul.f32 %v3625, %v3753
      %v3755 = vrcp.pop %v3711
      %v3756 = vmul.f32 %v3630, %v3755
      %v3757 = vrcp.pop %v3716
      %v3758 = vmul.f32 %v3635, %v3757
      %v3759 = vrcp.pop %v3721
      %v3760 = vmul.f32 %v3640, %v3759
      %v3761 = vrcp.pop %v3726
      %v3762 = vmul.f32 %v3645, %v3761
      %v3763 = vrcp.pop %v3731
      %v3764 = vmul.f32 %v3650, %v3763
      %v3766 = vsel %vm300, %v3734, 0
      %v3769 = vsel %vm300, %v3736, 0
      %v3772 = vsel %vm300, %v3738, 0
      %v3775 = vsel %vm300, %v3740, 0
      %v3778 = vsel %vm300, %v3742, 0
      %v3781 = vsel %vm300, %v3744, 0
      %v3784 = vsel %vm300, %v3746, 0
      %v3787 = vsel %vm300, %v3748, 0
      %v3790 = vsel %vm300, %v3750, 0
      %v3793 = vsel %vm300, %v3752, 0
      %v3796 = vsel %vm300, %v3754, 0
      %v3799 = vsel %vm300, %v3756, 0
      %v3802 = vsel %vm300, %v3758, 0
      %v3805 = vsel %vm300, %v3760, 0
      %v3808 = vsel %vm300, %v3762, 0
      %v3811 = vsel %vm300, %v3764, 0
      %3813 = vmatprep.subr.mxu0 0.0
      %3814 = vmatpush1.msra.mxu0 %v255
      %3815 = vmatprep.subr.mxu0 0.0
      %3816 = vmatpush1.msra.mxu0 %v256
      %3817 = vmatprep.subr.mxu0 0.0
      %3818 = vmatpush1.msra.mxu0 %v257
      %3819 = vmatprep.subr.mxu0 0.0
      %3820 = vmatpush1.msra.mxu0 %v258
      %3821 = vmatprep.subr.mxu0 0.0
      %3822 = vmatpush1.msra.mxu0 0.0
      %3823 = vmatprep.subr.mxu0 0.0
      %3824 = vmatpush1.msra.mxu0 0.0
      %3825 = vmatprep.subr.mxu0 0.0
      %3826 = vmatpush1.msra.mxu0 0.0
      %3827 = vmatprep.subr.mxu0 0.0
      %3828 = vmatpush1.msra.mxu0 0.0
      %3829 = vmatprep.subr.mxu0 0.0
      %3830 = vmatpush1.msra.mxu0 0.0
      %3831 = vmatprep.subr.mxu0 0.0
      %3832 = vmatpush1.msra.mxu0 0.0
      %3833 = vmatprep.subr.mxu0 0.0
      %3834 = vmatpush1.msra.mxu0 0.0
      %3835 = vmatprep.subr.mxu0 0.0
      %3836 = vmatpush1.msra.mxu0 0.0
      %3837 = vmatprep.subr.mxu0 0.0
      %3838 = vmatpush1.msra.mxu0 0.0
      %3839 = vmatprep.subr.mxu0 0.0
      %3840 = vmatpush1.msra.mxu0 0.0
      %3841 = vmatprep.subr.mxu0 0.0
      %3842 = vmatpush1.msra.mxu0 0.0
      %3843 = vmatprep.subr.mxu0 0.0
      %3844 = vmatpush1.msra.mxu0 0.0
      %3845 = vmatprep.subr.mxu0 0.0
      %3846 = vmatpush1.msra.mxu0 0.0
      %3847 = vmatprep.subr.mxu0 0.0
      %3848 = vmatpush1.msra.mxu0 0.0
      %3849 = vmatprep.subr.mxu0 0.0
      %3850 = vmatpush1.msra.mxu0 0.0
      %3851 = vmatprep.subr.mxu0 0.0
      %3852 = vmatpush1.msra.mxu0 0.0
      %3853 = vmatprep.subr.mxu0 0.0
      %3854 = vmatpush1.msra.mxu0 0.0
      %3855 = vmatprep.subr.mxu0 0.0
      %3856 = vmatpush1.msra.mxu0 0.0
      %3857 = vmatprep.subr.mxu0 0.0
      %3858 = vmatpush1.msra.mxu0 0.0
      %3859 = vmatprep.subr.mxu0 0.0
      %3860 = vmatpush1.msra.mxu0 0.0
      %3861 = vmatprep.subr.mxu0 0.0
      %3862 = vmatpush1.msra.mxu0 0.0
      %3863 = vmatprep.subr.mxu0 0.0
      %3864 = vmatpush1.msra.mxu0 0.0
      %3865 = vmatprep.subr.mxu0 0.0
      %3866 = vmatpush1.msra.mxu0 0.0
      %3867 = vmatprep.subr.mxu0 0.0
      %3868 = vmatpush1.msra.mxu0 0.0
      %3869 = vmatprep.subr.mxu0 0.0
      %3870 = vmatpush1.msra.mxu0 0.0
      %3871 = vmatprep.subr.mxu0 0.0
      %3872 = vmatpush1.msra.mxu0 0.0
      %3873 = vmatprep.subr.mxu0 0.0
      %3874 = vmatpush1.msra.mxu0 0.0
      %3875 = vmatprep.subr.mxu0 0.0
      %3876 = vmatpush1.msra.mxu0 0.0
      %3877 = vmatprep.mubr.f32.mxu0 0.0
      %3878 = vmatmul.mubr.f32.gmra.mrb[0].mxu0 %v3766
      %v3879 = vpop.f32.mrb[0].mxu0
      %v3880 = vadd.f32 %v298, %v3879
      %v3881 = vpop.f32.mrb[0].mxu0
      %3882 = vmatprep.mubr.f32.mxu0 0.0
      %3883 = vmatmul.mubr.f32.gmra.mrb[0].mxu0 %v3769
      %v3884 = vpop.f32.mrb[0].mxu0
      %v3885 = vadd.f32 %v298, %v3884
      %v3886 = vpop.f32.mrb[0].mxu0
      %3887 = vmatprep.mubr.f32.mxu0 0.0
      %3888 = vmatmul.mubr.f32.gmra.mrb[0].mxu0 %v3772
      %v3889 = vpop.f32.mrb[0].mxu0
      %v3890 = vadd.f32 %v298, %v3889
      %v3891 = vpop.f32.mrb[0].mxu0
      %3892 = vmatprep.mubr.f32.mxu0 0.0
      %3893 = vmatmul.mubr.f32.gmra.mrb[0].mxu0 %v3775
      %v3894 = vpop.f32.mrb[0].mxu0
      %v3895 = vadd.f32 %v298, %v3894
      %v3896 = vpop.f32.mrb[0].mxu0
      %3897 = vmatprep.mubr.f32.mxu0 0.0
      %3898 = vmatmul.mubr.f32.gmra.mrb[0].mxu0 %v3778
      %v3899 = vpop.f32.mrb[0].mxu0
      %v3900 = vadd.f32 %v298, %v3899
      %v3901 = vpop.f32.mrb[0].mxu0
      %3902 = vmatprep.mubr.f32.mxu0 0.0
      %3903 = vmatmul.mubr.f32.gmra.mrb[0].mxu0 %v3781
      %v3904 = vpop.f32.mrb[0].mxu0
      %v3905 = vadd.f32 %v298, %v3904
      %v3906 = vpop.f32.mrb[0].mxu0
      %3907 = vmatprep.mubr.f32.mxu0 0.0
      %3908 = vmatmul.mubr.f32.gmra.mrb[0].mxu0 %v3784
      %v3909 = vpop.f32.mrb[0].mxu0
      %v3910 = vadd.f32 %v298, %v3909
      %v3911 = vpop.f32.mrb[0].mxu0
      %3912 = vmatprep.mubr.f32.mxu0 0.0
      %3913 = vmatmul.mubr.f32.gmra.mrb[0].mxu0 %v3787
      %v3914 = vpop.f32.mrb[0].mxu0
      %v3915 = vadd.f32 %v298, %v3914
      %v3916 = vpop.f32.mrb[0].mxu0
      %3917 = vmatprep.mubr.f32.mxu0 0.0
      %3918 = vmatmul.mubr.f32.gmra.mrb[0].mxu0 %v3790
      %v3919 = vpop.f32.mrb[0].mxu0
      %v3920 = vadd.f32 %v298, %v3919
      %v3921 = vpop.f32.mrb[0].mxu0
      %3922 = vmatprep.mubr.f32.mxu0 0.0
      %3923 = vmatmul.mubr.f32.gmra.mrb[0].mxu0 %v3793
      %v3924 = vpop.f32.mrb[0].mxu0
      %v3925 = vadd.f32 %v298, %v3924
      %v3926 = vpop.f32.mrb[0].mxu0
      %3927 = vmatprep.mubr.f32.mxu0 0.0
      %3928 = vmatmul.mubr.f32.gmra.mrb[0].mxu0 %v3796
      %v3929 = vpop.f32.mrb[0].mxu0
      %v3930 = vadd.f32 %v298, %v3929
      %v3931 = vpop.f32.mrb[0].mxu0
      %3932 = vmatprep.mubr.f32.mxu0 0.0
      %3933 = vmatmul.mubr.f32.gmra.mrb[0].mxu0 %v3799
      %v3934 = vpop.f32.mrb[0].mxu0
      %v3935 = vadd.f32 %v298, %v3934
      %v3936 = vpop.f32.mrb[0].mxu0
      %3937 = vmatprep.mubr.f32.mxu0 0.0
      %3938 = vmatmul.mubr.f32.gmra.mrb[0].mxu0 %v3802
      %v3939 = vpop.f32.mrb[0].mxu0
      %v3940 = vadd.f32 %v298, %v3939
      %v3941 = vpop.f32.mrb[0].mxu0
      %3942 = vmatprep.mubr.f32.mxu0 0.0
      %3943 = vmatmul.mubr.f32.gmra.mrb[0].mxu0 %v3805
      %v3944 = vpop.f32.mrb[0].mxu0
      %v3945 = vadd.f32 %v298, %v3944
      %v3946 = vpop.f32.mrb[0].mxu0
      %3947 = vmatprep.mubr.f32.mxu0 0.0
      %3948 = vmatmul.mubr.f32.gmra.mrb[0].mxu0 %v3808
      %v3949 = vpop.f32.mrb[0].mxu0
      %v3950 = vadd.f32 %v298, %v3949
      %v3951 = vpop.f32.mrb[0].mxu0
      %3952 = vmatprep.mubr.f32.mxu0 0.0
      %3953 = vmatmul.mubr.f32.gmra.mrb[0].mxu0 %v3811
      %v3954 = vpop.f32.mrb[0].mxu0
      %v3955 = vadd.f32 %v298, %v3954
      %v3956 = vpop.f32.mrb[0].mxu0
      %3957 = vdwg.mxu0
      %v3958 = vsel %vm1130, %v3880, -inf
      %v3959 = vsel %vm1130, %v3885, -inf
      %v3960 = vsel %vm1130, %v3890, -inf
      %v3961 = vsel %vm1130, %v3895, -inf
      %v3962 = vsel %vm1130, %v3900, -inf
      %v3963 = vmax.f32 %v3958, %v3962
      %v3964 = vsel %vm1130, %v3905, -inf
      %v3965 = vmax.f32 %v3959, %v3964
      %v3966 = vsel %vm1130, %v3910, -inf
      %v3967 = vmax.f32 %v3960, %v3966
      %v3968 = vsel %vm1130, %v3915, -inf
      %v3969 = vmax.f32 %v3961, %v3968
      %v3970 = vsel %vm1130, %v3920, -inf
      %v3971 = vmax.f32 %v3963, %v3970
      %v3972 = vsel %vm1130, %v3925, -inf
      %v3973 = vmax.f32 %v3965, %v3972
      %v3974 = vsel %vm1130, %v3930, -inf
      %v3975 = vmax.f32 %v3967, %v3974
      %v3976 = vsel %vm1130, %v3935, -inf
      %v3977 = vmax.f32 %v3969, %v3976
      %v3978 = vsel %vm1130, %v3940, -inf
      %v3979 = vmax.f32 %v3971, %v3978
      %v3980 = vsel %vm1130, %v3945, -inf
      %v3981 = vmax.f32 %v3973, %v3980
      %v3982 = vsel %vm1130, %v3950, -inf
      %v3983 = vmax.f32 %v3975, %v3982
      %v3984 = vsel %vm1130, %v3955, -inf
      %v3985 = vmax.f32 %v3977, %v3984
      %v3986 = vmax.f32 %v3979, %v3981
      %v3987 = vmax.f32 %v3983, %v3985
      %v3988 = vmax.f32 %v3986, %v3987
      %3989 = vmax.xlane.f32.xlu0 %v3988
      %v3990 = vpop.xlane.xlu0 %3989
      %v3991 = vrot.slane %v3990, 4
      %v3992 = vmax.f32 %v3990, %v3991
      %v3993 = vrot.slane %v3992, 2
      %v3994 = vmax.f32 %v3992, %v3993
      %v3995 = vrot.slane %v3994, 1
      %v3996 = vmax.f32 %v3994, %v3995
      %s3997 = vtos %v3996
      %v3998 = vstv %s3997
      %v3999 = vsub.f32 %v3880, %v3998
      %v4000 = vsub.f32 %v3885, %v3998
      %v4001 = vsub.f32 %v3890, %v3998
      %v4002 = vsub.f32 %v3895, %v3998
      %v4003 = vsub.f32 %v3900, %v3998
      %v4004 = vsub.f32 %v3905, %v3998
      %v4005 = vsub.f32 %v3910, %v3998
      %v4006 = vsub.f32 %v3915, %v3998
      %v4007 = vsub.f32 %v3920, %v3998
      %v4008 = vsub.f32 %v3925, %v3998
      %v4009 = vsub.f32 %v3930, %v3998
      %v4010 = vsub.f32 %v3935, %v3998
      %v4011 = vsub.f32 %v3940, %v3998
      %v4012 = vsub.f32 %v3945, %v3998
      %v4013 = vsub.f32 %v3950, %v3998
      %v4014 = vsub.f32 %v3955, %v3998
      %v4015 = vmul.f32 %v3999, 1.442695
      %v4016 = vpow.pop %v4015
      %v4017 = vmul.f32 %v4000, 1.442695
      %v4018 = vpow.pop %v4017
      %v4019 = vmul.f32 %v4001, 1.442695
      %v4020 = vpow.pop %v4019
      %v4021 = vmul.f32 %v4002, 1.442695
      %v4022 = vpow.pop %v4021
      %v4023 = vmul.f32 %v4003, 1.442695
      %v4024 = vpow.pop %v4023
      %v4025 = vmul.f32 %v4004, 1.442695
      %v4026 = vpow.pop %v4025
      %v4027 = vmul.f32 %v4005, 1.442695
      %v4028 = vpow.pop %v4027
      %v4029 = vmul.f32 %v4006, 1.442695
      %v4030 = vpow.pop %v4029
      %v4031 = vmul.f32 %v4007, 1.442695
      %v4032 = vpow.pop %v4031
      %v4033 = vmul.f32 %v4008, 1.442695
      %v4034 = vpow.pop %v4033
      %v4035 = vmul.f32 %v4009, 1.442695
      %v4036 = vpow.pop %v4035
      %v4037 = vmul.f32 %v4010, 1.442695
      %v4038 = vpow.pop %v4037
      %v4039 = vmul.f32 %v4011, 1.442695
      %v4040 = vpow.pop %v4039
      %v4041 = vmul.f32 %v4012, 1.442695
      %v4042 = vpow.pop %v4041
      %v4043 = vmul.f32 %v4013, 1.442695
      %v4044 = vpow.pop %v4043
      %v4045 = vmul.f32 %v4014, 1.442695
      %v4046 = vpow.pop %v4045
      %4048 = vset.pattern.permute.xlu0 34
      %4049 = vperm.xlu0 %4048, %v4016
      %v4050 = vpop.permute.xlu0 %4049
      %4053 = vset.pattern.permute.xlu0 34
      %4054 = vperm.xlu0 %4053, %v4018
      %v4055 = vpop.permute.xlu0 %4054
      %4058 = vset.pattern.permute.xlu0 34
      %4059 = vperm.xlu0 %4058, %v4020
      %v4060 = vpop.permute.xlu0 %4059
      %4063 = vset.pattern.permute.xlu0 34
      %4064 = vperm.xlu0 %4063, %v4022
      %v4065 = vpop.permute.xlu0 %4064
      %4068 = vset.pattern.permute.xlu0 34
      %4069 = vperm.xlu0 %4068, %v4024
      %v4070 = vpop.permute.xlu0 %4069
      %4073 = vset.pattern.permute.xlu0 34
      %4074 = vperm.xlu0 %4073, %v4026
      %v4075 = vpop.permute.xlu0 %4074
      %4078 = vset.pattern.permute.xlu0 34
      %4079 = vperm.xlu0 %4078, %v4028
      %v4080 = vpop.permute.xlu0 %4079
      %4083 = vset.pattern.permute.xlu0 34
      %4084 = vperm.xlu0 %4083, %v4030
      %v4085 = vpop.permute.xlu0 %4084
      %4088 = vset.pattern.permute.xlu0 34
      %4089 = vperm.xlu0 %4088, %v4032
      %v4090 = vpop.permute.xlu0 %4089
      %4093 = vset.pattern.permute.xlu0 34
      %4094 = vperm.xlu0 %4093, %v4034
      %v4095 = vpop.permute.xlu0 %4094
      %4098 = vset.pattern.permute.xlu0 34
      %4099 = vperm.xlu0 %4098, %v4036
      %v4100 = vpop.permute.xlu0 %4099
      %4103 = vset.pattern.permute.xlu0 34
      %4104 = vperm.xlu0 %4103, %v4038
      %v4105 = vpop.permute.xlu0 %4104
      %4108 = vset.pattern.permute.xlu0 34
      %4109 = vperm.xlu0 %4108, %v4040
      %v4110 = vpop.permute.xlu0 %4109
      %4113 = vset.pattern.permute.xlu0 34
      %4114 = vperm.xlu0 %4113, %v4042
      %v4115 = vpop.permute.xlu0 %4114
      %4118 = vset.pattern.permute.xlu0 34
      %4119 = vperm.xlu0 %4118, %v4044
      %v4120 = vpop.permute.xlu0 %4119
      %4123 = vset.pattern.permute.xlu0 34
      %4124 = vperm.xlu0 %4123, %v4046
      %v4125 = vpop.permute.xlu0 %4124
      %v4127 = vmul.f32 %v4050, %v3880
      %v4128 = vmul.f32 %v4055, %v3885
      %v4129 = vmul.f32 %v4060, %v3890
      %v4130 = vmul.f32 %v4065, %v3895
      %v4131 = vmul.f32 %v4070, %v3900
      %v4132 = vmul.f32 %v4075, %v3905
      %v4133 = vmul.f32 %v4080, %v3910
      %v4134 = vmul.f32 %v4085, %v3915
      %v4135 = vmul.f32 %v4090, %v3920
      %v4136 = vmul.f32 %v4095, %v3925
      %v4137 = vmul.f32 %v4100, %v3930
      %v4138 = vmul.f32 %v4105, %v3935
      %v4139 = vmul.f32 %v4110, %v3940
      %v4140 = vmul.f32 %v4115, %v3945
      %v4141 = vmul.f32 %v4120, %v3950
      %v4142 = vmul.f32 %v4125, %v3955
      %4143 = vmatprep.subr.mxu0 0.0
      %4144 = vmatpush1.msra.mxu0 %v4127
      %4145 = vmatprep.subr.mxu0 0.0
      %4146 = vmatpush1.msra.mxu0 %v4128
      %4147 = vmatprep.subr.mxu0 0.0
      %4148 = vmatpush1.msra.mxu0 %v4129
      %4149 = vmatprep.subr.mxu0 0.0
      %4150 = vmatpush1.msra.mxu0 %v4130
      %4151 = vmatprep.subr.mxu0 0.0
      %4152 = vmatpush1.msra.mxu0 %v4131
      %4153 = vmatprep.subr.mxu0 0.0
      %4154 = vmatpush1.msra.mxu0 %v4132
      %4155 = vmatprep.subr.mxu0 0.0
      %4156 = vmatpush1.msra.mxu0 %v4133
      %4157 = vmatprep.subr.mxu0 0.0
      %4158 = vmatpush1.msra.mxu0 %v4134
      %4159 = vmatprep.subr.mxu0 0.0
      %4160 = vmatpush1.msra.mxu0 %v4135
      %4161 = vmatprep.subr.mxu0 0.0
      %4162 = vmatpush1.msra.mxu0 %v4136
      %4163 = vmatprep.subr.mxu0 0.0
      %4164 = vmatpush1.msra.mxu0 %v4137
      %4165 = vmatprep.subr.mxu0 0.0
      %4166 = vmatpush1.msra.mxu0 %v4138
      %4167 = vmatprep.subr.mxu0 0.0
      %4168 = vmatpush1.msra.mxu0 %v4139
      %4169 = vmatprep.subr.mxu0 0.0
      %4170 = vmatpush1.msra.mxu0 %v4140
      %4171 = vmatprep.subr.mxu0 0.0
      %4172 = vmatpush1.msra.mxu0 %v4141
      %4173 = vmatprep.subr.mxu0 0.0
      %4174 = vmatpush1.msra.mxu0 %v4142
      %4175 = vmatprep.subr.mxu0 0.0
      %4176 = vmatpush1.msra.mxu0 0.0
      %4177 = vmatprep.subr.mxu0 0.0
      %4178 = vmatpush1.msra.mxu0 0.0
      %4179 = vmatprep.subr.mxu0 0.0
      %4180 = vmatpush1.msra.mxu0 0.0
      %4181 = vmatprep.subr.mxu0 0.0
      %4182 = vmatpush1.msra.mxu0 0.0
      %4183 = vmatprep.subr.mxu0 0.0
      %4184 = vmatpush1.msra.mxu0 0.0
      %4185 = vmatprep.subr.mxu0 0.0
      %4186 = vmatpush1.msra.mxu0 0.0
      %4187 = vmatprep.subr.mxu0 0.0
      %4188 = vmatpush1.msra.mxu0 0.0
      %4189 = vmatprep.subr.mxu0 0.0
      %4190 = vmatpush1.msra.mxu0 0.0
      %4191 = vmatprep.subr.mxu0 0.0
      %4192 = vmatpush1.msra.mxu0 0.0
      %4193 = vmatprep.subr.mxu0 0.0
      %4194 = vmatpush1.msra.mxu0 0.0
      %4195 = vmatprep.subr.mxu0 0.0
      %4196 = vmatpush1.msra.mxu0 0.0
      %4197 = vmatprep.subr.mxu0 0.0
      %4198 = vmatpush1.msra.mxu0 0.0
      %4199 = vmatprep.subr.mxu0 0.0
      %4200 = vmatpush1.msra.mxu0 0.0
      %4201 = vmatprep.subr.mxu0 0.0
      %4202 = vmatpush1.msra.mxu0 0.0
      %4203 = vmatprep.subr.mxu0 0.0
      %4204 = vmatpush1.msra.mxu0 0.0
      %4205 = vmatprep.subr.mxu0 0.0
      %4206 = vmatpush1.msra.mxu0 0.0
      %4207 = vmatprep.mubr.f32.mxu0 0.0
      %4208 = vmatmul.mubr.f32.gmra.mrb[0].mxu0 %v260
      %v4209 = vpop.f32.mrb[0].mxu0
      %v4210 = vadd.f32 0.0, %v4209
      %v4211 = vpop.f32.mrb[0].mxu0
      %4212 = vmatprep.mubr.f32.mxu0 0.0
      %4213 = vmatmul.mubr.f32.gmra.mrb[0].mxu0 %v261
      %v4214 = vpop.f32.mrb[0].mxu0
      %v4215 = vadd.f32 0.0, %v4214
      %v4216 = vpop.f32.mrb[0].mxu0
      %4217 = vmatprep.mubr.f32.mxu0 0.0
      %4218 = vmatmul.mubr.f32.gmra.mrb[0].mxu0 %v262
      %v4219 = vpop.f32.mrb[0].mxu0
      %v4220 = vadd.f32 0.0, %v4219
      %v4221 = vpop.f32.mrb[0].mxu0
      %4222 = vmatprep.mubr.f32.mxu0 0.0
      %4223 = vmatmul.mubr.f32.gmra.mrb[0].mxu0 %v263
      %v4224 = vpop.f32.mrb[0].mxu0
      %v4225 = vadd.f32 0.0, %v4224
      %v4226 = vpop.f32.mrb[0].mxu0
      %4227 = vmatprep.mubr.f32.mxu0 0.0
      %4228 = vmatmul.mubr.f32.gmra.mrb[0].mxu0 %v264
      %v4229 = vpop.f32.mrb[0].mxu0
      %v4230 = vadd.f32 0.0, %v4229
      %v4231 = vpop.f32.mrb[0].mxu0
      %4232 = vmatprep.mubr.f32.mxu0 0.0
      %4233 = vmatmul.mubr.f32.gmra.mrb[0].mxu0 %v265
      %v4234 = vpop.f32.mrb[0].mxu0
      %v4235 = vadd.f32 0.0, %v4234
      %v4236 = vpop.f32.mrb[0].mxu0
      %4237 = vmatprep.mubr.f32.mxu0 0.0
      %4238 = vmatmul.mubr.f32.gmra.mrb[0].mxu0 %v266
      %v4239 = vpop.f32.mrb[0].mxu0
      %v4240 = vadd.f32 0.0, %v4239
      %v4241 = vpop.f32.mrb[0].mxu0
      %4242 = vmatprep.mubr.f32.mxu0 0.0
      %4243 = vmatmul.mubr.f32.gmra.mrb[0].mxu0 %v267
      %v4244 = vpop.f32.mrb[0].mxu0
      %v4245 = vadd.f32 0.0, %v4244
      %v4246 = vpop.f32.mrb[0].mxu0
      %4247 = vmatprep.mubr.f32.mxu0 0.0
      %4248 = vmatmul.mubr.f32.gmra.mrb[0].mxu0 %v268
      %v4249 = vpop.f32.mrb[0].mxu0
      %v4250 = vadd.f32 0.0, %v4249
      %v4251 = vpop.f32.mrb[0].mxu0
      %4252 = vmatprep.mubr.f32.mxu0 0.0
      %4253 = vmatmul.mubr.f32.gmra.mrb[0].mxu0 %v269
      %v4254 = vpop.f32.mrb[0].mxu0
      %v4255 = vadd.f32 0.0, %v4254
      %v4256 = vpop.f32.mrb[0].mxu0
      %4257 = vmatprep.mubr.f32.mxu0 0.0
      %4258 = vmatmul.mubr.f32.gmra.mrb[0].mxu0 %v270
      %v4259 = vpop.f32.mrb[0].mxu0
      %v4260 = vadd.f32 0.0, %v4259
      %v4261 = vpop.f32.mrb[0].mxu0
      %4262 = vmatprep.mubr.f32.mxu0 0.0
      %4263 = vmatmul.mubr.f32.gmra.mrb[0].mxu0 %v271
      %v4264 = vpop.f32.mrb[0].mxu0
      %v4265 = vadd.f32 0.0, %v4264
      %v4266 = vpop.f32.mrb[0].mxu0
      %4267 = vmatprep.mubr.f32.mxu0 0.0
      %4268 = vmatmul.mubr.f32.gmra.mrb[0].mxu0 %v272
      %v4269 = vpop.f32.mrb[0].mxu0
      %v4270 = vadd.f32 0.0, %v4269
      %v4271 = vpop.f32.mrb[0].mxu0
      %4272 = vmatprep.mubr.f32.mxu0 0.0
      %4273 = vmatmul.mubr.f32.gmra.mrb[0].mxu0 %v273
      %v4274 = vpop.f32.mrb[0].mxu0
      %v4275 = vadd.f32 0.0, %v4274
      %v4276 = vpop.f32.mrb[0].mxu0
      %4277 = vmatprep.mubr.f32.mxu0 0.0
      %4278 = vmatmul.mubr.f32.gmra.mrb[0].mxu0 %v274
      %v4279 = vpop.f32.mrb[0].mxu0
      %v4280 = vadd.f32 0.0, %v4279
      %v4281 = vpop.f32.mrb[0].mxu0
      %4282 = vmatprep.mubr.f32.mxu0 0.0
      %4283 = vmatmul.mubr.f32.gmra.mrb[0].mxu0 %v275
      %v4284 = vpop.f32.mrb[0].mxu0
      %v4285 = vadd.f32 0.0, %v4284
      %v4286 = vpop.f32.mrb[0].mxu0
      %4287 = vdwg.mxu0
      %4289 = vset.pattern.permute.xlu0 32
      %4290 = vperm.xlu0 %4289, %v4210
      %v4291 = vpop.permute.xlu0 %4290
      %4294 = vset.pattern.permute.xlu0 32
      %4295 = vperm.xlu0 %4294, %v4215
      %v4296 = vpop.permute.xlu0 %4295
      %4299 = vset.pattern.permute.xlu0 32
      %4300 = vperm.xlu0 %4299, %v4220
      %v4301 = vpop.permute.xlu0 %4300
      %4304 = vset.pattern.permute.xlu0 32
      %4305 = vperm.xlu0 %4304, %v4225
      %v4306 = vpop.permute.xlu0 %4305
      %4309 = vset.pattern.permute.xlu0 32
      %4310 = vperm.xlu0 %4309, %v4230
      %v4311 = vpop.permute.xlu0 %4310
      %4314 = vset.pattern.permute.xlu0 32
      %4315 = vperm.xlu0 %4314, %v4235
      %v4316 = vpop.permute.xlu0 %4315
      %4319 = vset.pattern.permute.xlu0 32
      %4320 = vperm.xlu0 %4319, %v4240
      %v4321 = vpop.permute.xlu0 %4320
      %4324 = vset.pattern.permute.xlu0 32
      %4325 = vperm.xlu0 %4324, %v4245
      %v4326 = vpop.permute.xlu0 %4325
      %4329 = vset.pattern.permute.xlu0 32
      %4330 = vperm.xlu0 %4329, %v4250
      %v4331 = vpop.permute.xlu0 %4330
      %4334 = vset.pattern.permute.xlu0 32
      %4335 = vperm.xlu0 %4334, %v4255
      %v4336 = vpop.permute.xlu0 %4335
      %4339 = vset.pattern.permute.xlu0 32
      %4340 = vperm.xlu0 %4339, %v4260
      %v4341 = vpop.permute.xlu0 %4340
      %4344 = vset.pattern.permute.xlu0 32
      %4345 = vperm.xlu0 %4344, %v4265
      %v4346 = vpop.permute.xlu0 %4345
      %4349 = vset.pattern.permute.xlu0 32
      %4350 = vperm.xlu0 %4349, %v4270
      %v4351 = vpop.permute.xlu0 %4350
      %4354 = vset.pattern.permute.xlu0 32
      %4355 = vperm.xlu0 %4354, %v4275
      %v4356 = vpop.permute.xlu0 %4355
      %4359 = vset.pattern.permute.xlu0 32
      %4360 = vperm.xlu0 %4359, %v4280
      %v4361 = vpop.permute.xlu0 %4360
      %4364 = vset.pattern.permute.xlu0 32
      %4365 = vperm.xlu0 %4364, %v4285
      %v4366 = vpop.permute.xlu0 %4365
      %v4368 = vrcp.pop %v4291
      %v4369 = vmul.f32 %v4210, %v4368
      %v4370 = vrcp.pop %v4296
      %v4371 = vmul.f32 %v4215, %v4370
      %v4372 = vrcp.pop %v4301
      %v4373 = vmul.f32 %v4220, %v4372
      %v4374 = vrcp.pop %v4306
      %v4375 = vmul.f32 %v4225, %v4374
      %v4376 = vrcp.pop %v4311
      %v4377 = vmul.f32 %v4230, %v4376
      %v4378 = vrcp.pop %v4316
      %v4379 = vmul.f32 %v4235, %v4378
      %v4380 = vrcp.pop %v4321
      %v4381 = vmul.f32 %v4240, %v4380
      %v4382 = vrcp.pop %v4326
      %v4383 = vmul.f32 %v4245, %v4382
      %v4384 = vrcp.pop %v4331
      %v4385 = vmul.f32 %v4250, %v4384
      %v4386 = vrcp.pop %v4336
      %v4387 = vmul.f32 %v4255, %v4386
      %v4388 = vrcp.pop %v4341
      %v4389 = vmul.f32 %v4260, %v4388
      %v4390 = vrcp.pop %v4346
      %v4391 = vmul.f32 %v4265, %v4390
      %v4392 = vrcp.pop %v4351
      %v4393 = vmul.f32 %v4270, %v4392
      %v4394 = vrcp.pop %v4356
      %v4395 = vmul.f32 %v4275, %v4394
      %v4396 = vrcp.pop %v4361
      %v4397 = vmul.f32 %v4280, %v4396
      %v4398 = vrcp.pop %v4366
      %v4399 = vmul.f32 %v4285, %v4398
      %v4401 = vsel %vm300, %v4369, 0
      %v4404 = vsel %vm300, %v4371, 0
      %v4407 = vsel %vm300, %v4373, 0
      %v4410 = vsel %vm300, %v4375, 0
      %v4413 = vsel %vm300, %v4377, 0
      %v4416 = vsel %vm300, %v4379, 0
      %v4419 = vsel %vm300, %v4381, 0
      %v4422 = vsel %vm300, %v4383, 0
      %v4425 = vsel %vm300, %v4385, 0
      %v4428 = vsel %vm300, %v4387, 0
      %v4431 = vsel %vm300, %v4389, 0
      %v4434 = vsel %vm300, %v4391, 0
      %v4437 = vsel %vm300, %v4393, 0
      %v4440 = vsel %vm300, %v4395, 0
      %v4443 = vsel %vm300, %v4397, 0
      %v4446 = vsel %vm300, %v4399, 0
      %4448 = vmatprep.subr.mxu0 0.0
      %4449 = vmatpush1.msra.mxu0 %v255
      %4450 = vmatprep.subr.mxu0 0.0
      %4451 = vmatpush1.msra.mxu0 %v256
      %4452 = vmatprep.subr.mxu0 0.0
      %4453 = vmatpush1.msra.mxu0 %v257
      %4454 = vmatprep.subr.mxu0 0.0
      %4455 = vmatpush1.msra.mxu0 %v258
      %4456 = vmatprep.subr.mxu0 0.0
      %4457 = vmatpush1.msra.mxu0 0.0
      %4458 = vmatprep.subr.mxu0 0.0
      %4459 = vmatpush1.msra.mxu0 0.0
      %4460 = vmatprep.subr.mxu0 0.0
      %4461 = vmatpush1.msra.mxu0 0.0
      %4462 = vmatprep.subr.mxu0 0.0
      %4463 = vmatpush1.msra.mxu0 0.0
      %4464 = vmatprep.subr.mxu0 0.0
      %4465 = vmatpush1.msra.mxu0 0.0
      %4466 = vmatprep.subr.mxu0 0.0
      %4467 = vmatpush1.msra.mxu0 0.0
      %4468 = vmatprep.subr.mxu0 0.0
      %4469 = vmatpush1.msra.mxu0 0.0
      %4470 = vmatprep.subr.mxu0 0.0
      %4471 = vmatpush1.msra.mxu0 0.0
      %4472 = vmatprep.subr.mxu0 0.0
      %4473 = vmatpush1.msra.mxu0 0.0
      %4474 = vmatprep.subr.mxu0 0.0
      %4475 = vmatpush1.msra.mxu0 0.0
      %4476 = vmatprep.subr.mxu0 0.0
      %4477 = vmatpush1.msra.mxu0 0.0
      %4478 = vmatprep.subr.mxu0 0.0
      %4479 = vmatpush1.msra.mxu0 0.0
      %4480 = vmatprep.subr.mxu0 0.0
      %4481 = vmatpush1.msra.mxu0 0.0
      %4482 = vmatprep.subr.mxu0 0.0
      %4483 = vmatpush1.msra.mxu0 0.0
      %4484 = vmatprep.subr.mxu0 0.0
      %4485 = vmatpush1.msra.mxu0 0.0
      %4486 = vmatprep.subr.mxu0 0.0
      %4487 = vmatpush1.msra.mxu0 0.0
      %4488 = vmatprep.subr.mxu0 0.0
      %4489 = vmatpush1.msra.mxu0 0.0
      %4490 = vmatprep.subr.mxu0 0.0
      %4491 = vmatpush1.msra.mxu0 0.0
      %4492 = vmatprep.subr.mxu0 0.0
      %4493 = vmatpush1.msra.mxu0 0.0
      %4494 = vmatprep.subr.mxu0 0.0
      %4495 = vmatpush1.msra.mxu0 0.0
      %4496 = vmatprep.subr.mxu0 0.0
      %4497 = vmatpush1.msra.mxu0 0.0
      %4498 = vmatprep.subr.mxu0 0.0
      %4499 = vmatpush1.msra.mxu0 0.0
      %4500 = vmatprep.subr.mxu0 0.0
      %4501 = vmatpush1.msra.mxu0 0.0
      %4502 = vmatprep.subr.mxu0 0.0
      %4503 = vmatpush1.msra.mxu0 0.0
      %4504 = vmatprep.subr.mxu0 0.0
      %4505 = vmatpush1.msra.mxu0 0.0
      %4506 = vmatprep.subr.mxu0 0.0
      %4507 = vmatpush1.msra.mxu0 0.0
      %4508 = vmatprep.subr.mxu0 0.0
      %4509 = vmatpush1.msra.mxu0 0.0
      %4510 = vmatprep.subr.mxu0 0.0
      %4511 = vmatpush1.msra.mxu0 0.0
      %4512 = vmatprep.mubr.f32.mxu0 0.0
      %4513 = vmatmul.mubr.f32.gmra.mrb[0].mxu0 %v4401
      %v4514 = vpop.f32.mrb[0].mxu0
      %v4515 = vadd.f32 %v298, %v4514
      %v4516 = vpop.f32.mrb[0].mxu0
      %4517 = vmatprep.mubr.f32.mxu0 0.0
      %4518 = vmatmul.mubr.f32.gmra.mrb[0].mxu0 %v4404
      %v4519 = vpop.f32.mrb[0].mxu0
      %v4520 = vadd.f32 %v298, %v4519
      %v4521 = vpop.f32.mrb[0].mxu0
      %4522 = vmatprep.mubr.f32.mxu0 0.0
      %4523 = vmatmul.mubr.f32.gmra.mrb[0].mxu0 %v4407
      %v4524 = vpop.f32.mrb[0].mxu0
      %v4525 = vadd.f32 %v298, %v4524
      %v4526 = vpop.f32.mrb[0].mxu0
      %4527 = vmatprep.mubr.f32.mxu0 0.0
      %4528 = vmatmul.mubr.f32.gmra.mrb[0].mxu0 %v4410
      %v4529 = vpop.f32.mrb[0].mxu0
      %v4530 = vadd.f32 %v298, %v4529
      %v4531 = vpop.f32.mrb[0].mxu0
      %4532 = vmatprep.mubr.f32.mxu0 0.0
      %4533 = vmatmul.mubr.f32.gmra.mrb[0].mxu0 %v4413
      %v4534 = vpop.f32.mrb[0].mxu0
      %v4535 = vadd.f32 %v298, %v4534
      %v4536 = vpop.f32.mrb[0].mxu0
      %4537 = vmatprep.mubr.f32.mxu0 0.0
      %4538 = vmatmul.mubr.f32.gmra.mrb[0].mxu0 %v4416
      %v4539 = vpop.f32.mrb[0].mxu0
      %v4540 = vadd.f32 %v298, %v4539
      %v4541 = vpop.f32.mrb[0].mxu0
      %4542 = vmatprep.mubr.f32.mxu0 0.0
      %4543 = vmatmul.mubr.f32.gmra.mrb[0].mxu0 %v4419
      %v4544 = vpop.f32.mrb[0].mxu0
      %v4545 = vadd.f32 %v298, %v4544
      %v4546 = vpop.f32.mrb[0].mxu0
      %4547 = vmatprep.mubr.f32.mxu0 0.0
      %4548 = vmatmul.mubr.f32.gmra.mrb[0].mxu0 %v4422
      %v4549 = vpop.f32.mrb[0].mxu0
      %v4550 = vadd.f32 %v298, %v4549
      %v4551 = vpop.f32.mrb[0].mxu0
      %4552 = vmatprep.mubr.f32.mxu0 0.0
      %4553 = vmatmul.mubr.f32.gmra.mrb[0].mxu0 %v4425
      %v4554 = vpop.f32.mrb[0].mxu0
      %v4555 = vadd.f32 %v298, %v4554
      %v4556 = vpop.f32.mrb[0].mxu0
      %4557 = vmatprep.mubr.f32.mxu0 0.0
      %4558 = vmatmul.mubr.f32.gmra.mrb[0].mxu0 %v4428
      %v4559 = vpop.f32.mrb[0].mxu0
      %v4560 = vadd.f32 %v298, %v4559
      %v4561 = vpop.f32.mrb[0].mxu0
      %4562 = vmatprep.mubr.f32.mxu0 0.0
      %4563 = vmatmul.mubr.f32.gmra.mrb[0].mxu0 %v4431
      %v4564 = vpop.f32.mrb[0].mxu0
      %v4565 = vadd.f32 %v298, %v4564
      %v4566 = vpop.f32.mrb[0].mxu0
      %4567 = vmatprep.mubr.f32.mxu0 0.0
      %4568 = vmatmul.mubr.f32.gmra.mrb[0].mxu0 %v4434
      %v4569 = vpop.f32.mrb[0].mxu0
      %v4570 = vadd.f32 %v298, %v4569
      %v4571 = vpop.f32.mrb[0].mxu0
      %4572 = vmatprep.mubr.f32.mxu0 0.0
      %4573 = vmatmul.mubr.f32.gmra.mrb[0].mxu0 %v4437
      %v4574 = vpop.f32.mrb[0].mxu0
      %v4575 = vadd.f32 %v298, %v4574
      %v4576 = vpop.f32.mrb[0].mxu0
      %4577 = vmatprep.mubr.f32.mxu0 0.0
      %4578 = vmatmul.mubr.f32.gmra.mrb[0].mxu0 %v4440
      %v4579 = vpop.f32.mrb[0].mxu0
      %v4580 = vadd.f32 %v298, %v4579
      %v4581 = vpop.f32.mrb[0].mxu0
      %4582 = vmatprep.mubr.f32.mxu0 0.0
      %4583 = vmatmul.mubr.f32.gmra.mrb[0].mxu0 %v4443
      %v4584 = vpop.f32.mrb[0].mxu0
      %v4585 = vadd.f32 %v298, %v4584
      %v4586 = vpop.f32.mrb[0].mxu0
      %4587 = vmatprep.mubr.f32.mxu0 0.0
      %4588 = vmatmul.mubr.f32.gmra.mrb[0].mxu0 %v4446
      %v4589 = vpop.f32.mrb[0].mxu0
      %v4590 = vadd.f32 %v298, %v4589
      %v4591 = vpop.f32.mrb[0].mxu0
      %4592 = vdwg.mxu0
      %v4593 = vsel %vm1766, %v4515, -inf
      %v4594 = vsel %vm1766, %v4520, -inf
      %v4595 = vsel %vm1766, %v4525, -inf
      %v4596 = vsel %vm1766, %v4530, -inf
      %v4597 = vsel %vm1766, %v4535, -inf
      %v4598 = vmax.f32 %v4593, %v4597
      %v4599 = vsel %vm1766, %v4540, -inf
      %v4600 = vmax.f32 %v4594, %v4599
      %v4601 = vsel %vm1766, %v4545, -inf
      %v4602 = vmax.f32 %v4595, %v4601
      %v4603 = vsel %vm1766, %v4550, -inf
      %v4604 = vmax.f32 %v4596, %v4603
      %v4605 = vsel %vm1766, %v4555, -inf
      %v4606 = vmax.f32 %v4598, %v4605
      %v4607 = vsel %vm1766, %v4560, -inf
      %v4608 = vmax.f32 %v4600, %v4607
      %v4609 = vsel %vm1766, %v4565, -inf
      %v4610 = vmax.f32 %v4602, %v4609
      %v4611 = vsel %vm1766, %v4570, -inf
      %v4612 = vmax.f32 %v4604, %v4611
      %v4613 = vsel %vm1766, %v4575, -inf
      %v4614 = vmax.f32 %v4606, %v4613
      %v4615 = vsel %vm1766, %v4580, -inf
      %v4616 = vmax.f32 %v4608, %v4615
      %v4617 = vsel %vm1766, %v4585, -inf
      %v4618 = vmax.f32 %v4610, %v4617
      %v4619 = vsel %vm1766, %v4590, -inf
      %v4620 = vmax.f32 %v4612, %v4619
      %v4621 = vmax.f32 %v4614, %v4616
      %v4622 = vmax.f32 %v4618, %v4620
      %v4623 = vmax.f32 %v4621, %v4622
      %4624 = vmax.xlane.f32.xlu0 %v4623
      %v4625 = vpop.xlane.xlu0 %4624
      %v4626 = vrot.slane %v4625, 4
      %v4627 = vmax.f32 %v4625, %v4626
      %v4628 = vrot.slane %v4627, 2
      %v4629 = vmax.f32 %v4627, %v4628
      %v4630 = vrot.slane %v4629, 1
      %v4631 = vmax.f32 %v4629, %v4630
      %s4632 = vtos %v4631
      %v4633 = vstv %s4632
      %v4634 = vsub.f32 %v4515, %v4633
      %v4635 = vsub.f32 %v4520, %v4633
      %v4636 = vsub.f32 %v4525, %v4633
      %v4637 = vsub.f32 %v4530, %v4633
      %v4638 = vsub.f32 %v4535, %v4633
      %v4639 = vsub.f32 %v4540, %v4633
      %v4640 = vsub.f32 %v4545, %v4633
      %v4641 = vsub.f32 %v4550, %v4633
      %v4642 = vsub.f32 %v4555, %v4633
      %v4643 = vsub.f32 %v4560, %v4633
      %v4644 = vsub.f32 %v4565, %v4633
      %v4645 = vsub.f32 %v4570, %v4633
      %v4646 = vsub.f32 %v4575, %v4633
      %v4647 = vsub.f32 %v4580, %v4633
      %v4648 = vsub.f32 %v4585, %v4633
      %v4649 = vsub.f32 %v4590, %v4633
      %v4650 = vmul.f32 %v4634, 1.442695
      %v4651 = vpow.pop %v4650
      %v4652 = vmul.f32 %v4635, 1.442695
      %v4653 = vpow.pop %v4652
      %v4654 = vmul.f32 %v4636, 1.442695
      %v4655 = vpow.pop %v4654
      %v4656 = vmul.f32 %v4637, 1.442695
      %v4657 = vpow.pop %v4656
      %v4658 = vmul.f32 %v4638, 1.442695
      %v4659 = vpow.pop %v4658
      %v4660 = vmul.f32 %v4639, 1.442695
      %v4661 = vpow.pop %v4660
      %v4662 = vmul.f32 %v4640, 1.442695
      %v4663 = vpow.pop %v4662
      %v4664 = vmul.f32 %v4641, 1.442695
      %v4665 = vpow.pop %v4664
      %v4666 = vmul.f32 %v4642, 1.442695
      %v4667 = vpow.pop %v4666
      %v4668 = vmul.f32 %v4643, 1.442695
      %v4669 = vpow.pop %v4668
      %v4670 = vmul.f32 %v4644, 1.442695
      %v4671 = vpow.pop %v4670
      %v4672 = vmul.f32 %v4645, 1.442695
      %v4673 = vpow.pop %v4672
      %v4674 = vmul.f32 %v4646, 1.442695
      %v4675 = vpow.pop %v4674
      %v4676 = vmul.f32 %v4647, 1.442695
      %v4677 = vpow.pop %v4676
      %v4678 = vmul.f32 %v4648, 1.442695
      %v4679 = vpow.pop %v4678
      %v4680 = vmul.f32 %v4649, 1.442695
      %v4681 = vpow.pop %v4680
      %4683 = vset.pattern.permute.xlu0 35
      %4684 = vperm.xlu0 %4683, %v4651
      %v4685 = vpop.permute.xlu0 %4684
      %4688 = vset.pattern.permute.xlu0 35
      %4689 = vperm.xlu0 %4688, %v4653
      %v4690 = vpop.permute.xlu0 %4689
      %4693 = vset.pattern.permute.xlu0 35
      %4694 = vperm.xlu0 %4693, %v4655
      %v4695 = vpop.permute.xlu0 %4694
      %4698 = vset.pattern.permute.xlu0 35
      %4699 = vperm.xlu0 %4698, %v4657
      %v4700 = vpop.permute.xlu0 %4699
      %4703 = vset.pattern.permute.xlu0 35
      %4704 = vperm.xlu0 %4703, %v4659
      %v4705 = vpop.permute.xlu0 %4704
      %4708 = vset.pattern.permute.xlu0 35
      %4709 = vperm.xlu0 %4708, %v4661
      %v4710 = vpop.permute.xlu0 %4709
      %4713 = vset.pattern.permute.xlu0 35
      %4714 = vperm.xlu0 %4713, %v4663
      %v4715 = vpop.permute.xlu0 %4714
      %4718 = vset.pattern.permute.xlu0 35
      %4719 = vperm.xlu0 %4718, %v4665
      %v4720 = vpop.permute.xlu0 %4719
      %4723 = vset.pattern.permute.xlu0 35
      %4724 = vperm.xlu0 %4723, %v4667
      %v4725 = vpop.permute.xlu0 %4724
      %4728 = vset.pattern.permute.xlu0 35
      %4729 = vperm.xlu0 %4728, %v4669
      %v4730 = vpop.permute.xlu0 %4729
      %4733 = vset.pattern.permute.xlu0 35
      %4734 = vperm.xlu0 %4733, %v4671
      %v4735 = vpop.permute.xlu0 %4734
      %4738 = vset.pattern.permute.xlu0 35
      %4739 = vperm.xlu0 %4738, %v4673
      %v4740 = vpop.permute.xlu0 %4739
      %4743 = vset.pattern.permute.xlu0 35
      %4744 = vperm.xlu0 %4743, %v4675
      %v4745 = vpop.permute.xlu0 %4744
      %4748 = vset.pattern.permute.xlu0 35
      %4749 = vperm.xlu0 %4748, %v4677
      %v4750 = vpop.permute.xlu0 %4749
      %4753 = vset.pattern.permute.xlu0 35
      %4754 = vperm.xlu0 %4753, %v4679
      %v4755 = vpop.permute.xlu0 %4754
      %4758 = vset.pattern.permute.xlu0 35
      %4759 = vperm.xlu0 %4758, %v4681
      %v4760 = vpop.permute.xlu0 %4759
      %v4762 = vmul.f32 %v4685, %v4515
      %v4763 = vmul.f32 %v4690, %v4520
      %v4764 = vmul.f32 %v4695, %v4525
      %v4765 = vmul.f32 %v4700, %v4530
      %v4766 = vmul.f32 %v4705, %v4535
      %v4767 = vmul.f32 %v4710, %v4540
      %v4768 = vmul.f32 %v4715, %v4545
      %v4769 = vmul.f32 %v4720, %v4550
      %v4770 = vmul.f32 %v4725, %v4555
      %v4771 = vmul.f32 %v4730, %v4560
      %v4772 = vmul.f32 %v4735, %v4565
      %v4773 = vmul.f32 %v4740, %v4570
      %v4774 = vmul.f32 %v4745, %v4575
      %v4775 = vmul.f32 %v4750, %v4580
      %v4776 = vmul.f32 %v4755, %v4585
      %v4777 = vmul.f32 %v4760, %v4590
      %4778 = vmatprep.subr.mxu0 0.0
      %4779 = vmatpush1.msra.mxu0 %v4762
      %4780 = vmatprep.subr.mxu0 0.0
      %4781 = vmatpush1.msra.mxu0 %v4763
      %4782 = vmatprep.subr.mxu0 0.0
      %4783 = vmatpush1.msra.mxu0 %v4764
      %4784 = vmatprep.subr.mxu0 0.0
      %4785 = vmatpush1.msra.mxu0 %v4765
      %4786 = vmatprep.subr.mxu0 0.0
      %4787 = vmatpush1.msra.mxu0 %v4766
      %4788 = vmatprep.subr.mxu0 0.0
      %4789 = vmatpush1.msra.mxu0 %v4767
      %4790 = vmatprep.subr.mxu0 0.0
      %4791 = vmatpush1.msra.mxu0 %v4768
      %4792 = vmatprep.subr.mxu0 0.0
      %4793 = vmatpush1.msra.mxu0 %v4769
      %4794 = vmatprep.subr.mxu0 0.0
      %4795 = vmatpush1.msra.mxu0 %v4770
      %4796 = vmatprep.subr.mxu0 0.0
      %4797 = vmatpush1.msra.mxu0 %v4771
      %4798 = vmatprep.subr.mxu0 0.0
      %4799 = vmatpush1.msra.mxu0 %v4772
      %4800 = vmatprep.subr.mxu0 0.0
      %4801 = vmatpush1.msra.mxu0 %v4773
      %4802 = vmatprep.subr.mxu0 0.0
      %4803 = vmatpush1.msra.mxu0 %v4774
      %4804 = vmatprep.subr.mxu0 0.0
      %4805 = vmatpush1.msra.mxu0 %v4775
      %4806 = vmatprep.subr.mxu0 0.0
      %4807 = vmatpush1.msra.mxu0 %v4776
      %4808 = vmatprep.subr.mxu0 0.0
      %4809 = vmatpush1.msra.mxu0 %v4777
      %4810 = vmatprep.subr.mxu0 0.0
      %4811 = vmatpush1.msra.mxu0 0.0
      %4812 = vmatprep.subr.mxu0 0.0
      %4813 = vmatpush1.msra.mxu0 0.0
      %4814 = vmatprep.subr.mxu0 0.0
      %4815 = vmatpush1.msra.mxu0 0.0
      %4816 = vmatprep.subr.mxu0 0.0
      %4817 = vmatpush1.msra.mxu0 0.0
      %4818 = vmatprep.subr.mxu0 0.0
      %4819 = vmatpush1.msra.mxu0 0.0
      %4820 = vmatprep.subr.mxu0 0.0
      %4821 = vmatpush1.msra.mxu0 0.0
      %4822 = vmatprep.subr.mxu0 0.0
      %4823 = vmatpush1.msra.mxu0 0.0
      %4824 = vmatprep.subr.mxu0 0.0
      %4825 = vmatpush1.msra.mxu0 0.0
      %4826 = vmatprep.subr.mxu0 0.0
      %4827 = vmatpush1.msra.mxu0 0.0
      %4828 = vmatprep.subr.mxu0 0.0
      %4829 = vmatpush1.msra.mxu0 0.0
      %4830 = vmatprep.subr.mxu0 0.0
      %4831 = vmatpush1.msra.mxu0 0.0
      %4832 = vmatprep.subr.mxu0 0.0
      %4833 = vmatpush1.msra.mxu0 0.0
      %4834 = vmatprep.subr.mxu0 0.0
      %4835 = vmatpush1.msra.mxu0 0.0
      %4836 = vmatprep.subr.mxu0 0.0
      %4837 = vmatpush1.msra.mxu0 0.0
      %4838 = vmatprep.subr.mxu0 0.0
      %4839 = vmatpush1.msra.mxu0 0.0
      %4840 = vmatprep.subr.mxu0 0.0
      %4841 = vmatpush1.msra.mxu0 0.0
      %4842 = vmatprep.mubr.f32.mxu0 0.0
      %4843 = vmatmul.mubr.f32.gmra.mrb[0].mxu0 %v260
      %v4844 = vpop.f32.mrb[0].mxu0
      %v4845 = vadd.f32 0.0, %v4844
      %v4846 = vpop.f32.mrb[0].mxu0
      %4847 = vmatprep.mubr.f32.mxu0 0.0
      %4848 = vmatmul.mubr.f32.gmra.mrb[0].mxu0 %v261
      %v4849 = vpop.f32.mrb[0].mxu0
      %v4850 = vadd.f32 0.0, %v4849
      %v4851 = vpop.f32.mrb[0].mxu0
      %4852 = vmatprep.mubr.f32.mxu0 0.0
      %4853 = vmatmul.mubr.f32.gmra.mrb[0].mxu0 %v262
      %v4854 = vpop.f32.mrb[0].mxu0
      %v4855 = vadd.f32 0.0, %v4854
      %v4856 = vpop.f32.mrb[0].mxu0
      %4857 = vmatprep.mubr.f32.mxu0 0.0
      %4858 = vmatmul.mubr.f32.gmra.mrb[0].mxu0 %v263
      %v4859 = vpop.f32.mrb[0].mxu0
      %v4860 = vadd.f32 0.0, %v4859
      %v4861 = vpop.f32.mrb[0].mxu0
      %4862 = vmatprep.mubr.f32.mxu0 0.0
      %4863 = vmatmul.mubr.f32.gmra.mrb[0].mxu0 %v264
      %v4864 = vpop.f32.mrb[0].mxu0
      %v4865 = vadd.f32 0.0, %v4864
      %v4866 = vpop.f32.mrb[0].mxu0
      %4867 = vmatprep.mubr.f32.mxu0 0.0
      %4868 = vmatmul.mubr.f32.gmra.mrb[0].mxu0 %v265
      %v4869 = vpop.f32.mrb[0].mxu0
      %v4870 = vadd.f32 0.0, %v4869
      %v4871 = vpop.f32.mrb[0].mxu0
      %4872 = vmatprep.mubr.f32.mxu0 0.0
      %4873 = vmatmul.mubr.f32.gmra.mrb[0].mxu0 %v266
      %v4874 = vpop.f32.mrb[0].mxu0
      %v4875 = vadd.f32 0.0, %v4874
      %v4876 = vpop.f32.mrb[0].mxu0
      %4877 = vmatprep.mubr.f32.mxu0 0.0
      %4878 = vmatmul.mubr.f32.gmra.mrb[0].mxu0 %v267
      %v4879 = vpop.f32.mrb[0].mxu0
      %v4880 = vadd.f32 0.0, %v4879
      %v4881 = vpop.f32.mrb[0].mxu0
      %4882 = vmatprep.mubr.f32.mxu0 0.0
      %4883 = vmatmul.mubr.f32.gmra.mrb[0].mxu0 %v268
      %v4884 = vpop.f32.mrb[0].mxu0
      %v4885 = vadd.f32 0.0, %v4884
      %v4886 = vpop.f32.mrb[0].mxu0
      %4887 = vmatprep.mubr.f32.mxu0 0.0
      %4888 = vmatmul.mubr.f32.gmra.mrb[0].mxu0 %v269
      %v4889 = vpop.f32.mrb[0].mxu0
      %v4890 = vadd.f32 0.0, %v4889
      %v4891 = vpop.f32.mrb[0].mxu0
      %4892 = vmatprep.mubr.f32.mxu0 0.0
      %4893 = vmatmul.mubr.f32.gmra.mrb[0].mxu0 %v270
      %v4894 = vpop.f32.mrb[0].mxu0
      %v4895 = vadd.f32 0.0, %v4894
      %v4896 = vpop.f32.mrb[0].mxu0
      %4897 = vmatprep.mubr.f32.mxu0 0.0
      %4898 = vmatmul.mubr.f32.gmra.mrb[0].mxu0 %v271
      %v4899 = vpop.f32.mrb[0].mxu0
      %v4900 = vadd.f32 0.0, %v4899
      %v4901 = vpop.f32.mrb[0].mxu0
      %4902 = vmatprep.mubr.f32.mxu0 0.0
      %4903 = vmatmul.mubr.f32.gmra.mrb[0].mxu0 %v272
      %v4904 = vpop.f32.mrb[0].mxu0
      %v4905 = vadd.f32 0.0, %v4904
      %v4906 = vpop.f32.mrb[0].mxu0
      %4907 = vmatprep.mubr.f32.mxu0 0.0
      %4908 = vmatmul.mubr.f32.gmra.mrb[0].mxu0 %v273
      %v4909 = vpop.f32.mrb[0].mxu0
      %v4910 = vadd.f32 0.0, %v4909
      %v4911 = vpop.f32.mrb[0].mxu0
      %4912 = vmatprep.mubr.f32.mxu0 0.0
      %4913 = vmatmul.mubr.f32.gmra.mrb[0].mxu0 %v274
      %v4914 = vpop.f32.mrb[0].mxu0
      %v4915 = vadd.f32 0.0, %v4914
      %v4916 = vpop.f32.mrb[0].mxu0
      %4917 = vmatprep.mubr.f32.mxu0 0.0
      %4918 = vmatmul.mubr.f32.gmra.mrb[0].mxu0 %v275
      %v4919 = vpop.f32.mrb[0].mxu0
      %v4920 = vadd.f32 0.0, %v4919
      %v4921 = vpop.f32.mrb[0].mxu0
      %4922 = vdwg.mxu0
      %4924 = vset.pattern.permute.xlu0 32
      %4925 = vperm.xlu0 %4924, %v4845
      %v4926 = vpop.permute.xlu0 %4925
      %4929 = vset.pattern.permute.xlu0 32
      %4930 = vperm.xlu0 %4929, %v4850
      %v4931 = vpop.permute.xlu0 %4930
      %4934 = vset.pattern.permute.xlu0 32
      %4935 = vperm.xlu0 %4934, %v4855
      %v4936 = vpop.permute.xlu0 %4935
      %4939 = vset.pattern.permute.xlu0 32
      %4940 = vperm.xlu0 %4939, %v4860
      %v4941 = vpop.permute.xlu0 %4940
      %4944 = vset.pattern.permute.xlu0 32
      %4945 = vperm.xlu0 %4944, %v4865
      %v4946 = vpop.permute.xlu0 %4945
      %4949 = vset.pattern.permute.xlu0 32
      %4950 = vperm.xlu0 %4949, %v4870
      %v4951 = vpop.permute.xlu0 %4950
      %4954 = vset.pattern.permute.xlu0 32
      %4955 = vperm.xlu0 %4954, %v4875
      %v4956 = vpop.permute.xlu0 %4955
      %4959 = vset.pattern.permute.xlu0 32
      %4960 = vperm.xlu0 %4959, %v4880
      %v4961 = vpop.permute.xlu0 %4960
      %4964 = vset.pattern.permute.xlu0 32
      %4965 = vperm.xlu0 %4964, %v4885
      %v4966 = vpop.permute.xlu0 %4965
      %4969 = vset.pattern.permute.xlu0 32
      %4970 = vperm.xlu0 %4969, %v4890
      %v4971 = vpop.permute.xlu0 %4970
      %4974 = vset.pattern.permute.xlu0 32
      %4975 = vperm.xlu0 %4974, %v4895
      %v4976 = vpop.permute.xlu0 %4975
      %4979 = vset.pattern.permute.xlu0 32
      %4980 = vperm.xlu0 %4979, %v4900
      %v4981 = vpop.permute.xlu0 %4980
      %4984 = vset.pattern.permute.xlu0 32
      %4985 = vperm.xlu0 %4984, %v4905
      %v4986 = vpop.permute.xlu0 %4985
      %4989 = vset.pattern.permute.xlu0 32
      %4990 = vperm.xlu0 %4989, %v4910
      %v4991 = vpop.permute.xlu0 %4990
      %4994 = vset.pattern.permute.xlu0 32
      %4995 = vperm.xlu0 %4994, %v4915
      %v4996 = vpop.permute.xlu0 %4995
      %4999 = vset.pattern.permute.xlu0 32
      %5000 = vperm.xlu0 %4999, %v4920
      %v5001 = vpop.permute.xlu0 %5000
      %v5003 = vrcp.pop %v4926
      %v5004 = vmul.f32 %v4845, %v5003
      %v5005 = vrcp.pop %v4931
      %v5006 = vmul.f32 %v4850, %v5005
      %v5007 = vrcp.pop %v4936
      %v5008 = vmul.f32 %v4855, %v5007
      %v5009 = vrcp.pop %v4941
      %v5010 = vmul.f32 %v4860, %v5009
      %v5011 = vrcp.pop %v4946
      %v5012 = vmul.f32 %v4865, %v5011
      %v5013 = vrcp.pop %v4951
      %v5014 = vmul.f32 %v4870, %v5013
      %v5015 = vrcp.pop %v4956
      %v5016 = vmul.f32 %v4875, %v5015
      %v5017 = vrcp.pop %v4961
      %v5018 = vmul.f32 %v4880, %v5017
      %v5019 = vrcp.pop %v4966
      %v5020 = vmul.f32 %v4885, %v5019
      %v5021 = vrcp.pop %v4971
      %v5022 = vmul.f32 %v4890, %v5021
      %v5023 = vrcp.pop %v4976
      %v5024 = vmul.f32 %v4895, %v5023
      %v5025 = vrcp.pop %v4981
      %v5026 = vmul.f32 %v4900, %v5025
      %v5027 = vrcp.pop %v4986
      %v5028 = vmul.f32 %v4905, %v5027
      %v5029 = vrcp.pop %v4991
      %v5030 = vmul.f32 %v4910, %v5029
      %v5031 = vrcp.pop %v4996
      %v5032 = vmul.f32 %v4915, %v5031
      %v5033 = vrcp.pop %v5001
      %v5034 = vmul.f32 %v4920, %v5033
      %v5036 = vsel %vm300, %v5004, 0
      %v5039 = vsel %vm300, %v5006, 0
      %v5042 = vsel %vm300, %v5008, 0
      %v5045 = vsel %vm300, %v5010, 0
      %v5048 = vsel %vm300, %v5012, 0
      %v5051 = vsel %vm300, %v5014, 0
      %v5054 = vsel %vm300, %v5016, 0
      %v5057 = vsel %vm300, %v5018, 0
      %v5060 = vsel %vm300, %v5020, 0
      %v5063 = vsel %vm300, %v5022, 0
      %v5066 = vsel %vm300, %v5024, 0
      %v5069 = vsel %vm300, %v5026, 0
      %v5072 = vsel %vm300, %v5028, 0
      %v5075 = vsel %vm300, %v5030, 0
      %v5078 = vsel %vm300, %v5032, 0
      %v5081 = vsel %vm300, %v5034, 0
      %5083 = vmatprep.subr.mxu0 0.0
      %5084 = vmatpush1.msra.mxu0 %v255
      %5085 = vmatprep.subr.mxu0 0.0
      %5086 = vmatpush1.msra.mxu0 %v256
      %5087 = vmatprep.subr.mxu0 0.0
      %5088 = vmatpush1.msra.mxu0 %v257
      %5089 = vmatprep.subr.mxu0 0.0
      %5090 = vmatpush1.msra.mxu0 %v258
      %5091 = vmatprep.subr.mxu0 0.0
      %5092 = vmatpush1.msra.mxu0 0.0
      %5093 = vmatprep.subr.mxu0 0.0
      %5094 = vmatpush1.msra.mxu0 0.0
      %5095 = vmatprep.subr.mxu0 0.0
      %5096 = vmatpush1.msra.mxu0 0.0
      %5097 = vmatprep.subr.mxu0 0.0
      %5098 = vmatpush1.msra.mxu0 0.0
      %5099 = vmatprep.subr.mxu0 0.0
      %5100 = vmatpush1.msra.mxu0 0.0
      %5101 = vmatprep.subr.mxu0 0.0
      %5102 = vmatpush1.msra.mxu0 0.0
      %5103 = vmatprep.subr.mxu0 0.0
      %5104 = vmatpush1.msra.mxu0 0.0
      %5105 = vmatprep.subr.mxu0 0.0
      %5106 = vmatpush1.msra.mxu0 0.0
      %5107 = vmatprep.subr.mxu0 0.0
      %5108 = vmatpush1.msra.mxu0 0.0
      %5109 = vmatprep.subr.mxu0 0.0
      %5110 = vmatpush1.msra.mxu0 0.0
      %5111 = vmatprep.subr.mxu0 0.0
      %5112 = vmatpush1.msra.mxu0 0.0
      %5113 = vmatprep.subr.mxu0 0.0
      %5114 = vmatpush1.msra.mxu0 0.0
      %5115 = vmatprep.subr.mxu0 0.0
      %5116 = vmatpush1.msra.mxu0 0.0
      %5117 = vmatprep.subr.mxu0 0.0
      %5118 = vmatpush1.msra.mxu0 0.0
      %5119 = vmatprep.subr.mxu0 0.0
      %5120 = vmatpush1.msra.mxu0 0.0
      %5121 = vmatprep.subr.mxu0 0.0
      %5122 = vmatpush1.msra.mxu0 0.0
      %5123 = vmatprep.subr.mxu0 0.0
      %5124 = vmatpush1.msra.mxu0 0.0
      %5125 = vmatprep.subr.mxu0 0.0
      %5126 = vmatpush1.msra.mxu0 0.0
      %5127 = vmatprep.subr.mxu0 0.0
      %5128 = vmatpush1.msra.mxu0 0.0
      %5129 = vmatprep.subr.mxu0 0.0
      %5130 = vmatpush1.msra.mxu0 0.0
      %5131 = vmatprep.subr.mxu0 0.0
      %5132 = vmatpush1.msra.mxu0 0.0
      %5133 = vmatprep.subr.mxu0 0.0
      %5134 = vmatpush1.msra.mxu0 0.0
      %5135 = vmatprep.subr.mxu0 0.0
      %5136 = vmatpush1.msra.mxu0 0.0
      %5137 = vmatprep.subr.mxu0 0.0
      %5138 = vmatpush1.msra.mxu0 0.0
      %5139 = vmatprep.subr.mxu0 0.0
      %5140 = vmatpush1.msra.mxu0 0.0
      %5141 = vmatprep.subr.mxu0 0.0
      %5142 = vmatpush1.msra.mxu0 0.0
      %5143 = vmatprep.subr.mxu0 0.0
      %5144 = vmatpush1.msra.mxu0 0.0
      %5145 = vmatprep.subr.mxu0 0.0
      %5146 = vmatpush1.msra.mxu0 0.0
      %5147 = vmatprep.mubr.f32.mxu0 0.0
      %5148 = vmatmul.mubr.f32.gmra.mrb[0].mxu0 %v5036
      %v5149 = vpop.f32.mrb[0].mxu0
      %v5150 = vadd.f32 %v298, %v5149
      %v5151 = vpop.f32.mrb[0].mxu0
      %5152 = vmatprep.mubr.f32.mxu0 0.0
      %5153 = vmatmul.mubr.f32.gmra.mrb[0].mxu0 %v5039
      %v5154 = vpop.f32.mrb[0].mxu0
      %v5155 = vadd.f32 %v298, %v5154
      %v5156 = vpop.f32.mrb[0].mxu0
      %5157 = vmatprep.mubr.f32.mxu0 0.0
      %5158 = vmatmul.mubr.f32.gmra.mrb[0].mxu0 %v5042
      %v5159 = vpop.f32.mrb[0].mxu0
      %v5160 = vadd.f32 %v298, %v5159
      %v5161 = vpop.f32.mrb[0].mxu0
      %5162 = vmatprep.mubr.f32.mxu0 0.0
      %5163 = vmatmul.mubr.f32.gmra.mrb[0].mxu0 %v5045
      %v5164 = vpop.f32.mrb[0].mxu0
      %v5165 = vadd.f32 %v298, %v5164
      %v5166 = vpop.f32.mrb[0].mxu0
      %5167 = vmatprep.mubr.f32.mxu0 0.0
      %5168 = vmatmul.mubr.f32.gmra.mrb[0].mxu0 %v5048
      %v5169 = vpop.f32.mrb[0].mxu0
      %v5170 = vadd.f32 %v298, %v5169
      %v5171 = vpop.f32.mrb[0].mxu0
      %5172 = vmatprep.mubr.f32.mxu0 0.0
      %5173 = vmatmul.mubr.f32.gmra.mrb[0].mxu0 %v5051
      %v5174 = vpop.f32.mrb[0].mxu0
      %v5175 = vadd.f32 %v298, %v5174
      %v5176 = vpop.f32.mrb[0].mxu0
      %5177 = vmatprep.mubr.f32.mxu0 0.0
      %5178 = vmatmul.mubr.f32.gmra.mrb[0].mxu0 %v5054
      %v5179 = vpop.f32.mrb[0].mxu0
      %v5180 = vadd.f32 %v298, %v5179
      %v5181 = vpop.f32.mrb[0].mxu0
      %5182 = vmatprep.mubr.f32.mxu0 0.0
      %5183 = vmatmul.mubr.f32.gmra.mrb[0].mxu0 %v5057
      %v5184 = vpop.f32.mrb[0].mxu0
      %v5185 = vadd.f32 %v298, %v5184
      %v5186 = vpop.f32.mrb[0].mxu0
      %5187 = vmatprep.mubr.f32.mxu0 0.0
      %5188 = vmatmul.mubr.f32.gmra.mrb[0].mxu0 %v5060
      %v5189 = vpop.f32.mrb[0].mxu0
      %v5190 = vadd.f32 %v298, %v5189
      %v5191 = vpop.f32.mrb[0].mxu0
      %5192 = vmatprep.mubr.f32.mxu0 0.0
      %5193 = vmatmul.mubr.f32.gmra.mrb[0].mxu0 %v5063
      %v5194 = vpop.f32.mrb[0].mxu0
      %v5195 = vadd.f32 %v298, %v5194
      %v5196 = vpop.f32.mrb[0].mxu0
      %5197 = vmatprep.mubr.f32.mxu0 0.0
      %5198 = vmatmul.mubr.f32.gmra.mrb[0].mxu0 %v5066
      %v5199 = vpop.f32.mrb[0].mxu0
      %v5200 = vadd.f32 %v298, %v5199
      %v5201 = vpop.f32.mrb[0].mxu0
      %5202 = vmatprep.mubr.f32.mxu0 0.0
      %5203 = vmatmul.mubr.f32.gmra.mrb[0].mxu0 %v5069
      %v5204 = vpop.f32.mrb[0].mxu0
      %v5205 = vadd.f32 %v298, %v5204
      %v5206 = vpop.f32.mrb[0].mxu0
      %5207 = vmatprep.mubr.f32.mxu0 0.0
      %5208 = vmatmul.mubr.f32.gmra.mrb[0].mxu0 %v5072
      %v5209 = vpop.f32.mrb[0].mxu0
      %v5210 = vadd.f32 %v298, %v5209
      %v5211 = vpop.f32.mrb[0].mxu0
      %5212 = vmatprep.mubr.f32.mxu0 0.0
      %5213 = vmatmul.mubr.f32.gmra.mrb[0].mxu0 %v5075
      %v5214 = vpop.f32.mrb[0].mxu0
      %v5215 = vadd.f32 %v298, %v5214
      %v5216 = vpop.f32.mrb[0].mxu0
      %5217 = vmatprep.mubr.f32.mxu0 0.0
      %5218 = vmatmul.mubr.f32.gmra.mrb[0].mxu0 %v5078
      %v5219 = vpop.f32.mrb[0].mxu0
      %v5220 = vadd.f32 %v298, %v5219
      %v5221 = vpop.f32.mrb[0].mxu0
      %5222 = vmatprep.mubr.f32.mxu0 0.0
      %5223 = vmatmul.mubr.f32.gmra.mrb[0].mxu0 %v5081
      %v5224 = vpop.f32.mrb[0].mxu0
      %v5225 = vadd.f32 %v298, %v5224
      %v5226 = vpop.f32.mrb[0].mxu0
      %5227 = vdwg.mxu0
      %v5228 = vsel %vm2402, %v5150, -inf
      %v5229 = vsel %vm2402, %v5155, -inf
      %v5230 = vsel %vm2402, %v5160, -inf
      %v5231 = vsel %vm2402, %v5165, -inf
      %v5232 = vsel %vm2402, %v5170, -inf
      %v5233 = vmax.f32 %v5228, %v5232
      %v5234 = vsel %vm2402, %v5175, -inf
      %v5235 = vmax.f32 %v5229, %v5234
      %v5236 = vsel %vm2402, %v5180, -inf
      %v5237 = vmax.f32 %v5230, %v5236
      %v5238 = vsel %vm2402, %v5185, -inf
      %v5239 = vmax.f32 %v5231, %v5238
      %v5240 = vsel %vm2402, %v5190, -inf
      %v5241 = vmax.f32 %v5233, %v5240
      %v5242 = vsel %vm2402, %v5195, -inf
      %v5243 = vmax.f32 %v5235, %v5242
      %v5244 = vsel %vm2402, %v5200, -inf
      %v5245 = vmax.f32 %v5237, %v5244
      %v5246 = vsel %vm2402, %v5205, -inf
      %v5247 = vmax.f32 %v5239, %v5246
      %v5248 = vsel %vm2402, %v5210, -inf
      %v5249 = vmax.f32 %v5241, %v5248
      %v5250 = vsel %vm2402, %v5215, -inf
      %v5251 = vmax.f32 %v5243, %v5250
      %v5252 = vsel %vm2402, %v5220, -inf
      %v5253 = vmax.f32 %v5245, %v5252
      %v5254 = vsel %vm2402, %v5225, -inf
      %v5255 = vmax.f32 %v5247, %v5254
      %v5256 = vmax.f32 %v5249, %v5251
      %v5257 = vmax.f32 %v5253, %v5255
      %v5258 = vmax.f32 %v5256, %v5257
      %5259 = vmax.xlane.f32.xlu0 %v5258
      %v5260 = vpop.xlane.xlu0 %5259
      %v5261 = vrot.slane %v5260, 4
      %v5262 = vmax.f32 %v5260, %v5261
      %v5263 = vrot.slane %v5262, 2
      %v5264 = vmax.f32 %v5262, %v5263
      %v5265 = vrot.slane %v5264, 1
      %v5266 = vmax.f32 %v5264, %v5265
      %s5267 = vtos %v5266
      %v5268 = vstv %s5267
      %v5269 = vsub.f32 %v5150, %v5268
      %v5270 = vsub.f32 %v5155, %v5268
      %v5271 = vsub.f32 %v5160, %v5268
      %v5272 = vsub.f32 %v5165, %v5268
      %v5273 = vsub.f32 %v5170, %v5268
      %v5274 = vsub.f32 %v5175, %v5268
      %v5275 = vsub.f32 %v5180, %v5268
      %v5276 = vsub.f32 %v5185, %v5268
      %v5277 = vsub.f32 %v5190, %v5268
      %v5278 = vsub.f32 %v5195, %v5268
      %v5279 = vsub.f32 %v5200, %v5268
      %v5280 = vsub.f32 %v5205, %v5268
      %v5281 = vsub.f32 %v5210, %v5268
      %v5282 = vsub.f32 %v5215, %v5268
      %v5283 = vsub.f32 %v5220, %v5268
      %v5284 = vsub.f32 %v5225, %v5268
      %v5285 = vmul.f32 %v5269, 1.442695
      %v5286 = vpow.pop %v5285
      %v5287 = vmul.f32 %v5270, 1.442695
      %v5288 = vpow.pop %v5287
      %v5289 = vmul.f32 %v5271, 1.442695
      %v5290 = vpow.pop %v5289
      %v5291 = vmul.f32 %v5272, 1.442695
      %v5292 = vpow.pop %v5291
      %v5293 = vmul.f32 %v5273, 1.442695
      %v5294 = vpow.pop %v5293
      %v5295 = vmul.f32 %v5274, 1.442695
      %v5296 = vpow.pop %v5295
      %v5297 = vmul.f32 %v5275, 1.442695
      %v5298 = vpow.pop %v5297
      %v5299 = vmul.f32 %v5276, 1.442695
      %v5300 = vpow.pop %v5299
      %v5301 = vmul.f32 %v5277, 1.442695
      %v5302 = vpow.pop %v5301
      %v5303 = vmul.f32 %v5278, 1.442695
      %v5304 = vpow.pop %v5303
      %v5305 = vmul.f32 %v5279, 1.442695
      %v5306 = vpow.pop %v5305
      %v5307 = vmul.f32 %v5280, 1.442695
      %v5308 = vpow.pop %v5307
      %v5309 = vmul.f32 %v5281, 1.442695
      %v5310 = vpow.pop %v5309
      %v5311 = vmul.f32 %v5282, 1.442695
      %v5312 = vpow.pop %v5311
      %v5313 = vmul.f32 %v5283, 1.442695
      %v5314 = vpow.pop %v5313
      %v5315 = vmul.f32 %v5284, 1.442695
      %v5316 = vpow.pop %v5315
      %5318 = vset.pattern.permute.xlu0 36
      %5319 = vperm.xlu0 %5318, %v5286
      %v5320 = vpop.permute.xlu0 %5319
      %5323 = vset.pattern.permute.xlu0 36
      %5324 = vperm.xlu0 %5323, %v5288
      %v5325 = vpop.permute.xlu0 %5324
      %5328 = vset.pattern.permute.xlu0 36
      %5329 = vperm.xlu0 %5328, %v5290
      %v5330 = vpop.permute.xlu0 %5329
      %5333 = vset.pattern.permute.xlu0 36
      %5334 = vperm.xlu0 %5333, %v5292
      %v5335 = vpop.permute.xlu0 %5334
      %5338 = vset.pattern.permute.xlu0 36
      %5339 = vperm.xlu0 %5338, %v5294
      %v5340 = vpop.permute.xlu0 %5339
      %5343 = vset.pattern.permute.xlu0 36
      %5344 = vperm.xlu0 %5343, %v5296
      %v5345 = vpop.permute.xlu0 %5344
      %5348 = vset.pattern.permute.xlu0 36
      %5349 = vperm.xlu0 %5348, %v5298
      %v5350 = vpop.permute.xlu0 %5349
      %5353 = vset.pattern.permute.xlu0 36
      %5354 = vperm.xlu0 %5353, %v5300
      %v5355 = vpop.permute.xlu0 %5354
      %5358 = vset.pattern.permute.xlu0 36
      %5359 = vperm.xlu0 %5358, %v5302
      %v5360 = vpop.permute.xlu0 %5359
      %5363 = vset.pattern.permute.xlu0 36
      %5364 = vperm.xlu0 %5363, %v5304
      %v5365 = vpop.permute.xlu0 %5364
      %5368 = vset.pattern.permute.xlu0 36
      %5369 = vperm.xlu0 %5368, %v5306
      %v5370 = vpop.permute.xlu0 %5369
      %5373 = vset.pattern.permute.xlu0 36
      %5374 = vperm.xlu0 %5373, %v5308
      %v5375 = vpop.permute.xlu0 %5374
      %5378 = vset.pattern.permute.xlu0 36
      %5379 = vperm.xlu0 %5378, %v5310
      %v5380 = vpop.permute.xlu0 %5379
      %5383 = vset.pattern.permute.xlu0 36
      %5384 = vperm.xlu0 %5383, %v5312
      %v5385 = vpop.permute.xlu0 %5384
      %5388 = vset.pattern.permute.xlu0 36
      %5389 = vperm.xlu0 %5388, %v5314
      %v5390 = vpop.permute.xlu0 %5389
      %5393 = vset.pattern.permute.xlu0 36
      %5394 = vperm.xlu0 %5393, %v5316
      %v5395 = vpop.permute.xlu0 %5394
      %v5397 = vmul.f32 %v5320, %v5150
      %v5398 = vmul.f32 %v5325, %v5155
      %v5399 = vmul.f32 %v5330, %v5160
      %v5400 = vmul.f32 %v5335, %v5165
      %v5401 = vmul.f32 %v5340, %v5170
      %v5402 = vmul.f32 %v5345, %v5175
      %v5403 = vmul.f32 %v5350, %v5180
      %v5404 = vmul.f32 %v5355, %v5185
      %v5405 = vmul.f32 %v5360, %v5190
      %v5406 = vmul.f32 %v5365, %v5195
      %v5407 = vmul.f32 %v5370, %v5200
      %v5408 = vmul.f32 %v5375, %v5205
      %v5409 = vmul.f32 %v5380, %v5210
      %v5410 = vmul.f32 %v5385, %v5215
      %v5411 = vmul.f32 %v5390, %v5220
      %v5412 = vmul.f32 %v5395, %v5225
      %5413 = vmatprep.subr.mxu0 0.0
      %5414 = vmatpush1.msra.mxu0 %v5397
      %5415 = vmatprep.subr.mxu0 0.0
      %5416 = vmatpush1.msra.mxu0 %v5398
      %5417 = vmatprep.subr.mxu0 0.0
      %5418 = vmatpush1.msra.mxu0 %v5399
      %5419 = vmatprep.subr.mxu0 0.0
      %5420 = vmatpush1.msra.mxu0 %v5400
      %5421 = vmatprep.subr.mxu0 0.0
      %5422 = vmatpush1.msra.mxu0 %v5401
      %5423 = vmatprep.subr.mxu0 0.0
      %5424 = vmatpush1.msra.mxu0 %v5402
      %5425 = vmatprep.subr.mxu0 0.0
      %5426 = vmatpush1.msra.mxu0 %v5403
      %5427 = vmatprep.subr.mxu0 0.0
      %5428 = vmatpush1.msra.mxu0 %v5404
      %5429 = vmatprep.subr.mxu0 0.0
      %5430 = vmatpush1.msra.mxu0 %v5405
      %5431 = vmatprep.subr.mxu0 0.0
      %5432 = vmatpush1.msra.mxu0 %v5406
      %5433 = vmatprep.subr.mxu0 0.0
      %5434 = vmatpush1.msra.mxu0 %v5407
      %5435 = vmatprep.subr.mxu0 0.0
      %5436 = vmatpush1.msra.mxu0 %v5408
      %5437 = vmatprep.subr.mxu0 0.0
      %5438 = vmatpush1.msra.mxu0 %v5409
      %5439 = vmatprep.subr.mxu0 0.0
      %5440 = vmatpush1.msra.mxu0 %v5410
      %5441 = vmatprep.subr.mxu0 0.0
      %5442 = vmatpush1.msra.mxu0 %v5411
      %5443 = vmatprep.subr.mxu0 0.0
      %5444 = vmatpush1.msra.mxu0 %v5412
      %5445 = vmatprep.subr.mxu0 0.0
      %5446 = vmatpush1.msra.mxu0 0.0
      %5447 = vmatprep.subr.mxu0 0.0
      %5448 = vmatpush1.msra.mxu0 0.0
      %5449 = vmatprep.subr.mxu0 0.0
      %5450 = vmatpush1.msra.mxu0 0.0
      %5451 = vmatprep.subr.mxu0 0.0
      %5452 = vmatpush1.msra.mxu0 0.0
      %5453 = vmatprep.subr.mxu0 0.0
      %5454 = vmatpush1.msra.mxu0 0.0
      %5455 = vmatprep.subr.mxu0 0.0
      %5456 = vmatpush1.msra.mxu0 0.0
      %5457 = vmatprep.subr.mxu0 0.0
      %5458 = vmatpush1.msra.mxu0 0.0
      %5459 = vmatprep.subr.mxu0 0.0
      %5460 = vmatpush1.msra.mxu0 0.0
      %5461 = vmatprep.subr.mxu0 0.0
      %5462 = vmatpush1.msra.mxu0 0.0
      %5463 = vmatprep.subr.mxu0 0.0
      %5464 = vmatpush1.msra.mxu0 0.0
      %5465 = vmatprep.subr.mxu0 0.0
      %5466 = vmatpush1.msra.mxu0 0.0
      %5467 = vmatprep.subr.mxu0 0.0
      %5468 = vmatpush1.msra.mxu0 0.0
      %5469 = vmatprep.subr.mxu0 0.0
      %5470 = vmatpush1.msra.mxu0 0.0
      %5471 = vmatprep.subr.mxu0 0.0
      %5472 = vmatpush1.msra.mxu0 0.0
      %5473 = vmatprep.subr.mxu0 0.0
      %5474 = vmatpush1.msra.mxu0 0.0
      %5475 = vmatprep.subr.mxu0 0.0
      %5476 = vmatpush1.msra.mxu0 0.0
      %5477 = vmatprep.mubr.f32.mxu0 0.0
      %5478 = vmatmul.mubr.f32.gmra.mrb[0].mxu0 %v260
      %v5479 = vpop.f32.mrb[0].mxu0
      %v5480 = vadd.f32 0.0, %v5479
      %v5481 = vpop.f32.mrb[0].mxu0
      %5482 = vmatprep.mubr.f32.mxu0 0.0
      %5483 = vmatmul.mubr.f32.gmra.mrb[0].mxu0 %v261
      %v5484 = vpop.f32.mrb[0].mxu0
      %v5485 = vadd.f32 0.0, %v5484
      %v5486 = vpop.f32.mrb[0].mxu0
      %5487 = vmatprep.mubr.f32.mxu0 0.0
      %5488 = vmatmul.mubr.f32.gmra.mrb[0].mxu0 %v262
      %v5489 = vpop.f32.mrb[0].mxu0
      %v5490 = vadd.f32 0.0, %v5489
      %v5491 = vpop.f32.mrb[0].mxu0
      %5492 = vmatprep.mubr.f32.mxu0 0.0
      %5493 = vmatmul.mubr.f32.gmra.mrb[0].mxu0 %v263
      %v5494 = vpop.f32.mrb[0].mxu0
      %v5495 = vadd.f32 0.0, %v5494
      %v5496 = vpop.f32.mrb[0].mxu0
      %5497 = vmatprep.mubr.f32.mxu0 0.0
      %5498 = vmatmul.mubr.f32.gmra.mrb[0].mxu0 %v264
      %v5499 = vpop.f32.mrb[0].mxu0
      %v5500 = vadd.f32 0.0, %v5499
      %v5501 = vpop.f32.mrb[0].mxu0
      %5502 = vmatprep.mubr.f32.mxu0 0.0
      %5503 = vmatmul.mubr.f32.gmra.mrb[0].mxu0 %v265
      %v5504 = vpop.f32.mrb[0].mxu0
      %v5505 = vadd.f32 0.0, %v5504
      %v5506 = vpop.f32.mrb[0].mxu0
      %5507 = vmatprep.mubr.f32.mxu0 0.0
      %5508 = vmatmul.mubr.f32.gmra.mrb[0].mxu0 %v266
      %v5509 = vpop.f32.mrb[0].mxu0
      %v5510 = vadd.f32 0.0, %v5509
      %v5511 = vpop.f32.mrb[0].mxu0
      %5512 = vmatprep.mubr.f32.mxu0 0.0
      %5513 = vmatmul.mubr.f32.gmra.mrb[0].mxu0 %v267
      %v5514 = vpop.f32.mrb[0].mxu0
      %v5515 = vadd.f32 0.0, %v5514
      %v5516 = vpop.f32.mrb[0].mxu0
      %5517 = vmatprep.mubr.f32.mxu0 0.0
      %5518 = vmatmul.mubr.f32.gmra.mrb[0].mxu0 %v268
      %v5519 = vpop.f32.mrb[0].mxu0
      %v5520 = vadd.f32 0.0, %v5519
      %v5521 = vpop.f32.mrb[0].mxu0
      %5522 = vmatprep.mubr.f32.mxu0 0.0
      %5523 = vmatmul.mubr.f32.gmra.mrb[0].mxu0 %v269
      %v5524 = vpop.f32.mrb[0].mxu0
      %v5525 = vadd.f32 0.0, %v5524
      %v5526 = vpop.f32.mrb[0].mxu0
      %5527 = vmatprep.mubr.f32.mxu0 0.0
      %5528 = vmatmul.mubr.f32.gmra.mrb[0].mxu0 %v270
      %v5529 = vpop.f32.mrb[0].mxu0
      %v5530 = vadd.f32 0.0, %v5529
      %v5531 = vpop.f32.mrb[0].mxu0
      %5532 = vmatprep.mubr.f32.mxu0 0.0
      %5533 = vmatmul.mubr.f32.gmra.mrb[0].mxu0 %v271
      %v5534 = vpop.f32.mrb[0].mxu0
      %v5535 = vadd.f32 0.0, %v5534
      %v5536 = vpop.f32.mrb[0].mxu0
      %5537 = vmatprep.mubr.f32.mxu0 0.0
      %5538 = vmatmul.mubr.f32.gmra.mrb[0].mxu0 %v272
      %v5539 = vpop.f32.mrb[0].mxu0
      %v5540 = vadd.f32 0.0, %v5539
      %v5541 = vpop.f32.mrb[0].mxu0
      %5542 = vmatprep.mubr.f32.mxu0 0.0
      %5543 = vmatmul.mubr.f32.gmra.mrb[0].mxu0 %v273
      %v5544 = vpop.f32.mrb[0].mxu0
      %v5545 = vadd.f32 0.0, %v5544
      %v5546 = vpop.f32.mrb[0].mxu0
      %5547 = vmatprep.mubr.f32.mxu0 0.0
      %5548 = vmatmul.mubr.f32.gmra.mrb[0].mxu0 %v274
      %v5549 = vpop.f32.mrb[0].mxu0
      %v5550 = vadd.f32 0.0, %v5549
      %v5551 = vpop.f32.mrb[0].mxu0
      %5552 = vmatprep.mubr.f32.mxu0 0.0
      %5553 = vmatmul.mubr.f32.gmra.mrb[0].mxu0 %v275
      %v5554 = vpop.f32.mrb[0].mxu0
      %v5555 = vadd.f32 0.0, %v5554
      %v5556 = vpop.f32.mrb[0].mxu0
      %5557 = vdwg.mxu0
      %5559 = vset.pattern.permute.xlu0 32
      %5560 = vperm.xlu0 %5559, %v5480
      %v5561 = vpop.permute.xlu0 %5560
      %5564 = vset.pattern.permute.xlu0 32
      %5565 = vperm.xlu0 %5564, %v5485
      %v5566 = vpop.permute.xlu0 %5565
      %5569 = vset.pattern.permute.xlu0 32
      %5570 = vperm.xlu0 %5569, %v5490
      %v5571 = vpop.permute.xlu0 %5570
      %5574 = vset.pattern.permute.xlu0 32
      %5575 = vperm.xlu0 %5574, %v5495
      %v5576 = vpop.permute.xlu0 %5575
      %5579 = vset.pattern.permute.xlu0 32
      %5580 = vperm.xlu0 %5579, %v5500
      %v5581 = vpop.permute.xlu0 %5580
      %5584 = vset.pattern.permute.xlu0 32
      %5585 = vperm.xlu0 %5584, %v5505
      %v5586 = vpop.permute.xlu0 %5585
      %5589 = vset.pattern.permute.xlu0 32
      %5590 = vperm.xlu0 %5589, %v5510
      %v5591 = vpop.permute.xlu0 %5590
      %5594 = vset.pattern.permute.xlu0 32
      %5595 = vperm.xlu0 %5594, %v5515
      %v5596 = vpop.permute.xlu0 %5595
      %5599 = vset.pattern.permute.xlu0 32
      %5600 = vperm.xlu0 %5599, %v5520
      %v5601 = vpop.permute.xlu0 %5600
      %5604 = vset.pattern.permute.xlu0 32
      %5605 = vperm.xlu0 %5604, %v5525
      %v5606 = vpop.permute.xlu0 %5605
      %5609 = vset.pattern.permute.xlu0 32
      %5610 = vperm.xlu0 %5609, %v5530
      %v5611 = vpop.permute.xlu0 %5610
      %5614 = vset.pattern.permute.xlu0 32
      %5615 = vperm.xlu0 %5614, %v5535
      %v5616 = vpop.permute.xlu0 %5615
      %5619 = vset.pattern.permute.xlu0 32
      %5620 = vperm.xlu0 %5619, %v5540
      %v5621 = vpop.permute.xlu0 %5620
      %5624 = vset.pattern.permute.xlu0 32
      %5625 = vperm.xlu0 %5624, %v5545
      %v5626 = vpop.permute.xlu0 %5625
      %5629 = vset.pattern.permute.xlu0 32
      %5630 = vperm.xlu0 %5629, %v5550
      %v5631 = vpop.permute.xlu0 %5630
      %5634 = vset.pattern.permute.xlu0 32
      %5635 = vperm.xlu0 %5634, %v5555
      %v5636 = vpop.permute.xlu0 %5635
      %v5638 = vrcp.pop %v5561
      %v5639 = vmul.f32 %v5480, %v5638
      %v5640 = vrcp.pop %v5566
      %v5641 = vmul.f32 %v5485, %v5640
      %v5642 = vrcp.pop %v5571
      %v5643 = vmul.f32 %v5490, %v5642
      %v5644 = vrcp.pop %v5576
      %v5645 = vmul.f32 %v5495, %v5644
      %v5646 = vrcp.pop %v5581
      %v5647 = vmul.f32 %v5500, %v5646
      %v5648 = vrcp.pop %v5586
      %v5649 = vmul.f32 %v5505, %v5648
      %v5650 = vrcp.pop %v5591
      %v5651 = vmul.f32 %v5510, %v5650
      %v5652 = vrcp.pop %v5596
      %v5653 = vmul.f32 %v5515, %v5652
      %v5654 = vrcp.pop %v5601
      %v5655 = vmul.f32 %v5520, %v5654
      %v5656 = vrcp.pop %v5606
      %v5657 = vmul.f32 %v5525, %v5656
      %v5658 = vrcp.pop %v5611
      %v5659 = vmul.f32 %v5530, %v5658
      %v5660 = vrcp.pop %v5616
      %v5661 = vmul.f32 %v5535, %v5660
      %v5662 = vrcp.pop %v5621
      %v5663 = vmul.f32 %v5540, %v5662
      %v5664 = vrcp.pop %v5626
      %v5665 = vmul.f32 %v5545, %v5664
      %v5666 = vrcp.pop %v5631
      %v5667 = vmul.f32 %v5550, %v5666
      %v5668 = vrcp.pop %v5636
      %v5669 = vmul.f32 %v5555, %v5668
      %v5670 = vsel %vm300, %v5639, 0.0
      %5671 = vadd.xlane.f32.xlu0 %v5670
      %v5672 = vpop.xlane.xlu0 %5671
      %v5673 = vsel %vm300, %v5641, 0.0
      %5674 = vadd.xlane.f32.xlu0 %v5673
      %v5675 = vpop.xlane.xlu0 %5674
      %v5676 = vsel %vm300, %v5643, 0.0
      %5677 = vadd.xlane.f32.xlu0 %v5676
      %v5678 = vpop.xlane.xlu0 %5677
      %v5679 = vsel %vm300, %v5645, 0.0
      %5680 = vadd.xlane.f32.xlu0 %v5679
      %v5681 = vpop.xlane.xlu0 %5680
      %v5682 = vsel %vm300, %v5647, 0.0
      %5683 = vadd.xlane.f32.xlu0 %v5682
      %v5684 = vpop.xlane.xlu0 %5683
      %v5685 = vsel %vm300, %v5649, 0.0
      %5686 = vadd.xlane.f32.xlu0 %v5685
      %v5687 = vpop.xlane.xlu0 %5686
      %v5688 = vsel %vm300, %v5651, 0.0
      %5689 = vadd.xlane.f32.xlu0 %v5688
      %v5690 = vpop.xlane.xlu0 %5689
      %v5691 = vsel %vm300, %v5653, 0.0
      %5692 = vadd.xlane.f32.xlu0 %v5691
      %v5693 = vpop.xlane.xlu0 %5692
      %v5694 = vsel %vm300, %v5655, 0.0
      %5695 = vadd.xlane.f32.xlu0 %v5694
      %v5696 = vpop.xlane.xlu0 %5695
      %v5697 = vsel %vm300, %v5657, 0.0
      %5698 = vadd.xlane.f32.xlu0 %v5697
      %v5699 = vpop.xlane.xlu0 %5698
      %v5700 = vsel %vm300, %v5659, 0.0
      %5701 = vadd.xlane.f32.xlu0 %v5700
      %v5702 = vpop.xlane.xlu0 %5701
      %v5703 = vsel %vm300, %v5661, 0.0
      %5704 = vadd.xlane.f32.xlu0 %v5703
      %v5705 = vpop.xlane.xlu0 %5704
      %v5706 = vsel %vm300, %v5663, 0.0
      %5707 = vadd.xlane.f32.xlu0 %v5706
      %v5708 = vpop.xlane.xlu0 %5707
      %v5709 = vsel %vm300, %v5665, 0.0
      %5710 = vadd.xlane.f32.xlu0 %v5709
      %v5711 = vpop.xlane.xlu0 %5710
      %v5712 = vsel %vm300, %v5667, 0.0
      %5713 = vadd.xlane.f32.xlu0 %v5712
      %v5714 = vpop.xlane.xlu0 %5713
      %v5715 = vsel %vm300, %v5669, 0.0
      %5716 = vadd.xlane.f32.xlu0 %v5715
      %v5717 = vpop.xlane.xlu0 %5716
      %v5718 = vmul.f32 %v5672, %v2893
      %v5719 = vmul.f32 %v5675, %v2893
      %v5720 = vmul.f32 %v5678, %v2893
      %v5721 = vmul.f32 %v5681, %v2893
      %v5722 = vmul.f32 %v5684, %v2893
      %v5723 = vmul.f32 %v5687, %v2893
      %v5724 = vmul.f32 %v5690, %v2893
      %v5725 = vmul.f32 %v5693, %v2893
      %v5726 = vmul.f32 %v5696, %v2893
      %v5727 = vmul.f32 %v5699, %v2893
      %v5728 = vmul.f32 %v5702, %v2893
      %v5729 = vmul.f32 %v5705, %v2893
      %v5730 = vmul.f32 %v5708, %v2893
      %v5731 = vmul.f32 %v5711, %v2893
      %v5732 = vmul.f32 %v5714, %v2893
      %v5733 = vmul.f32 %v5717, %v2893
      %v5734 = vsub.f32 %v5639, %v5718
      %v5735 = vsub.f32 %v5641, %v5719
      %v5736 = vsub.f32 %v5643, %v5720
      %v5737 = vsub.f32 %v5645, %v5721
      %v5738 = vsub.f32 %v5647, %v5722
      %v5739 = vsub.f32 %v5649, %v5723
      %v5740 = vsub.f32 %v5651, %v5724
      %v5741 = vsub.f32 %v5653, %v5725
      %v5742 = vsub.f32 %v5655, %v5726
      %v5743 = vsub.f32 %v5657, %v5727
      %v5744 = vsub.f32 %v5659, %v5728
      %v5745 = vsub.f32 %v5661, %v5729
      %v5746 = vsub.f32 %v5663, %v5730
      %v5747 = vsub.f32 %v5665, %v5731
      %v5748 = vsub.f32 %v5667, %v5732
      %v5749 = vsub.f32 %v5669, %v5733
      %v5750 = vmul.f32 %v5734, %v5734
      %v5751 = vmul.f32 %v5735, %v5735
      %v5752 = vmul.f32 %v5736, %v5736
      %v5753 = vmul.f32 %v5737, %v5737
      %v5754 = vmul.f32 %v5738, %v5738
      %v5755 = vmul.f32 %v5739, %v5739
      %v5756 = vmul.f32 %v5740, %v5740
      %v5757 = vmul.f32 %v5741, %v5741
      %v5758 = vmul.f32 %v5742, %v5742
      %v5759 = vmul.f32 %v5743, %v5743
      %v5760 = vmul.f32 %v5744, %v5744
      %v5761 = vmul.f32 %v5745, %v5745
      %v5762 = vmul.f32 %v5746, %v5746
      %v5763 = vmul.f32 %v5747, %v5747
      %v5764 = vmul.f32 %v5748, %v5748
      %v5765 = vmul.f32 %v5749, %v5749
      %v5766 = vsel %vm300, %v5750, 0.0
      %5767 = vadd.xlane.f32.xlu0 %v5766
      %v5768 = vpop.xlane.xlu0 %5767
      %v5769 = vsel %vm300, %v5751, 0.0
      %5770 = vadd.xlane.f32.xlu0 %v5769
      %v5771 = vpop.xlane.xlu0 %5770
      %v5772 = vsel %vm300, %v5752, 0.0
      %5773 = vadd.xlane.f32.xlu0 %v5772
      %v5774 = vpop.xlane.xlu0 %5773
      %v5775 = vsel %vm300, %v5753, 0.0
      %5776 = vadd.xlane.f32.xlu0 %v5775
      %v5777 = vpop.xlane.xlu0 %5776
      %v5778 = vsel %vm300, %v5754, 0.0
      %5779 = vadd.xlane.f32.xlu0 %v5778
      %v5780 = vpop.xlane.xlu0 %5779
      %v5781 = vsel %vm300, %v5755, 0.0
      %5782 = vadd.xlane.f32.xlu0 %v5781
      %v5783 = vpop.xlane.xlu0 %5782
      %v5784 = vsel %vm300, %v5756, 0.0
      %5785 = vadd.xlane.f32.xlu0 %v5784
      %v5786 = vpop.xlane.xlu0 %5785
      %v5787 = vsel %vm300, %v5757, 0.0
      %5788 = vadd.xlane.f32.xlu0 %v5787
      %v5789 = vpop.xlane.xlu0 %5788
      %v5790 = vsel %vm300, %v5758, 0.0
      %5791 = vadd.xlane.f32.xlu0 %v5790
      %v5792 = vpop.xlane.xlu0 %5791
      %v5793 = vsel %vm300, %v5759, 0.0
      %5794 = vadd.xlane.f32.xlu0 %v5793
      %v5795 = vpop.xlane.xlu0 %5794
      %v5796 = vsel %vm300, %v5760, 0.0
      %5797 = vadd.xlane.f32.xlu0 %v5796
      %v5798 = vpop.xlane.xlu0 %5797
      %v5799 = vsel %vm300, %v5761, 0.0
      %5800 = vadd.xlane.f32.xlu0 %v5799
      %v5801 = vpop.xlane.xlu0 %5800
      %v5802 = vsel %vm300, %v5762, 0.0
      %5803 = vadd.xlane.f32.xlu0 %v5802
      %v5804 = vpop.xlane.xlu0 %5803
      %v5805 = vsel %vm300, %v5763, 0.0
      %5806 = vadd.xlane.f32.xlu0 %v5805
      %v5807 = vpop.xlane.xlu0 %5806
      %v5808 = vsel %vm300, %v5764, 0.0
      %5809 = vadd.xlane.f32.xlu0 %v5808
      %v5810 = vpop.xlane.xlu0 %5809
      %v5811 = vsel %vm300, %v5765, 0.0
      %5812 = vadd.xlane.f32.xlu0 %v5811
      %v5813 = vpop.xlane.xlu0 %5812
      %v5814 = vmul.f32 %v5768, %v2893
      %v5815 = vmul.f32 %v5771, %v2893
      %v5816 = vmul.f32 %v5774, %v2893
      %v5817 = vmul.f32 %v5777, %v2893
      %v5818 = vmul.f32 %v5780, %v2893
      %v5819 = vmul.f32 %v5783, %v2893
      %v5820 = vmul.f32 %v5786, %v2893
      %v5821 = vmul.f32 %v5789, %v2893
      %v5822 = vmul.f32 %v5792, %v2893
      %v5823 = vmul.f32 %v5795, %v2893
      %v5824 = vmul.f32 %v5798, %v2893
      %v5825 = vmul.f32 %v5801, %v2893
      %v5826 = vmul.f32 %v5804, %v2893
      %v5827 = vmul.f32 %v5807, %v2893
      %v5828 = vmul.f32 %v5810, %v2893
      %v5829 = vmul.f32 %v5813, %v2893
      %v5830 = vadd.f32 %v5814, 1e-05
      %v5831 = vadd.f32 %v5815, 1e-05
      %v5832 = vadd.f32 %v5816, 1e-05
      %v5833 = vadd.f32 %v5817, 1e-05
      %v5834 = vadd.f32 %v5818, 1e-05
      %v5835 = vadd.f32 %v5819, 1e-05
      %v5836 = vadd.f32 %v5820, 1e-05
      %v5837 = vadd.f32 %v5821, 1e-05
      %v5838 = vadd.f32 %v5822, 1e-05
      %v5839 = vadd.f32 %v5823, 1e-05
      %v5840 = vadd.f32 %v5824, 1e-05
      %v5841 = vadd.f32 %v5825, 1e-05
      %v5842 = vadd.f32 %v5826, 1e-05
      %v5843 = vadd.f32 %v5827, 1e-05
      %v5844 = vadd.f32 %v5828, 1e-05
      %v5845 = vadd.f32 %v5829, 1e-05
      %v5846 = vrsqrt.pop %v5830
      %v5847 = vrsqrt.pop %v5831
      %v5848 = vrsqrt.pop %v5832
      %v5849 = vrsqrt.pop %v5833
      %v5850 = vrsqrt.pop %v5834
      %v5851 = vrsqrt.pop %v5835
      %v5852 = vrsqrt.pop %v5836
      %v5853 = vrsqrt.pop %v5837
      %v5854 = vrsqrt.pop %v5838
      %v5855 = vrsqrt.pop %v5839
      %v5856 = vrsqrt.pop %v5840
      %v5857 = vrsqrt.pop %v5841
      %v5858 = vrsqrt.pop %v5842
      %v5859 = vrsqrt.pop %v5843
      %v5860 = vrsqrt.pop %v5844
      %v5861 = vrsqrt.pop %v5845
      %v5862 = vmul.f32 %v5734, %v5846
      %v5863 = vmul.f32 %v5735, %v5847
      %v5864 = vmul.f32 %v5736, %v5848
      %v5865 = vmul.f32 %v5737, %v5849
      %v5866 = vmul.f32 %v5738, %v5850
      %v5867 = vmul.f32 %v5739, %v5851
      %v5868 = vmul.f32 %v5740, %v5852
      %v5869 = vmul.f32 %v5741, %v5853
      %v5870 = vmul.f32 %v5742, %v5854
      %v5871 = vmul.f32 %v5743, %v5855
      %v5872 = vmul.f32 %v5744, %v5856
      %v5873 = vmul.f32 %v5745, %v5857
      %v5874 = vmul.f32 %v5746, %v5858
      %v5875 = vmul.f32 %v5747, %v5859
      %v5876 = vmul.f32 %v5748, %v5860
      %v5877 = vmul.f32 %v5749, %v5861
      %v5878 = vmul.f32 %v5862, %v3058
      %v5879 = vmul.f32 %v5863, %v3058
      %v5880 = vmul.f32 %v5864, %v3058
      %v5881 = vmul.f32 %v5865, %v3058
      %v5882 = vmul.f32 %v5866, %v3058
      %v5883 = vmul.f32 %v5867, %v3058
      %v5884 = vmul.f32 %v5868, %v3058
      %v5885 = vmul.f32 %v5869, %v3058
      %v5886 = vmul.f32 %v5870, %v3058
      %v5887 = vmul.f32 %v5871, %v3058
      %v5888 = vmul.f32 %v5872, %v3058
      %v5889 = vmul.f32 %v5873, %v3058
      %v5890 = vmul.f32 %v5874, %v3058
      %v5891 = vmul.f32 %v5875, %v3058
      %v5892 = vmul.f32 %v5876, %v3058
      %v5893 = vmul.f32 %v5877, %v3058
      %v5894 = vadd.f32 %v5878, %v3080
      %v5895 = vadd.f32 %v5879, %v3080
      %v5896 = vadd.f32 %v5880, %v3080
      %v5897 = vadd.f32 %v5881, %v3080
      %v5898 = vadd.f32 %v5882, %v3080
      %v5899 = vadd.f32 %v5883, %v3080
      %v5900 = vadd.f32 %v5884, %v3080
      %v5901 = vadd.f32 %v5885, %v3080
      %v5902 = vadd.f32 %v5886, %v3080
      %v5903 = vadd.f32 %v5887, %v3080
      %v5904 = vadd.f32 %v5888, %v3080
      %v5905 = vadd.f32 %v5889, %v3080
      %v5906 = vadd.f32 %v5890, %v3080
      %v5907 = vadd.f32 %v5891, %v3080
      %v5908 = vadd.f32 %v5892, %v3080
      %v5909 = vadd.f32 %v5893, %v3080
      %5910 = vst.msk [vmem:[%s253 + $0x80] sm:$0xff] %vm300, %v5894
      %5911 = vst.msk [vmem:[%s253 + $0x88] sm:$0xff] %vm300, %v5895
      %5912 = vst.msk [vmem:[%s253 + $0x90] sm:$0xff] %vm300, %v5896
      %5913 = vst.msk [vmem:[%s253 + $0x98] sm:$0xff] %vm300, %v5897
      %5914 = vst.msk [vmem:[%s253 + $0xa0] sm:$0xff] %vm300, %v5898
      %5915 = vst.msk [vmem:[%s253 + $0xa8] sm:$0xff] %vm300, %v5899
      %5916 = vst.msk [vmem:[%s253 + $0xb0] sm:$0xff] %vm300, %v5900
      %5917 = vst.msk [vmem:[%s253 + $0xb8] sm:$0xff] %vm300, %v5901
      %5918 = vst.msk [vmem:[%s253 + $0xc0] sm:$0xff] %vm300, %v5902
      %5919 = vst.msk [vmem:[%s253 + $0xc8] sm:$0xff] %vm300, %v5903
      %5920 = vst.msk [vmem:[%s253 + $0xd0] sm:$0xff] %vm300, %v5904
      %5921 = vst.msk [vmem:[%s253 + $0xd8] sm:$0xff] %vm300, %v5905
      %5922 = vst.msk [vmem:[%s253 + $0xe0] sm:$0xff] %vm300, %v5906
      %5923 = vst.msk [vmem:[%s253 + $0xe8] sm:$0xff] %vm300, %v5907
      %5924 = vst.msk [vmem:[%s253 + $0xf0] sm:$0xff] %vm300, %v5908
      %5925 = vst.msk [vmem:[%s253 + $0xf8] sm:$0xff] %vm300, %v5909
      %s5926 = smul.u32 32, %s17
      %p5927 = scmp.lt.s32.totalorder %s5926, 63
      %s5928 = scalar_select %p5927, %s5926, 63
      %s5929 = smul.addr %s5928, 8
      %s5930 = scalar_lea.vmem %s6, %s5929
      // Predicated region
      $region45: #{tpu_custom_call.1} parent=43 // pred_check
        %p5931 = pneg %p166
      $region46: #{tpu_custom_call.1} parent=43 // pred_check_branch
        %5933 = sbr.rel (%p5931) target = $region48
      $region47: #{tpu_custom_call.1} parent=43 // pred_region
        %s5934 = smul.u32 32, %s17
      $region48: #{tpu_custom_call.1} parent=43 // pred_fallthru
        _
    $region44: #{tpu_custom_call.1} parent=5 // pred_fallthru
      _
    %p5935 = scmp.le.s32.totalorder 2, %s12
    // Predicated region
    $region49: #{tpu_custom_call.1} parent=5 // pred_check
      %p5936 = pneg %p5935
    $region50: #{tpu_custom_call.1} parent=5 // pred_check_branch
      %5938 = sbr.rel (%p5936) target = $region52
    $region51: #{tpu_custom_call.1} parent=5 // pred_region
      %s5939 = ssub.s32 %s12, 2
      // Predicated region
      $region53: #{tpu_custom_call.1} parent=51 // pred_check
        %p5940 = pneg %p172
      $region54: #{tpu_custom_call.1} parent=51 // pred_check_branch
        %5942 = sbr.rel (%p5940) target = $region56
      $region55: #{tpu_custom_call.1} parent=51 // pred_region
        %s5943 = smul.u32 32, %s18
        %p5944 = scmp.lt.s32.totalorder %s5943, 63
        %s5945 = scalar_select %p5944, %s5943, 63
        %s5946 = smul.addr %s5945, 8
        %s5947 = scalar_lea.vmem %s6, %s5946
      $region56: #{tpu_custom_call.1} parent=51 // pred_fallthru
        _
    $region52: #{tpu_custom_call.1} parent=5 // pred_fallthru
      _
  $region6: #{tpu_custom_call.1} parent=0 // loop_footer
    %s16 = sadd.s32 1, %s12
  $region7: #{tpu_custom_call.1} parent=0 // loop_footer_branch
    %11 = sbr.rel target = $region3
  $region8: #{tpu_custom_call.1} parent=0 // loop_exit
    _

</llo_original>
